<compile_context>
chip_gen: v7x
topology: tpu7x:2x2x1
jax: 0.10.0
libtpu: 0.0.40
codegen_flags: <defaults>
</compile_context>

<pallas_src>
import functools

import jax
import jax.numpy as jnp
import numpy as np
from jax.experimental import pallas as pl
from jax.experimental.pallas import tpu as pltpu

NEG_SLOPE = 0.2   # LeakyReLU slope in the reference module
BN_EPS = 0.8      # nn.BatchNorm1d(out_feat, 0.8) -> eps = 0.8


def _generator_kernel(noise_ref, bias1_ref, w1_ref,
                      w2_ref, s2_ref, t2_ref,
                      w3_ref, s3_ref, t3_ref,
                      w4_ref, s4_ref, t4_ref,
                      w5_ref, b5_ref, o_ref):
    def leaky(h):
        # maximum(h, a*h) == LeakyReLU(a) for 0 < a < 1; one VALU op.
        return jnp.maximum(h, NEG_SLOPE * h)

    def dot(a, w_ref):
        # Cast activations to the weight dtype (bf16 on the fast path),
        # always accumulate in f32 on the MXU.
        return jnp.dot(a.astype(w_ref.dtype), w_ref[...],
                       preferred_element_type=jnp.float32)

    h = leaky(dot(noise_ref[...], w1_ref) + bias1_ref[...])          # layer 1
    h = leaky(dot(h, w2_ref) * s2_ref[...] + t2_ref[...])            # layer 2 (+BN)
    h = leaky(dot(h, w3_ref) * s3_ref[...] + t3_ref[...])            # layer 3 (+BN)
    h = leaky(dot(h, w4_ref) * s4_ref[...] + t4_ref[...])            # layer 4 (+BN)
    out = dot(h, w5_ref) + b5_ref[...]                               # layer 5
    o_ref[...] = jnp.tanh(out).astype(o_ref.dtype)


@functools.partial(jax.jit, static_argnames=("tm",))
def _generator_pallas(noise, bias1, w1n, w2, s2, t2, w3, s3, t3,
                      w4, s4, t4, w5, b5, *, tm):
    B, nd = noise.shape
    h1 = w1n.shape[1]
    h2 = w2.shape[1]
    h3 = w3.shape[1]
    h4 = w4.shape[1]
    out_dim = w5.shape[1]
    grid = (B // tm,)

    ins = (noise, bias1, w1n, w2, s2, t2, w3, s3, t3, w4, s4, t4, w5, b5)
    flops = 2 * B * (nd * h1 + h1 * h2 + h2 * h3 + h3 * h4 + h4 * out_dim)
    bytes_accessed = int(sum(int(np.prod(a.shape)) * np.dtype(a.dtype).itemsize
                             for a in ins) + B * out_dim * 4)
    cost = pl.CostEstimate(flops=int(flops),
                           transcendentals=int(B * out_dim),
                           bytes_accessed=bytes_accessed)

    def batch_spec(cols):
        return pl.BlockSpec((tm, cols), lambda i: (i, 0))

    def full_spec(rows, cols):
        # Whole array resident in VMEM; constant index map -> fetched once.
        return pl.BlockSpec((rows, cols), lambda i: (0, 0))

    return pl.pallas_call(
        _generator_kernel,
        out_shape=jax.ShapeDtypeStruct((B, out_dim), jnp.float32),
        grid_spec=pltpu.PrefetchScalarGridSpec(
            num_scalar_prefetch=0,
            grid=grid,
            in_specs=[
                batch_spec(nd),            # noise tile
                batch_spec(h1),            # per-sample folded layer-1 bias
                full_spec(nd, h1),         # W1 (noise half), pre-transposed
                full_spec(h1, h2), full_spec(1, h2), full_spec(1, h2),
                full_spec(h2, h3), full_spec(1, h3), full_spec(1, h3),
                full_spec(h3, h4), full_spec(1, h4), full_spec(1, h4),
                full_spec(h4, out_dim), full_spec(1, out_dim),
            ],
            out_specs=pl.BlockSpec((tm, out_dim), lambda i: (i, 0)),
        ),
        compiler_params=pltpu.CompilerParams(
            dimension_semantics=("parallel",)),   # batch tiles shard across TCs (v7x)
        cost_estimate=cost,
    )(*ins)


def generator_forward(noise, labels, params, img_shape, *, use_bf16=False, tm=None):
    """noise: (B, dim) f32; labels: (B,) int32; params: PyTorch-layout tensors."""
    (label_emb, w1, b1,
     w2, b2, g2, be2, m2, v2,
     w3, b3, g3, be3, m3, v3,
     w4, b4, g4, be4, m4, v4,
     w5, b5) = params

    B, _ = noise.shape
    label_dim = label_emb.shape[1]

    # Fold embedding-half of layer 1 + its bias into a per-class bias, then
    # gather per sample (removes the concat, keeps K lane-aligned at 32).
    class_bias = label_emb @ w1[:, :label_dim].T + b1        # (n_classes, 128)
    bias1 = jnp.take(class_bias, labels, axis=0)             # (B, 128)
    w1n = w1[:, label_dim:].T                                # (dim, 128)

    # Fold eval-mode BatchNorm + linear bias into per-feature scale/shift.
    def bn_fold(b, gamma, beta, mean, var):
        scale = gamma * jax.lax.rsqrt(var + BN_EPS)
        shift = (b - mean) * scale + beta
        return scale.reshape(1, -1), shift.reshape(1, -1)

    s2, t2 = bn_fold(b2, g2, be2, m2, v2)
    s3, t3 = bn_fold(b3, g3, be3, m3, v3)
    s4, t4 = bn_fold(b4, g4, be4, m4, v4)

    w2t, w3t, w4t, w5t = w2.T, w3.T, w4.T, w5.T
    if use_bf16:
        # bf16 MXU operands (v6e/v7x fast path); accumulation stays f32.
        w1n, w2t, w3t, w4t, w5t = (w.astype(jnp.bfloat16)
                                   for w in (w1n, w2t, w3t, w4t, w5t))

    if tm is None:
        # Large batch tile to amortize per-grid-step overhead; VMEM is not a
        # constraint at these weight sizes (even on v7x's 64 MiB).
        tm = B if B <= 256 else 256
    assert B % tm == 0 and (tm % 8 == 0 or tm == B), "bad batch tile"

    flat = _generator_pallas(noise, bias1, w1n, w2t, s2, t2, w3t, s3, t3,
                             w4t, s4, t4, w5t, b5.reshape(1, -1), tm=tm)
    return flat.reshape(B, *img_shape)


def _linear_init(key, out_f, in_f):
    # PyTorch nn.Linear default init: U(-1/sqrt(fan_in), 1/sqrt(fan_in)).
    kw, kb = jax.random.split(key)
    bound = 1.0 / np.sqrt(in_f)
    w = jax.random.uniform(kw, (out_f, in_f), jnp.float32, -bound, bound)
    b = jax.random.uniform(kb, (out_f,), jnp.float32, -bound, bound)
    return w, b


def _bn_init(key, n):
    # Non-trivial BN statistics so the affine fold is actually exercised.
    kg, kb, km, kv = jax.random.split(key, 4)
    gamma = jax.random.uniform(kg, (n,), jnp.float32, 0.5, 1.5)
    beta = 0.1 * jax.random.normal(kb, (n,), jnp.float32)
    mean = 0.5 * jax.random.normal(km, (n,), jnp.float32)
    var = jax.random.uniform(kv, (n,), jnp.float32, 0.5, 1.5)
    return gamma, beta, mean, var


if __name__ == "__main__":
    # opt-like hyperparameters (small, shape-consistent):
    n_classes, label_dim = 4, 8
    noise_dim = 32                       # opt.dim
    channels, img_size = 1, 16           # img_shape = (1, 16, 16)
    img_shape = (channels, img_size, img_size)
    out_dim = int(np.prod(img_shape))    # 256 -> lane-dense output
    batch = 64

    key = jax.random.PRNGKey(0)
    (k_emb, k_l1, k_l2, k_l3, k_l4, k_l5,
     k_bn2, k_bn3, k_bn4, k_noise, k_lab) = jax.random.split(key, 11)

    label_emb = jax.random.normal(k_emb, (n_classes, label_dim), jnp.float32)
    w1, b1 = _linear_init(k_l1, 128, noise_dim + label_dim)
    w2, b2 = _linear_init(k_l2, 256, 128)
    w3, b3 = _linear_init(k_l3, 512, 256)
    w4, b4 = _linear_init(k_l4, 1024, 512)
    w5, b5 = _linear_init(k_l5, out_dim, 1024)
    g2, be2, m2, v2 = _bn_init(k_bn2, 256)
    g3, be3, m3, v3 = _bn_init(k_bn3, 512)
    g4, be4, m4, v4 = _bn_init(k_bn4, 1024)

    params = (label_emb, w1, b1,
              w2, b2, g2, be2, m2, v2,
              w3, b3, g3, be3, m3, v3,
              w4, b4, g4, be4, m4, v4,
              w5, b5)

    noise = jax.random.normal(k_noise, (batch, noise_dim), jnp.float32)
    labels = jax.random.randint(k_lab, (batch,), 0, n_classes, jnp.int32)

    # Pure-JAX reference (eval-mode BatchNorm, same semantics as the kernel).
    def reference():
        emb = label_emb[labels]
        x = jnp.concatenate([emb, noise], axis=-1)
        leaky = lambda h: jnp.where(h > 0, h, NEG_SLOPE * h)
        bn = lambda h, g, bta, m, v: (h - m) / jnp.sqrt(v + BN_EPS) * g + bta
        h = leaky(x @ w1.T + b1)
        h = leaky(bn(h @ w2.T + b2, g2, be2, m2, v2))
        h = leaky(bn(h @ w3.T + b3, g3, be3, m3, v3))
        h = leaky(bn(h @ w4.T + b4, g4, be4, m4, v4))
        img = jnp.tanh(h @ w5.T + b5)
        return img.reshape(batch, *img_shape)

    ref = reference()

    # f32 path, tm = B (grid = 1).
    out = generator_forward(noise, labels, params, img_shape)
    out = jax.block_until_ready(out)
    assert out.shape == (batch, *img_shape)
    assert jnp.allclose(out, ref, atol=1e-3, rtol=1e-3), "f32 kernel mismatch"

    # f32 path with batch tiling (grid = 2) to exercise the "parallel" grid axis.
    out_tiled = generator_forward(noise, labels, params, img_shape, tm=batch // 2)
    out_tiled = jax.block_until_ready(out_tiled)
    assert jnp.allclose(out_tiled, ref, atol=1e-3, rtol=1e-3), "tiled kernel mismatch"

    # bf16 MXU fast path (v6e/v7x); looser tolerance for reduced-precision operands.
    out_bf16 = generator_forward(noise, labels, params, img_shape, use_bf16=True)
    out_bf16 = jax.block_until_ready(out_bf16)
    assert jnp.allclose(out_bf16, ref, atol=1e-1), "bf16 kernel mismatch"

    print("KERNEL_OK")
</pallas_src>

<mosaic_0001>
module attributes {stable_mosaic.version = 11 : i64} {
  func.func @_generator_kernel(%arg0: i32, %arg1: memref<64x32xf32, #tpu.memory_space<vmem>>, %arg2: memref<64x128xf32, #tpu.memory_space<vmem>>, %arg3: memref<32x128xf32, #tpu.memory_space<vmem>>, %arg4: memref<128x256xf32, #tpu.memory_space<vmem>>, %arg5: memref<1x256xf32, #tpu.memory_space<vmem>>, %arg6: memref<1x256xf32, #tpu.memory_space<vmem>>, %arg7: memref<256x512xf32, #tpu.memory_space<vmem>>, %arg8: memref<1x512xf32, #tpu.memory_space<vmem>>, %arg9: memref<1x512xf32, #tpu.memory_space<vmem>>, %arg10: memref<512x1024xf32, #tpu.memory_space<vmem>>, %arg11: memref<1x1024xf32, #tpu.memory_space<vmem>>, %arg12: memref<1x1024xf32, #tpu.memory_space<vmem>>, %arg13: memref<1024x256xf32, #tpu.memory_space<vmem>>, %arg14: memref<1x256xf32, #tpu.memory_space<vmem>>, %arg15: memref<64x256xf32, #tpu.memory_space<vmem>>) attributes {dimension_semantics = [#tpu.dimension_semantics<parallel>], iteration_bounds = array<i64: 1>, scalar_prefetch = 0 : i64, scratch_operands = 0 : i64, tpu.core_type = #tpu.core_type<tc>, window_params = [{transform_indices = @transform_0, window_bounds = array<i64: 64, 32>}, {transform_indices = @transform_1, window_bounds = array<i64: 64, 128>}, {pipeline_mode = #tpu.pipeline_mode<synchronous>, transform_indices = @transform_2, window_bounds = array<i64: 32, 128>}, {pipeline_mode = #tpu.pipeline_mode<synchronous>, transform_indices = @transform_3, window_bounds = array<i64: 128, 256>}, {pipeline_mode = #tpu.pipeline_mode<synchronous>, transform_indices = @transform_4, window_bounds = array<i64: 1, 256>}, {pipeline_mode = #tpu.pipeline_mode<synchronous>, transform_indices = @transform_5, window_bounds = array<i64: 1, 256>}, {pipeline_mode = #tpu.pipeline_mode<synchronous>, transform_indices = @transform_6, window_bounds = array<i64: 256, 512>}, {pipeline_mode = #tpu.pipeline_mode<synchronous>, transform_indices = @transform_7, window_bounds = array<i64: 1, 512>}, {pipeline_mode = #tpu.pipeline_mode<synchronous>, transform_indices = @transform_8, window_bounds = array<i64: 1, 512>}, {pipeline_mode = #tpu.pipeline_mode<synchronous>, transform_indices = @transform_9, window_bounds = array<i64: 512, 1024>}, {pipeline_mode = #tpu.pipeline_mode<synchronous>, transform_indices = @transform_10, window_bounds = array<i64: 1, 1024>}, {pipeline_mode = #tpu.pipeline_mode<synchronous>, transform_indices = @transform_11, window_bounds = array<i64: 1, 1024>}, {pipeline_mode = #tpu.pipeline_mode<synchronous>, transform_indices = @transform_12, window_bounds = array<i64: 1024, 256>}, {pipeline_mode = #tpu.pipeline_mode<synchronous>, transform_indices = @transform_13, window_bounds = array<i64: 1, 256>}, {transform_indices = @transform_14, window_bounds = array<i64: 64, 256>}]} {
    %c0 = arith.constant 0 : index
    %c0_0 = arith.constant 0 : index
    %0 = vector.load %arg1[%c0, %c0_0] : memref<64x32xf32, #tpu.memory_space<vmem>>, vector<64x32xf32>
    %c0_1 = arith.constant 0 : index
    %c0_2 = arith.constant 0 : index
    %1 = vector.load %arg3[%c0_1, %c0_2] : memref<32x128xf32, #tpu.memory_space<vmem>>, vector<32x128xf32>
    %cst = arith.constant dense<0.000000e+00> : vector<64x128xf32>
    %2 = tpu.matmul %0, %1, %cst {dimension_numbers = #tpu.dot_dimension_numbers<[1], [0], [0], [1], [0, 0, 1, 1], [], []>} : vector<64x32xf32>, vector<32x128xf32>, vector<64x128xf32> -> vector<64x128xf32>
    %c0_3 = arith.constant 0 : index
    %c0_4 = arith.constant 0 : index
    %3 = vector.load %arg2[%c0_3, %c0_4] : memref<64x128xf32, #tpu.memory_space<vmem>>, vector<64x128xf32>
    %4 = arith.addf %2, %3 : vector<64x128xf32>
    %cst_5 = arith.constant 2.000000e-01 : f32
    %5 = vector.broadcast %cst_5 : f32 to vector<64x128xf32>
    %6 = arith.mulf %5, %4 : vector<64x128xf32>
    %7 = arith.maximumf %4, %6 : vector<64x128xf32>
    %c0_6 = arith.constant 0 : index
    %c0_7 = arith.constant 0 : index
    %8 = vector.load %arg4[%c0_6, %c0_7] : memref<128x256xf32, #tpu.memory_space<vmem>>, vector<128x256xf32>
    %cst_8 = arith.constant dense<0.000000e+00> : vector<64x256xf32>
    %9 = tpu.matmul %7, %8, %cst_8 {dimension_numbers = #tpu.dot_dimension_numbers<[1], [0], [0], [1], [0, 0, 1, 1], [], []>} : vector<64x128xf32>, vector<128x256xf32>, vector<64x256xf32> -> vector<64x256xf32>
    %c0_9 = arith.constant 0 : index
    %c0_10 = arith.constant 0 : index
    %10 = vector.load %arg5[%c0_9, %c0_10] : memref<1x256xf32, #tpu.memory_space<vmem>>, vector<1x256xf32>
    %11 = vector.broadcast %10 : vector<1x256xf32> to vector<64x256xf32>
    %12 = arith.mulf %9, %11 : vector<64x256xf32>
    %c0_11 = arith.constant 0 : index
    %c0_12 = arith.constant 0 : index
    %13 = vector.load %arg6[%c0_11, %c0_12] : memref<1x256xf32, #tpu.memory_space<vmem>>, vector<1x256xf32>
    %14 = vector.broadcast %13 : vector<1x256xf32> to vector<64x256xf32>
    %15 = arith.addf %12, %14 : vector<64x256xf32>
    %cst_13 = arith.constant 2.000000e-01 : f32
    %16 = vector.broadcast %cst_13 : f32 to vector<64x256xf32>
    %17 = arith.mulf %16, %15 : vector<64x256xf32>
    %18 = arith.maximumf %15, %17 : vector<64x256xf32>
    %c0_14 = arith.constant 0 : index
    %c0_15 = arith.constant 0 : index
    %19 = vector.load %arg7[%c0_14, %c0_15] : memref<256x512xf32, #tpu.memory_space<vmem>>, vector<256x512xf32>
    %cst_16 = arith.constant dense<0.000000e+00> : vector<64x512xf32>
    %20 = tpu.matmul %18, %19, %cst_16 {dimension_numbers = #tpu.dot_dimension_numbers<[1], [0], [0], [1], [0, 0, 1, 1], [], []>} : vector<64x256xf32>, vector<256x512xf32>, vector<64x512xf32> -> vector<64x512xf32>
    %c0_17 = arith.constant 0 : index
    %c0_18 = arith.constant 0 : index
    %21 = vector.load %arg8[%c0_17, %c0_18] : memref<1x512xf32, #tpu.memory_space<vmem>>, vector<1x512xf32>
    %22 = vector.broadcast %21 : vector<1x512xf32> to vector<64x512xf32>
    %23 = arith.mulf %20, %22 : vector<64x512xf32>
    %c0_19 = arith.constant 0 : index
    %c0_20 = arith.constant 0 : index
    %24 = vector.load %arg9[%c0_19, %c0_20] : memref<1x512xf32, #tpu.memory_space<vmem>>, vector<1x512xf32>
    %25 = vector.broadcast %24 : vector<1x512xf32> to vector<64x512xf32>
    %26 = arith.addf %23, %25 : vector<64x512xf32>
    %cst_21 = arith.constant 2.000000e-01 : f32
    %27 = vector.broadcast %cst_21 : f32 to vector<64x512xf32>
    %28 = arith.mulf %27, %26 : vector<64x512xf32>
    %29 = arith.maximumf %26, %28 : vector<64x512xf32>
    %c0_22 = arith.constant 0 : index
    %c0_23 = arith.constant 0 : index
    %30 = vector.load %arg10[%c0_22, %c0_23] : memref<512x1024xf32, #tpu.memory_space<vmem>>, vector<512x1024xf32>
    %cst_24 = arith.constant dense<0.000000e+00> : vector<64x1024xf32>
    %31 = tpu.matmul %29, %30, %cst_24 {dimension_numbers = #tpu.dot_dimension_numbers<[1], [0], [0], [1], [0, 0, 1, 1], [], []>} : vector<64x512xf32>, vector<512x1024xf32>, vector<64x1024xf32> -> vector<64x1024xf32>
    %c0_25 = arith.constant 0 : index
    %c0_26 = arith.constant 0 : index
    %32 = vector.load %arg11[%c0_25, %c0_26] : memref<1x1024xf32, #tpu.memory_space<vmem>>, vector<1x1024xf32>
    %33 = vector.broadcast %32 : vector<1x1024xf32> to vector<64x1024xf32>
    %34 = arith.mulf %31, %33 : vector<64x1024xf32>
    %c0_27 = arith.constant 0 : index
    %c0_28 = arith.constant 0 : index
    %35 = vector.load %arg12[%c0_27, %c0_28] : memref<1x1024xf32, #tpu.memory_space<vmem>>, vector<1x1024xf32>
    %36 = vector.broadcast %35 : vector<1x1024xf32> to vector<64x1024xf32>
    %37 = arith.addf %34, %36 : vector<64x1024xf32>
    %cst_29 = arith.constant 2.000000e-01 : f32
    %38 = vector.broadcast %cst_29 : f32 to vector<64x1024xf32>
    %39 = arith.mulf %38, %37 : vector<64x1024xf32>
    %40 = arith.maximumf %37, %39 : vector<64x1024xf32>
    %c0_30 = arith.constant 0 : index
    %c0_31 = arith.constant 0 : index
    %41 = vector.load %arg13[%c0_30, %c0_31] : memref<1024x256xf32, #tpu.memory_space<vmem>>, vector<1024x256xf32>
    %cst_32 = arith.constant dense<0.000000e+00> : vector<64x256xf32>
    %42 = tpu.matmul %40, %41, %cst_32 {dimension_numbers = #tpu.dot_dimension_numbers<[1], [0], [0], [1], [0, 0, 1, 1], [], []>} : vector<64x1024xf32>, vector<1024x256xf32>, vector<64x256xf32> -> vector<64x256xf32>
    %c0_33 = arith.constant 0 : index
    %c0_34 = arith.constant 0 : index
    %43 = vector.load %arg14[%c0_33, %c0_34] : memref<1x256xf32, #tpu.memory_space<vmem>>, vector<1x256xf32>
    %44 = vector.broadcast %43 : vector<1x256xf32> to vector<64x256xf32>
    %45 = arith.addf %42, %44 : vector<64x256xf32>
    %46 = math.tanh %45 : vector<64x256xf32>
    %c0_35 = arith.constant 0 : index
    %c0_36 = arith.constant 0 : index
    %47 = vector.load %arg15[%c0_35, %c0_36] : memref<64x256xf32, #tpu.memory_space<vmem>>, vector<64x256xf32>
    tpu.vector_store %arg15[%c0_35, %c0_36], %46 {strides = array<i32>} : memref<64x256xf32, #tpu.memory_space<vmem>>, vector<64x256xf32>,
    return
  }
  func.func @transform_0(%arg0: i32) -> (i32, i32) {
    %c0_i32 = arith.constant 0 : i32
    %c0_i32_0 = arith.constant 0 : i32
    return %arg0, %c0_i32 : i32, i32
  }
  func.func @transform_1(%arg0: i32) -> (i32, i32) {
    %c0_i32 = arith.constant 0 : i32
    %c0_i32_0 = arith.constant 0 : i32
    return %arg0, %c0_i32 : i32, i32
  }
  func.func @transform_2(%arg0: i32) -> (i32, i32) {
    %c0_i32 = arith.constant 0 : i32
    %c0_i32_0 = arith.constant 0 : i32
    %c0_i32_1 = arith.constant 0 : i32
    return %c0_i32, %c0_i32_0 : i32, i32
  }
  func.func @transform_3(%arg0: i32) -> (i32, i32) {
    %c0_i32 = arith.constant 0 : i32
    %c0_i32_0 = arith.constant 0 : i32
    %c0_i32_1 = arith.constant 0 : i32
    return %c0_i32, %c0_i32_0 : i32, i32
  }
  func.func @transform_4(%arg0: i32) -> (i32, i32) {
    %c0_i32 = arith.constant 0 : i32
    %c0_i32_0 = arith.constant 0 : i32
    %c0_i32_1 = arith.constant 0 : i32
    return %c0_i32, %c0_i32_0 : i32, i32
  }
  func.func @transform_5(%arg0: i32) -> (i32, i32) {
    %c0_i32 = arith.constant 0 : i32
    %c0_i32_0 = arith.constant 0 : i32
    %c0_i32_1 = arith.constant 0 : i32
    return %c0_i32, %c0_i32_0 : i32, i32
  }
  func.func @transform_6(%arg0: i32) -> (i32, i32) {
    %c0_i32 = arith.constant 0 : i32
    %c0_i32_0 = arith.constant 0 : i32
    %c0_i32_1 = arith.constant 0 : i32
    return %c0_i32, %c0_i32_0 : i32, i32
  }
  func.func @transform_7(%arg0: i32) -> (i32, i32) {
    %c0_i32 = arith.constant 0 : i32
    %c0_i32_0 = arith.constant 0 : i32
    %c0_i32_1 = arith.constant 0 : i32
    return %c0_i32, %c0_i32_0 : i32, i32
  }
  func.func @transform_8(%arg0: i32) -> (i32, i32) {
    %c0_i32 = arith.constant 0 : i32
    %c0_i32_0 = arith.constant 0 : i32
    %c0_i32_1 = arith.constant 0 : i32
    return %c0_i32, %c0_i32_0 : i32, i32
  }
  func.func @transform_9(%arg0: i32) -> (i32, i32) {
    %c0_i32 = arith.constant 0 : i32
    %c0_i32_0 = arith.constant 0 : i32
    %c0_i32_1 = arith.constant 0 : i32
    return %c0_i32, %c0_i32_0 : i32, i32
  }
  func.func @transform_10(%arg0: i32) -> (i32, i32) {
    %c0_i32 = arith.constant 0 : i32
    %c0_i32_0 = arith.constant 0 : i32
    %c0_i32_1 = arith.constant 0 : i32
    return %c0_i32, %c0_i32_0 : i32, i32
  }
  func.func @transform_11(%arg0: i32) -> (i32, i32) {
    %c0_i32 = arith.constant 0 : i32
    %c0_i32_0 = arith.constant 0 : i32
    %c0_i32_1 = arith.constant 0 : i32
    return %c0_i32, %c0_i32_0 : i32, i32
  }
  func.func @transform_12(%arg0: i32) -> (i32, i32) {
    %c0_i32 = arith.constant 0 : i32
    %c0_i32_0 = arith.constant 0 : i32
    %c0_i32_1 = arith.constant 0 : i32
    return %c0_i32, %c0_i32_0 : i32, i32
  }
  func.func @transform_13(%arg0: i32) -> (i32, i32) {
    %c0_i32 = arith.constant 0 : i32
    %c0_i32_0 = arith.constant 0 : i32
    %c0_i32_1 = arith.constant 0 : i32
    return %c0_i32, %c0_i32_0 : i32, i32
  }
  func.func @transform_14(%arg0: i32) -> (i32, i32) {
    %c0_i32 = arith.constant 0 : i32
    %c0_i32_0 = arith.constant 0 : i32
    return %arg0, %c0_i32 : i32, i32
  }
}

</mosaic_0001>

<llo_original>
// kernel: _generator_pallas.1
$region0: #{_generator_pallas.1}
  #allocation0 [shape = 'u32[]', space=smem, size = 0x4, offset = 0x4, fixed_abs, tag = 'smem constant byte address 0x4 - core index']
  #allocation1 [shape = 'u32[144,128]{1,0:T(1,128)}', space=vmem, size = 0x12000, scoped, tag = 'internal scratch']
  %s0 = inlined_call_operand.vmem [shape: f32[64,32], index: 0, kind: input, shape index: {}]
  %s1 = inlined_call_operand.hbm [shape: f32[64,128], index: 1, kind: input, shape index: {}]
  %s2 = inlined_call_operand.hbm [shape: f32[32,128], index: 2, kind: input, shape index: {}]
  %s3 = inlined_call_operand.hbm [shape: f32[128,256], index: 3, kind: input, shape index: {}]
  %s4 = inlined_call_operand.hbm [shape: f32[1,256], index: 4, kind: input, shape index: {}]
  %s5 = inlined_call_operand.hbm [shape: f32[1,256], index: 5, kind: input, shape index: {}]
  %s6 = inlined_call_operand.hbm [shape: f32[256,512], index: 6, kind: input, shape index: {}]
  %s7 = inlined_call_operand.hbm [shape: f32[1,512], index: 7, kind: input, shape index: {}]
  %s8 = inlined_call_operand.hbm [shape: f32[1,512], index: 8, kind: input, shape index: {}]
  %s9 = inlined_call_operand.hbm [shape: f32[512,1024], index: 9, kind: input, shape index: {}]
  %s10 = inlined_call_operand.hbm [shape: f32[1,1024], index: 10, kind: input, shape index: {}]
  %s11 = inlined_call_operand.hbm [shape: f32[1,1024], index: 11, kind: input, shape index: {}]
  %s12 = inlined_call_operand.hbm [shape: f32[1024,256], index: 12, kind: input, shape index: {}]
  %s13 = inlined_call_operand.hbm [shape: f32[1,256], index: 13, kind: input, shape index: {}]
  %s14 = inlined_call_operand.hbm [shape: f32[64,256], index: 14, kind: output, shape index: {}]
  %s15 = sld [smem:[#allocation0]]
  $region118: #{_generator_pallas.1} parent=0
    _
  %s17 = ssub.s32 1, %s15
  %s18 = scalar_select 0, %s17, %s15
  $region1: #{_generator_pallas.1} parent=0
    #allocation2 [shape = 'u8[32768]{0}', space=vmem, size = 0x8000, scoped, tag = 'input window, operand 1, single buffered']
    #allocation3 [shape = 's32[1]{0}', space=sflag, size = 0x4, scoped, tag = 'scoped memory for _generator_pallas.1']
    #allocation4 [shape = 's32[1]{0}', space=sflag, size = 0x4, scoped, tag = 'scoped memory for _generator_pallas.1']
    #allocation5 [shape = 'u8[16384]{0}', space=vmem, size = 0x4000, scoped, tag = 'input window, operand 2, single buffered']
    #allocation6 [shape = 's32[1]{0}', space=sflag, size = 0x4, scoped, tag = 'scoped memory for _generator_pallas.1']
    #allocation7 [shape = 'u8[131072]{0}', space=vmem, size = 0x20000, scoped, tag = 'input window, operand 3, single buffered']
    #allocation8 [shape = 'u8[1024]{0}', space=vmem, size = 0x400, scoped, tag = 'input window, operand 4, single buffered']
    #allocation9 [shape = 's32[1]{0}', space=sflag, size = 0x4, scoped, tag = 'scoped memory for _generator_pallas.1']
    #allocation10 [shape = 'u8[1024]{0}', space=vmem, size = 0x400, scoped, tag = 'input window, operand 5, single buffered']
    #allocation11 [shape = 'u8[524288]{0}', space=vmem, size = 0x80000, scoped, tag = 'input window, operand 6, single buffered']
    #allocation12 [shape = 's32[1]{0}', space=sflag, size = 0x4, scoped, tag = 'scoped memory for _generator_pallas.1']
    #allocation13 [shape = 'u8[2048]{0}', space=vmem, size = 0x800, scoped, tag = 'input window, operand 7, single buffered']
    #allocation14 [shape = 'u8[2048]{0}', space=vmem, size = 0x800, scoped, tag = 'input window, operand 8, single buffered']
    #allocation15 [shape = 's32[1]{0}', space=sflag, size = 0x4, scoped, tag = 'scoped memory for _generator_pallas.1']
    #allocation16 [shape = 'u8[2097152]{0}', space=vmem, size = 0x200000, scoped, tag = 'input window, operand 9, single buffered']
    #allocation17 [shape = 'u8[4096]{0}', space=vmem, size = 0x1000, scoped, tag = 'input window, operand 10, single buffered']
    #allocation18 [shape = 's32[1]{0}', space=sflag, size = 0x4, scoped, tag = 'scoped memory for _generator_pallas.1']
    #allocation19 [shape = 'u8[4096]{0}', space=vmem, size = 0x1000, scoped, tag = 'input window, operand 11, single buffered']
    #allocation20 [shape = 'u8[1048576]{0}', space=vmem, size = 0x100000, scoped, tag = 'input window, operand 12, single buffered']
    #allocation21 [shape = 's32[1]{0}', space=sflag, size = 0x4, scoped, tag = 'scoped memory for _generator_pallas.1']
    #allocation22 [shape = 'u8[1024]{0}', space=vmem, size = 0x400, scoped, tag = 'input window, operand 13, single buffered']
    #allocation23 [shape = 'u8[65536]{0}', space=vmem, size = 0x10000, scoped, tag = 'output window, operand 0, single buffered']
    %19 = vsyncpa [#allocation3], 0
    %20 = vsyncpa [#allocation6], 0
    %21 = vsyncpa [#allocation9], 0
    %22 = vsyncpa [#allocation12], 0
    %23 = vsyncpa [#allocation15], 0
    %24 = vsyncpa [#allocation18], 0
    %25 = vsyncpa [#allocation21], 0
    %26 = vsyncpa [#allocation4], 0
    // Predicated region
    $region2: #{_generator_pallas.1} parent=1 // pred_check
      _
    $region3: #{_generator_pallas.1} parent=1 // pred_check_branch
      %28 = sbr.rel (0) target = $region5
    $region4: #{_generator_pallas.1} parent=1 // pred_region
      _
    $region5: #{_generator_pallas.1} parent=1 // pred_fallthru
      _
    // Predicated region
    $region6: #{_generator_pallas.1} parent=1 // pred_check
      _
    $region7: #{_generator_pallas.1} parent=1 // pred_check_branch
      %30 = sbr.rel (0) target = $region9
    $region8: #{_generator_pallas.1} parent=1 // pred_region
      %s32 = ssub.s32 1024, 1024
      %33 = vsyncadd [#allocation3], %s32
      %s34 = sshll.u32 [#allocation2], 4
      %s35 = int_to_ptr.vmem [resolvable:$true] %s34
      %40 = dma.hbm_to_vmem [thread:$0]  %s1, 1024, %s35, [#allocation3], 128, 128, 8
    $region9: #{_generator_pallas.1} parent=1 // pred_fallthru
      _
    // Predicated region
    $region10: #{_generator_pallas.1} parent=1 // pred_check
      _
    $region11: #{_generator_pallas.1} parent=1 // pred_check_branch
      %42 = sbr.rel (0) target = $region13
    $region12: #{_generator_pallas.1} parent=1 // pred_region
      %s44 = ssub.s32 512, 512
      %45 = vsyncadd [#allocation6], %s44
      %s46 = sshll.u32 [#allocation5], 4
      %s47 = int_to_ptr.vmem [resolvable:$true] %s46
      %52 = dma.hbm_to_vmem [thread:$0]  %s2, 512, %s47, [#allocation6], 128, 128, 8
    $region13: #{_generator_pallas.1} parent=1 // pred_fallthru
      _
    // Predicated region
    $region14: #{_generator_pallas.1} parent=1 // pred_check
      _
    $region15: #{_generator_pallas.1} parent=1 // pred_check_branch
      %54 = sbr.rel (0) target = $region17
    $region16: #{_generator_pallas.1} parent=1 // pred_region
      %s56 = ssub.s32 4096, 4096
      %57 = vsyncadd [#allocation6], %s56
      %s58 = sshll.u32 [#allocation7], 4
      %s59 = int_to_ptr.vmem [resolvable:$true] %s58
      %64 = dma.hbm_to_vmem [thread:$0]  %s3, 4096, %s59, [#allocation6], 256, 256, 16
    $region17: #{_generator_pallas.1} parent=1 // pred_fallthru
      _
    // Predicated region
    $region18: #{_generator_pallas.1} parent=1 // pred_check
      _
    $region19: #{_generator_pallas.1} parent=1 // pred_check_branch
      %66 = sbr.rel (0) target = $region21
    $region20: #{_generator_pallas.1} parent=1 // pred_region
      %s68 = ssub.s32 32, 32
      %69 = vsyncadd [#allocation9], %s68
      %s71 = sshll.u32 [#allocation8], 4
      %s72 = int_to_ptr.vmem [resolvable:$true] %s71
      %74 = dma.hbm_to_vmem [thread:$0]  %s4, 32, %s72, [#allocation9]
    $region21: #{_generator_pallas.1} parent=1 // pred_fallthru
      _
    // Predicated region
    $region22: #{_generator_pallas.1} parent=1 // pred_check
      _
    $region23: #{_generator_pallas.1} parent=1 // pred_check_branch
      %76 = sbr.rel (0) target = $region25
    $region24: #{_generator_pallas.1} parent=1 // pred_region
      %s78 = ssub.s32 32, 32
      %79 = vsyncadd [#allocation9], %s78
      %s81 = sshll.u32 [#allocation10], 4
      %s82 = int_to_ptr.vmem [resolvable:$true] %s81
      %84 = dma.hbm_to_vmem [thread:$0]  %s5, 32, %s82, [#allocation9]
    $region25: #{_generator_pallas.1} parent=1 // pred_fallthru
      _
    // Predicated region
    $region26: #{_generator_pallas.1} parent=1 // pred_check
      _
    $region27: #{_generator_pallas.1} parent=1 // pred_check_branch
      %86 = sbr.rel (0) target = $region29
    $region28: #{_generator_pallas.1} parent=1 // pred_region
      %s88 = ssub.s32 16384, 16384
      %89 = vsyncadd [#allocation12], %s88
      %s90 = sshll.u32 [#allocation11], 4
      %s91 = int_to_ptr.vmem [resolvable:$true] %s90
      %96 = dma.hbm_to_vmem [thread:$0]  %s6, 16384, %s91, [#allocation12], 512, 512, 32
    $region29: #{_generator_pallas.1} parent=1 // pred_fallthru
      _
    // Predicated region
    $region30: #{_generator_pallas.1} parent=1 // pred_check
      _
    $region31: #{_generator_pallas.1} parent=1 // pred_check_branch
      %98 = sbr.rel (0) target = $region33
    $region32: #{_generator_pallas.1} parent=1 // pred_region
      %s100 = ssub.s32 64, 64
      %101 = vsyncadd [#allocation12], %s100
      %s103 = sshll.u32 [#allocation13], 4
      %s104 = int_to_ptr.vmem [resolvable:$true] %s103
      %106 = dma.hbm_to_vmem [thread:$0]  %s7, 64, %s104, [#allocation12]
    $region33: #{_generator_pallas.1} parent=1 // pred_fallthru
      _
    // Predicated region
    $region34: #{_generator_pallas.1} parent=1 // pred_check
      _
    $region35: #{_generator_pallas.1} parent=1 // pred_check_branch
      %108 = sbr.rel (0) target = $region37
    $region36: #{_generator_pallas.1} parent=1 // pred_region
      %s110 = ssub.s32 64, 64
      %111 = vsyncadd [#allocation15], %s110
      %s113 = sshll.u32 [#allocation14], 4
      %s114 = int_to_ptr.vmem [resolvable:$true] %s113
      %116 = dma.hbm_to_vmem [thread:$0]  %s8, 64, %s114, [#allocation15]
    $region37: #{_generator_pallas.1} parent=1 // pred_fallthru
      _
    // Predicated region
    $region38: #{_generator_pallas.1} parent=1 // pred_check
      _
    $region39: #{_generator_pallas.1} parent=1 // pred_check_branch
      %118 = sbr.rel (0) target = $region41
    $region40: #{_generator_pallas.1} parent=1 // pred_region
      %s120 = ssub.s32 65536, 65536
      %121 = vsyncadd [#allocation15], %s120
      %s122 = sshll.u32 [#allocation16], 4
      %s123 = int_to_ptr.vmem [resolvable:$true] %s122
      %128 = dma.hbm_to_vmem [thread:$0]  %s9, 65536, %s123, [#allocation15], 1024, 1024, 64
    $region41: #{_generator_pallas.1} parent=1 // pred_fallthru
      _
    // Predicated region
    $region42: #{_generator_pallas.1} parent=1 // pred_check
      _
    $region43: #{_generator_pallas.1} parent=1 // pred_check_branch
      %130 = sbr.rel (0) target = $region45
    $region44: #{_generator_pallas.1} parent=1 // pred_region
      %s132 = ssub.s32 128, 128
      %133 = vsyncadd [#allocation18], %s132
      %s135 = sshll.u32 [#allocation17], 4
      %s136 = int_to_ptr.vmem [resolvable:$true] %s135
      %138 = dma.hbm_to_vmem [thread:$0]  %s10, 128, %s136, [#allocation18]
    $region45: #{_generator_pallas.1} parent=1 // pred_fallthru
      _
    // Predicated region
    $region46: #{_generator_pallas.1} parent=1 // pred_check
      _
    $region47: #{_generator_pallas.1} parent=1 // pred_check_branch
      %140 = sbr.rel (0) target = $region49
    $region48: #{_generator_pallas.1} parent=1 // pred_region
      %s142 = ssub.s32 128, 128
      %143 = vsyncadd [#allocation18], %s142
      %s145 = sshll.u32 [#allocation19], 4
      %s146 = int_to_ptr.vmem [resolvable:$true] %s145
      %148 = dma.hbm_to_vmem [thread:$0]  %s11, 128, %s146, [#allocation18]
    $region49: #{_generator_pallas.1} parent=1 // pred_fallthru
      _
    // Predicated region
    $region50: #{_generator_pallas.1} parent=1 // pred_check
      _
    $region51: #{_generator_pallas.1} parent=1 // pred_check_branch
      %150 = sbr.rel (0) target = $region53
    $region52: #{_generator_pallas.1} parent=1 // pred_region
      %s152 = ssub.s32 32768, 32768
      %153 = vsyncadd [#allocation21], %s152
      %s154 = sshll.u32 [#allocation20], 4
      %s155 = int_to_ptr.vmem [resolvable:$true] %s154
      %160 = dma.hbm_to_vmem [thread:$0]  %s12, 32768, %s155, [#allocation21], 256, 256, 16
    $region53: #{_generator_pallas.1} parent=1 // pred_fallthru
      _
    // Predicated region
    $region54: #{_generator_pallas.1} parent=1 // pred_check
      _
    $region55: #{_generator_pallas.1} parent=1 // pred_check_branch
      %162 = sbr.rel (0) target = $region57
    $region56: #{_generator_pallas.1} parent=1 // pred_region
      %s164 = ssub.s32 32, 32
      %165 = vsyncadd [#allocation21], %s164
      %s167 = sshll.u32 [#allocation22], 4
      %s168 = int_to_ptr.vmem [resolvable:$true] %s167
      %170 = dma.hbm_to_vmem [thread:$0]  %s13, 32, %s168, [#allocation21]
    $region57: #{_generator_pallas.1} parent=1 // pred_fallthru
      _
    // Predicated region
    $region58: #{_generator_pallas.1} parent=1 // pred_check
      _
    $region59: #{_generator_pallas.1} parent=1 // pred_check_branch
      %172 = sbr.rel (0) target = $region61
    $region60: #{_generator_pallas.1} parent=1 // pred_region
      %173 = dma.done [#allocation3], 1024
    $region61: #{_generator_pallas.1} parent=1 // pred_fallthru
      _
    // Predicated region
    $region62: #{_generator_pallas.1} parent=1 // pred_check
      _
    $region63: #{_generator_pallas.1} parent=1 // pred_check_branch
      %175 = sbr.rel (0) target = $region65
    $region64: #{_generator_pallas.1} parent=1 // pred_region
      %176 = dma.done [#allocation6], 512
    $region65: #{_generator_pallas.1} parent=1 // pred_fallthru
      _
    // Predicated region
    $region66: #{_generator_pallas.1} parent=1 // pred_check
      _
    $region67: #{_generator_pallas.1} parent=1 // pred_check_branch
      %178 = sbr.rel (0) target = $region69
    $region68: #{_generator_pallas.1} parent=1 // pred_region
      %179 = dma.done [#allocation6], 4096
    $region69: #{_generator_pallas.1} parent=1 // pred_fallthru
      _
    // Predicated region
    $region70: #{_generator_pallas.1} parent=1 // pred_check
      _
    $region71: #{_generator_pallas.1} parent=1 // pred_check_branch
      %181 = sbr.rel (0) target = $region73
    $region72: #{_generator_pallas.1} parent=1 // pred_region
      %182 = dma.done [#allocation9], 32
    $region73: #{_generator_pallas.1} parent=1 // pred_fallthru
      _
    // Predicated region
    $region74: #{_generator_pallas.1} parent=1 // pred_check
      _
    $region75: #{_generator_pallas.1} parent=1 // pred_check_branch
      %184 = sbr.rel (0) target = $region77
    $region76: #{_generator_pallas.1} parent=1 // pred_region
      %185 = dma.done [#allocation9], 32
    $region77: #{_generator_pallas.1} parent=1 // pred_fallthru
      _
    // Predicated region
    $region78: #{_generator_pallas.1} parent=1 // pred_check
      _
    $region79: #{_generator_pallas.1} parent=1 // pred_check_branch
      %187 = sbr.rel (0) target = $region81
    $region80: #{_generator_pallas.1} parent=1 // pred_region
      %188 = dma.done [#allocation12], 16384
    $region81: #{_generator_pallas.1} parent=1 // pred_fallthru
      _
    // Predicated region
    $region82: #{_generator_pallas.1} parent=1 // pred_check
      _
    $region83: #{_generator_pallas.1} parent=1 // pred_check_branch
      %190 = sbr.rel (0) target = $region85
    $region84: #{_generator_pallas.1} parent=1 // pred_region
      %191 = dma.done [#allocation12], 64
    $region85: #{_generator_pallas.1} parent=1 // pred_fallthru
      _
    // Predicated region
    $region86: #{_generator_pallas.1} parent=1 // pred_check
      _
    $region87: #{_generator_pallas.1} parent=1 // pred_check_branch
      %193 = sbr.rel (0) target = $region89
    $region88: #{_generator_pallas.1} parent=1 // pred_region
      %194 = dma.done [#allocation15], 64
    $region89: #{_generator_pallas.1} parent=1 // pred_fallthru
      _
    // Predicated region
    $region90: #{_generator_pallas.1} parent=1 // pred_check
      _
    $region91: #{_generator_pallas.1} parent=1 // pred_check_branch
      %196 = sbr.rel (0) target = $region93
    $region92: #{_generator_pallas.1} parent=1 // pred_region
      %197 = dma.done [#allocation15], 65536
    $region93: #{_generator_pallas.1} parent=1 // pred_fallthru
      _
    // Predicated region
    $region94: #{_generator_pallas.1} parent=1 // pred_check
      _
    $region95: #{_generator_pallas.1} parent=1 // pred_check_branch
      %199 = sbr.rel (0) target = $region97
    $region96: #{_generator_pallas.1} parent=1 // pred_region
      %200 = dma.done [#allocation18], 128
    $region97: #{_generator_pallas.1} parent=1 // pred_fallthru
      _
    // Predicated region
    $region98: #{_generator_pallas.1} parent=1 // pred_check
      _
    $region99: #{_generator_pallas.1} parent=1 // pred_check_branch
      %202 = sbr.rel (0) target = $region101
    $region100: #{_generator_pallas.1} parent=1 // pred_region
      %203 = dma.done [#allocation18], 128
    $region101: #{_generator_pallas.1} parent=1 // pred_fallthru
      _
    // Predicated region
    $region102: #{_generator_pallas.1} parent=1 // pred_check
      _
    $region103: #{_generator_pallas.1} parent=1 // pred_check_branch
      %205 = sbr.rel (0) target = $region105
    $region104: #{_generator_pallas.1} parent=1 // pred_region
      %206 = dma.done [#allocation21], 32768
    $region105: #{_generator_pallas.1} parent=1 // pred_fallthru
      _
    // Predicated region
    $region106: #{_generator_pallas.1} parent=1 // pred_check
      _
    $region107: #{_generator_pallas.1} parent=1 // pred_check_branch
      %208 = sbr.rel (0) target = $region109
    $region108: #{_generator_pallas.1} parent=1 // pred_region
      %209 = dma.done [#allocation21], 32
    $region109: #{_generator_pallas.1} parent=1 // pred_fallthru
      _
    %v210 = vld [vmem:[%s0] sm:$0xff]
    %v211 = vld [vmem:[%s0 + $0x8] sm:$0xff]
    %v212 = vld [vmem:[%s0 + $0x10] sm:$0xff]
    %v213 = vld [vmem:[%s0 + $0x18] sm:$0xff]
    %v214 = vld [vmem:[%s0 + $0x20] sm:$0xff]
    %v215 = vld [vmem:[%s0 + $0x28] sm:$0xff]
    %v216 = vld [vmem:[%s0 + $0x30] sm:$0xff]
    %v217 = vld [vmem:[%s0 + $0x38] sm:$0xff]
    %v218 = vld [vmem:[#allocation5] sm:$0xff]
    %v219 = vld [vmem:[#allocation5 + $0x8] sm:$0xff]
    %v220 = vld [vmem:[#allocation5 + $0x10] sm:$0xff]
    %v221 = vld [vmem:[#allocation5 + $0x18] sm:$0xff]
    %v222 = vld [vmem:[#allocation2] sm:$0xff]
    %v223 = vld [vmem:[#allocation2 + $0x8] sm:$0xff]
    %v224 = vld [vmem:[#allocation2 + $0x10] sm:$0xff]
    %v225 = vld [vmem:[#allocation2 + $0x18] sm:$0xff]
    %v226 = vld [vmem:[#allocation2 + $0x20] sm:$0xff]
    %v227 = vld [vmem:[#allocation2 + $0x28] sm:$0xff]
    %v228 = vld [vmem:[#allocation2 + $0x30] sm:$0xff]
    %v229 = vld [vmem:[#allocation2 + $0x38] sm:$0xff]
    %vm230 = vcmask 261120
    %v232 = vsel %vm230, %v210, 0
    %v235 = vsel %vm230, %v211, 0
    %v238 = vsel %vm230, %v212, 0
    %v241 = vsel %vm230, %v213, 0
    %v244 = vsel %vm230, %v214, 0
    %v247 = vsel %vm230, %v215, 0
    %v250 = vsel %vm230, %v216, 0
    %v253 = vsel %vm230, %v217, 0
    %255 = vmatprep.subr.mxu0 0.0
    %256 = vmatpush1.msra.mxu0 %v218
    %257 = vmatprep.subr.mxu0 0.0
    %258 = vmatpush1.msra.mxu0 %v219
    %259 = vmatprep.subr.mxu0 0.0
    %260 = vmatpush1.msra.mxu0 %v220
    %261 = vmatprep.subr.mxu0 0.0
    %262 = vmatpush1.msra.mxu0 %v221
    %263 = vmatprep.subr.mxu0 0.0
    %264 = vmatpush1.msra.mxu0 0.0
    %265 = vmatprep.subr.mxu0 0.0
    %266 = vmatpush1.msra.mxu0 0.0
    %267 = vmatprep.subr.mxu0 0.0
    %268 = vmatpush1.msra.mxu0 0.0
    %269 = vmatprep.subr.mxu0 0.0
    %270 = vmatpush1.msra.mxu0 0.0
    %271 = vmatprep.subr.mxu0 0.0
    %272 = vmatpush1.msra.mxu0 0.0
    %273 = vmatprep.subr.mxu0 0.0
    %274 = vmatpush1.msra.mxu0 0.0
    %275 = vmatprep.subr.mxu0 0.0
    %276 = vmatpush1.msra.mxu0 0.0
    %277 = vmatprep.subr.mxu0 0.0
    %278 = vmatpush1.msra.mxu0 0.0
    %279 = vmatprep.subr.mxu0 0.0
    %280 = vmatpush1.msra.mxu0 0.0
    %281 = vmatprep.subr.mxu0 0.0
    %282 = vmatpush1.msra.mxu0 0.0
    %283 = vmatprep.subr.mxu0 0.0
    %284 = vmatpush1.msra.mxu0 0.0
    %285 = vmatprep.subr.mxu0 0.0
    %286 = vmatpush1.msra.mxu0 0.0
    %287 = vmatprep.subr.mxu0 0.0
    %288 = vmatpush1.msra.mxu0 0.0
    %289 = vmatprep.subr.mxu0 0.0
    %290 = vmatpush1.msra.mxu0 0.0
    %291 = vmatprep.subr.mxu0 0.0
    %292 = vmatpush1.msra.mxu0 0.0
    %293 = vmatprep.subr.mxu0 0.0
    %294 = vmatpush1.msra.mxu0 0.0
    %295 = vmatprep.subr.mxu0 0.0
    %296 = vmatpush1.msra.mxu0 0.0
    %297 = vmatprep.subr.mxu0 0.0
    %298 = vmatpush1.msra.mxu0 0.0
    %299 = vmatprep.subr.mxu0 0.0
    %300 = vmatpush1.msra.mxu0 0.0
    %301 = vmatprep.subr.mxu0 0.0
    %302 = vmatpush1.msra.mxu0 0.0
    %303 = vmatprep.subr.mxu0 0.0
    %304 = vmatpush1.msra.mxu0 0.0
    %305 = vmatprep.subr.mxu0 0.0
    %306 = vmatpush1.msra.mxu0 0.0
    %307 = vmatprep.subr.mxu0 0.0
    %308 = vmatpush1.msra.mxu0 0.0
    %309 = vmatprep.subr.mxu0 0.0
    %310 = vmatpush1.msra.mxu0 0.0
    %311 = vmatprep.subr.mxu0 0.0
    %312 = vmatpush1.msra.mxu0 0.0
    %313 = vmatprep.subr.mxu0 0.0
    %314 = vmatpush1.msra.mxu0 0.0
    %315 = vmatprep.subr.mxu0 0.0
    %316 = vmatpush1.msra.mxu0 0.0
    %317 = vmatprep.subr.mxu0 0.0
    %318 = vmatpush1.msra.mxu0 0.0
    %319 = vmatprep.mubr.f32.mxu0 0.0
    %320 = vmatmul.mubr.f32.gmra.mrb[0].mxu0 %v232
    %v321 = vpop.f32.mrb[0].mxu0
    %v322 = vadd.f32 %v222, %v321
    %v323 = vpop.f32.mrb[0].mxu0
    %324 = vmatprep.mubr.f32.mxu0 0.0
    %325 = vmatmul.mubr.f32.gmra.mrb[0].mxu0 %v235
    %v326 = vpop.f32.mrb[0].mxu0
    %v327 = vadd.f32 %v223, %v326
    %v328 = vpop.f32.mrb[0].mxu0
    %329 = vmatprep.mubr.f32.mxu0 0.0
    %330 = vmatmul.mubr.f32.gmra.mrb[0].mxu0 %v238
    %v331 = vpop.f32.mrb[0].mxu0
    %v332 = vadd.f32 %v224, %v331
    %v333 = vpop.f32.mrb[0].mxu0
    %334 = vmatprep.mubr.f32.mxu0 0.0
    %335 = vmatmul.mubr.f32.gmra.mrb[0].mxu0 %v241
    %v336 = vpop.f32.mrb[0].mxu0
    %v337 = vadd.f32 %v225, %v336
    %v338 = vpop.f32.mrb[0].mxu0
    %339 = vmatprep.mubr.f32.mxu0 0.0
    %340 = vmatmul.mubr.f32.gmra.mrb[0].mxu0 %v244
    %v341 = vpop.f32.mrb[0].mxu0
    %v342 = vadd.f32 %v226, %v341
    %v343 = vpop.f32.mrb[0].mxu0
    %344 = vmatprep.mubr.f32.mxu0 0.0
    %345 = vmatmul.mubr.f32.gmra.mrb[0].mxu0 %v247
    %v346 = vpop.f32.mrb[0].mxu0
    %v347 = vadd.f32 %v227, %v346
    %v348 = vpop.f32.mrb[0].mxu0
    %349 = vmatprep.mubr.f32.mxu0 0.0
    %350 = vmatmul.mubr.f32.gmra.mrb[0].mxu0 %v250
    %v351 = vpop.f32.mrb[0].mxu0
    %v352 = vadd.f32 %v228, %v351
    %v353 = vpop.f32.mrb[0].mxu0
    %354 = vmatprep.mubr.f32.mxu0 0.0
    %355 = vmatmul.mubr.f32.gmra.mrb[0].mxu0 %v253
    %v356 = vpop.f32.mrb[0].mxu0
    %v357 = vadd.f32 %v229, %v356
    %v358 = vpop.f32.mrb[0].mxu0
    %359 = vdwg.mxu0
    %v360 = vmul.f32 %v322, 0.2
    %v361 = vmul.f32 %v327, 0.2
    %v362 = vmul.f32 %v332, 0.2
    %v363 = vmul.f32 %v337, 0.2
    %v364 = vmul.f32 %v342, 0.2
    %v365 = vmul.f32 %v347, 0.2
    %v366 = vmul.f32 %v352, 0.2
    %v367 = vmul.f32 %v357, 0.2
    %v368 = vmax.f32 %v322, %v360
    %v369 = vmax.f32 %v327, %v361
    %v370 = vmax.f32 %v332, %v362
    %v371 = vmax.f32 %v337, %v363
    %v372 = vmax.f32 %v342, %v364
    %v373 = vmax.f32 %v347, %v365
    %v374 = vmax.f32 %v352, %v366
    %v375 = vmax.f32 %v357, %v367
    %v376 = vld [vmem:[#allocation7] sm:$0xff]
    %v377 = vld [vmem:[#allocation7 + $0x8] sm:$0xff]
    %v378 = vld [vmem:[#allocation7 + $0x10] sm:$0xff]
    %v379 = vld [vmem:[#allocation7 + $0x18] sm:$0xff]
    %v380 = vld [vmem:[#allocation7 + $0x20] sm:$0xff]
    %v381 = vld [vmem:[#allocation7 + $0x28] sm:$0xff]
    %v382 = vld [vmem:[#allocation7 + $0x30] sm:$0xff]
    %v383 = vld [vmem:[#allocation7 + $0x38] sm:$0xff]
    %v384 = vld [vmem:[#allocation7 + $0x40] sm:$0xff]
    %v385 = vld [vmem:[#allocation7 + $0x48] sm:$0xff]
    %v386 = vld [vmem:[#allocation7 + $0x50] sm:$0xff]
    %v387 = vld [vmem:[#allocation7 + $0x58] sm:$0xff]
    %v388 = vld [vmem:[#allocation7 + $0x60] sm:$0xff]
    %v389 = vld [vmem:[#allocation7 + $0x68] sm:$0xff]
    %v390 = vld [vmem:[#allocation7 + $0x70] sm:$0xff]
    %v391 = vld [vmem:[#allocation7 + $0x78] sm:$0xff]
    %v392 = vld [vmem:[#allocation7 + $0x80] sm:$0xff]
    %v393 = vld [vmem:[#allocation7 + $0x88] sm:$0xff]
    %v394 = vld [vmem:[#allocation7 + $0x90] sm:$0xff]
    %v395 = vld [vmem:[#allocation7 + $0x98] sm:$0xff]
    %v396 = vld [vmem:[#allocation7 + $0xa0] sm:$0xff]
    %v397 = vld [vmem:[#allocation7 + $0xa8] sm:$0xff]
    %v398 = vld [vmem:[#allocation7 + $0xb0] sm:$0xff]
    %v399 = vld [vmem:[#allocation7 + $0xb8] sm:$0xff]
    %v400 = vld [vmem:[#allocation7 + $0xc0] sm:$0xff]
    %v401 = vld [vmem:[#allocation7 + $0xc8] sm:$0xff]
    %v402 = vld [vmem:[#allocation7 + $0xd0] sm:$0xff]
    %v403 = vld [vmem:[#allocation7 + $0xd8] sm:$0xff]
    %v404 = vld [vmem:[#allocation7 + $0xe0] sm:$0xff]
    %v405 = vld [vmem:[#allocation7 + $0xe8] sm:$0xff]
    %v406 = vld [vmem:[#allocation7 + $0xf0] sm:$0xff]
    %v407 = vld [vmem:[#allocation7 + $0xf8] sm:$0xff]
    %408 = vmatprep.subr.mxu0 %v377
    %409 = vmatpush1.msra.mxu0 %v376
    %410 = vmatprep.subr.mxu0 %v379
    %411 = vmatpush1.msra.mxu0 %v378
    %412 = vmatprep.subr.mxu0 %v381
    %413 = vmatpush1.msra.mxu0 %v380
    %414 = vmatprep.subr.mxu0 %v383
    %415 = vmatpush1.msra.mxu0 %v382
    %416 = vmatprep.subr.mxu0 %v385
    %417 = vmatpush1.msra.mxu0 %v384
    %418 = vmatprep.subr.mxu0 %v387
    %419 = vmatpush1.msra.mxu0 %v386
    %420 = vmatprep.subr.mxu0 %v389
    %421 = vmatpush1.msra.mxu0 %v388
    %422 = vmatprep.subr.mxu0 %v391
    %423 = vmatpush1.msra.mxu0 %v390
    %424 = vmatprep.subr.mxu0 %v393
    %425 = vmatpush1.msra.mxu0 %v392
    %426 = vmatprep.subr.mxu0 %v395
    %427 = vmatpush1.msra.mxu0 %v394
    %428 = vmatprep.subr.mxu0 %v397
    %429 = vmatpush1.msra.mxu0 %v396
    %430 = vmatprep.subr.mxu0 %v399
    %431 = vmatpush1.msra.mxu0 %v398
    %432 = vmatprep.subr.mxu0 %v401
    %433 = vmatpush1.msra.mxu0 %v400
    %434 = vmatprep.subr.mxu0 %v403
    %435 = vmatpush1.msra.mxu0 %v402
    %436 = vmatprep.subr.mxu0 %v405
    %437 = vmatpush1.msra.mxu0 %v404
    %438 = vmatprep.subr.mxu0 %v407
    %439 = vmatpush1.msra.mxu0 %v406
    %440 = vmatprep.subr.mxu0 0.0
    %441 = vmatpush1.msra.mxu0 0.0
    %442 = vmatprep.subr.mxu0 0.0
    %443 = vmatpush1.msra.mxu0 0.0
    %444 = vmatprep.subr.mxu0 0.0
    %445 = vmatpush1.msra.mxu0 0.0
    %446 = vmatprep.subr.mxu0 0.0
    %447 = vmatpush1.msra.mxu0 0.0
    %448 = vmatprep.subr.mxu0 0.0
    %449 = vmatpush1.msra.mxu0 0.0
    %450 = vmatprep.subr.mxu0 0.0
    %451 = vmatpush1.msra.mxu0 0.0
    %452 = vmatprep.subr.mxu0 0.0
    %453 = vmatpush1.msra.mxu0 0.0
    %454 = vmatprep.subr.mxu0 0.0
    %455 = vmatpush1.msra.mxu0 0.0
    %456 = vmatprep.subr.mxu0 0.0
    %457 = vmatpush1.msra.mxu0 0.0
    %458 = vmatprep.subr.mxu0 0.0
    %459 = vmatpush1.msra.mxu0 0.0
    %460 = vmatprep.subr.mxu0 0.0
    %461 = vmatpush1.msra.mxu0 0.0
    %462 = vmatprep.subr.mxu0 0.0
    %463 = vmatpush1.msra.mxu0 0.0
    %464 = vmatprep.subr.mxu0 0.0
    %465 = vmatpush1.msra.mxu0 0.0
    %466 = vmatprep.subr.mxu0 0.0
    %467 = vmatpush1.msra.mxu0 0.0
    %468 = vmatprep.subr.mxu0 0.0
    %469 = vmatpush1.msra.mxu0 0.0
    %470 = vmatprep.subr.mxu0 0.0
    %471 = vmatpush1.msra.mxu0 0.0
    %472 = vmatprep.mubr.f32.mxu0 0.0
    %473 = vmatmul.mubr.f32.gmra.mrb[0].mxu0 %v368
    %v474 = vpop.f32.mrb[0].mxu0
    %v475 = vadd.f32 0.0, %v474
    %v476 = vpop.f32.mrb[0].mxu0
    %v477 = vadd.f32 0.0, %v476
    %478 = vmatprep.mubr.f32.mxu0 0.0
    %479 = vmatmul.mubr.f32.gmra.mrb[0].mxu0 %v369
    %v480 = vpop.f32.mrb[0].mxu0
    %v481 = vadd.f32 0.0, %v480
    %v482 = vpop.f32.mrb[0].mxu0
    %v483 = vadd.f32 0.0, %v482
    %484 = vmatprep.mubr.f32.mxu0 0.0
    %485 = vmatmul.mubr.f32.gmra.mrb[0].mxu0 %v370
    %v486 = vpop.f32.mrb[0].mxu0
    %v487 = vadd.f32 0.0, %v486
    %v488 = vpop.f32.mrb[0].mxu0
    %v489 = vadd.f32 0.0, %v488
    %490 = vmatprep.mubr.f32.mxu0 0.0
    %491 = vmatmul.mubr.f32.gmra.mrb[0].mxu0 %v371
    %v492 = vpop.f32.mrb[0].mxu0
    %v493 = vadd.f32 0.0, %v492
    %v494 = vpop.f32.mrb[0].mxu0
    %v495 = vadd.f32 0.0, %v494
    %496 = vmatprep.mubr.f32.mxu0 0.0
    %497 = vmatmul.mubr.f32.gmra.mrb[0].mxu0 %v372
    %v498 = vpop.f32.mrb[0].mxu0
    %v499 = vadd.f32 0.0, %v498
    %v500 = vpop.f32.mrb[0].mxu0
    %v501 = vadd.f32 0.0, %v500
    %502 = vmatprep.mubr.f32.mxu0 0.0
    %503 = vmatmul.mubr.f32.gmra.mrb[0].mxu0 %v373
    %v504 = vpop.f32.mrb[0].mxu0
    %v505 = vadd.f32 0.0, %v504
    %v506 = vpop.f32.mrb[0].mxu0
    %v507 = vadd.f32 0.0, %v506
    %508 = vmatprep.mubr.f32.mxu0 0.0
    %509 = vmatmul.mubr.f32.gmra.mrb[0].mxu0 %v374
    %v510 = vpop.f32.mrb[0].mxu0
    %v511 = vadd.f32 0.0, %v510
    %v512 = vpop.f32.mrb[0].mxu0
    %v513 = vadd.f32 0.0, %v512
    %514 = vmatprep.mubr.f32.mxu0 0.0
    %515 = vmatmul.mubr.f32.gmra.mrb[0].mxu0 %v375
    %v516 = vpop.f32.mrb[0].mxu0
    %v517 = vadd.f32 0.0, %v516
    %v518 = vpop.f32.mrb[0].mxu0
    %v519 = vadd.f32 0.0, %v518
    %520 = vdwg.mxu0
    %v521 = vld [vmem:[#allocation8] sm:$0x3]
    %v523 = vlaneseq
    %v524 = vshrl.u32 %v523, 7
    %v525 = vsub.s32 0, %v524
    %v526 = vrot.slane %v521, %v525
    %v527 = vlaneseq
    %v528 = vshrl.u32 %v527, 7
    %v529 = vsub.s32 1, %v528
    %v530 = vrot.slane %v521, %v529
    %v533 = vmul.f32 %v475, %v526
    %v534 = vmul.f32 %v477, %v530
    %v535 = vmul.f32 %v481, %v526
    %v536 = vmul.f32 %v483, %v530
    %v537 = vmul.f32 %v487, %v526
    %v538 = vmul.f32 %v489, %v530
    %v539 = vmul.f32 %v493, %v526
    %v540 = vmul.f32 %v495, %v530
    %v541 = vmul.f32 %v499, %v526
    %v542 = vmul.f32 %v501, %v530
    %v543 = vmul.f32 %v505, %v526
    %v544 = vmul.f32 %v507, %v530
    %v545 = vmul.f32 %v511, %v526
    %v546 = vmul.f32 %v513, %v530
    %v547 = vmul.f32 %v517, %v526
    %v548 = vmul.f32 %v519, %v530
    %v549 = vld [vmem:[#allocation10] sm:$0x3]
    %v551 = vlaneseq
    %v552 = vshrl.u32 %v551, 7
    %v553 = vsub.s32 0, %v552
    %v554 = vrot.slane %v549, %v553
    %v555 = vlaneseq
    %v556 = vshrl.u32 %v555, 7
    %v557 = vsub.s32 1, %v556
    %v558 = vrot.slane %v549, %v557
    %v561 = vadd.f32 %v533, %v554
    %v562 = vadd.f32 %v534, %v558
    %v563 = vadd.f32 %v535, %v554
    %v564 = vadd.f32 %v536, %v558
    %v565 = vadd.f32 %v537, %v554
    %v566 = vadd.f32 %v538, %v558
    %v567 = vadd.f32 %v539, %v554
    %v568 = vadd.f32 %v540, %v558
    %v569 = vadd.f32 %v541, %v554
    %v570 = vadd.f32 %v542, %v558
    %v571 = vadd.f32 %v543, %v554
    %v572 = vadd.f32 %v544, %v558
    %v573 = vadd.f32 %v545, %v554
    %v574 = vadd.f32 %v546, %v558
    %v575 = vadd.f32 %v547, %v554
    %v576 = vadd.f32 %v548, %v558
    %v577 = vmul.f32 %v561, 0.2
    %v578 = vmul.f32 %v562, 0.2
    %v579 = vmul.f32 %v563, 0.2
    %v580 = vmul.f32 %v564, 0.2
    %v581 = vmul.f32 %v565, 0.2
    %v582 = vmul.f32 %v566, 0.2
    %v583 = vmul.f32 %v567, 0.2
    %v584 = vmul.f32 %v568, 0.2
    %v585 = vmul.f32 %v569, 0.2
    %v586 = vmul.f32 %v570, 0.2
    %v587 = vmul.f32 %v571, 0.2
    %v588 = vmul.f32 %v572, 0.2
    %v589 = vmul.f32 %v573, 0.2
    %v590 = vmul.f32 %v574, 0.2
    %v591 = vmul.f32 %v575, 0.2
    %v592 = vmul.f32 %v576, 0.2
    %v593 = vmax.f32 %v561, %v577
    %v594 = vmax.f32 %v562, %v578
    %v595 = vmax.f32 %v563, %v579
    %v596 = vmax.f32 %v564, %v580
    %v597 = vmax.f32 %v565, %v581
    %v598 = vmax.f32 %v566, %v582
    %v599 = vmax.f32 %v567, %v583
    %v600 = vmax.f32 %v568, %v584
    %v601 = vmax.f32 %v569, %v585
    %v602 = vmax.f32 %v570, %v586
    %v603 = vmax.f32 %v571, %v587
    %v604 = vmax.f32 %v572, %v588
    %v605 = vmax.f32 %v573, %v589
    %v606 = vmax.f32 %v574, %v590
    %v607 = vmax.f32 %v575, %v591
    %v608 = vmax.f32 %v576, %v592
    %v609 = vld [vmem:[#allocation11] sm:$0xff]
    %v610 = vld [vmem:[#allocation11 + $0x8] sm:$0xff]
    %v611 = vld [vmem:[#allocation11 + $0x10] sm:$0xff]
    %v612 = vld [vmem:[#allocation11 + $0x18] sm:$0xff]
    %v613 = vld [vmem:[#allocation11 + $0x20] sm:$0xff]
    %v614 = vld [vmem:[#allocation11 + $0x28] sm:$0xff]
    %v615 = vld [vmem:[#allocation11 + $0x30] sm:$0xff]
    %v616 = vld [vmem:[#allocation11 + $0x38] sm:$0xff]
    %v617 = vld [vmem:[#allocation11 + $0x40] sm:$0xff]
    %v618 = vld [vmem:[#allocation11 + $0x48] sm:$0xff]
    %v619 = vld [vmem:[#allocation11 + $0x50] sm:$0xff]
    %v620 = vld [vmem:[#allocation11 + $0x58] sm:$0xff]
    %v621 = vld [vmem:[#allocation11 + $0x60] sm:$0xff]
    %v622 = vld [vmem:[#allocation11 + $0x68] sm:$0xff]
    %v623 = vld [vmem:[#allocation11 + $0x70] sm:$0xff]
    %v624 = vld [vmem:[#allocation11 + $0x78] sm:$0xff]
    %v625 = vld [vmem:[#allocation11 + $0x80] sm:$0xff]
    %v626 = vld [vmem:[#allocation11 + $0x88] sm:$0xff]
    %v627 = vld [vmem:[#allocation11 + $0x90] sm:$0xff]
    %v628 = vld [vmem:[#allocation11 + $0x98] sm:$0xff]
    %v629 = vld [vmem:[#allocation11 + $0xa0] sm:$0xff]
    %v630 = vld [vmem:[#allocation11 + $0xa8] sm:$0xff]
    %v631 = vld [vmem:[#allocation11 + $0xb0] sm:$0xff]
    %v632 = vld [vmem:[#allocation11 + $0xb8] sm:$0xff]
    %v633 = vld [vmem:[#allocation11 + $0xc0] sm:$0xff]
    %v634 = vld [vmem:[#allocation11 + $0xc8] sm:$0xff]
    %v635 = vld [vmem:[#allocation11 + $0xd0] sm:$0xff]
    %v636 = vld [vmem:[#allocation11 + $0xd8] sm:$0xff]
    %v637 = vld [vmem:[#allocation11 + $0xe0] sm:$0xff]
    %v638 = vld [vmem:[#allocation11 + $0xe8] sm:$0xff]
    %v639 = vld [vmem:[#allocation11 + $0xf0] sm:$0xff]
    %v640 = vld [vmem:[#allocation11 + $0xf8] sm:$0xff]
    %v641 = vld [vmem:[#allocation11 + $0x100] sm:$0xff]
    %v642 = vld [vmem:[#allocation11 + $0x108] sm:$0xff]
    %v643 = vld [vmem:[#allocation11 + $0x110] sm:$0xff]
    %v644 = vld [vmem:[#allocation11 + $0x118] sm:$0xff]
    %v645 = vld [vmem:[#allocation11 + $0x120] sm:$0xff]
    %v646 = vld [vmem:[#allocation11 + $0x128] sm:$0xff]
    %v647 = vld [vmem:[#allocation11 + $0x130] sm:$0xff]
    %v648 = vld [vmem:[#allocation11 + $0x138] sm:$0xff]
    %v649 = vld [vmem:[#allocation11 + $0x140] sm:$0xff]
    %v650 = vld [vmem:[#allocation11 + $0x148] sm:$0xff]
    %v651 = vld [vmem:[#allocation11 + $0x150] sm:$0xff]
    %v652 = vld [vmem:[#allocation11 + $0x158] sm:$0xff]
    %v653 = vld [vmem:[#allocation11 + $0x160] sm:$0xff]
    %v654 = vld [vmem:[#allocation11 + $0x168] sm:$0xff]
    %v655 = vld [vmem:[#allocation11 + $0x170] sm:$0xff]
    %v656 = vld [vmem:[#allocation11 + $0x178] sm:$0xff]
    %v657 = vld [vmem:[#allocation11 + $0x180] sm:$0xff]
    %v658 = vld [vmem:[#allocation11 + $0x188] sm:$0xff]
    %v659 = vld [vmem:[#allocation11 + $0x190] sm:$0xff]
    %v660 = vld [vmem:[#allocation11 + $0x198] sm:$0xff]
    %v661 = vld [vmem:[#allocation11 + $0x1a0] sm:$0xff]
    %v662 = vld [vmem:[#allocation11 + $0x1a8] sm:$0xff]
    %v663 = vld [vmem:[#allocation11 + $0x1b0] sm:$0xff]
    %v664 = vld [vmem:[#allocation11 + $0x1b8] sm:$0xff]
    %v665 = vld [vmem:[#allocation11 + $0x1c0] sm:$0xff]
    %v666 = vld [vmem:[#allocation11 + $0x1c8] sm:$0xff]
    %v667 = vld [vmem:[#allocation11 + $0x1d0] sm:$0xff]
    %v668 = vld [vmem:[#allocation11 + $0x1d8] sm:$0xff]
    %v669 = vld [vmem:[#allocation11 + $0x1e0] sm:$0xff]
    %v670 = vld [vmem:[#allocation11 + $0x1e8] sm:$0xff]
    %v671 = vld [vmem:[#allocation11 + $0x1f0] sm:$0xff]
    %v672 = vld [vmem:[#allocation11 + $0x1f8] sm:$0xff]
    %v673 = vld [vmem:[#allocation11 + $0x200] sm:$0xff]
    %v674 = vld [vmem:[#allocation11 + $0x208] sm:$0xff]
    %v675 = vld [vmem:[#allocation11 + $0x210] sm:$0xff]
    %v676 = vld [vmem:[#allocation11 + $0x218] sm:$0xff]
    %v677 = vld [vmem:[#allocation11 + $0x220] sm:$0xff]
    %v678 = vld [vmem:[#allocation11 + $0x228] sm:$0xff]
    %v679 = vld [vmem:[#allocation11 + $0x230] sm:$0xff]
    %v680 = vld [vmem:[#allocation11 + $0x238] sm:$0xff]
    %v681 = vld [vmem:[#allocation11 + $0x240] sm:$0xff]
    %v682 = vld [vmem:[#allocation11 + $0x248] sm:$0xff]
    %v683 = vld [vmem:[#allocation11 + $0x250] sm:$0xff]
    %v684 = vld [vmem:[#allocation11 + $0x258] sm:$0xff]
    %v685 = vld [vmem:[#allocation11 + $0x260] sm:$0xff]
    %v686 = vld [vmem:[#allocation11 + $0x268] sm:$0xff]
    %v687 = vld [vmem:[#allocation11 + $0x270] sm:$0xff]
    %v688 = vld [vmem:[#allocation11 + $0x278] sm:$0xff]
    %v689 = vld [vmem:[#allocation11 + $0x280] sm:$0xff]
    %v690 = vld [vmem:[#allocation11 + $0x288] sm:$0xff]
    %v691 = vld [vmem:[#allocation11 + $0x290] sm:$0xff]
    %v692 = vld [vmem:[#allocation11 + $0x298] sm:$0xff]
    %v693 = vld [vmem:[#allocation11 + $0x2a0] sm:$0xff]
    %v694 = vld [vmem:[#allocation11 + $0x2a8] sm:$0xff]
    %v695 = vld [vmem:[#allocation11 + $0x2b0] sm:$0xff]
    %v696 = vld [vmem:[#allocation11 + $0x2b8] sm:$0xff]
    %v697 = vld [vmem:[#allocation11 + $0x2c0] sm:$0xff]
    %v698 = vld [vmem:[#allocation11 + $0x2c8] sm:$0xff]
    %v699 = vld [vmem:[#allocation11 + $0x2d0] sm:$0xff]
    %v700 = vld [vmem:[#allocation11 + $0x2d8] sm:$0xff]
    %v701 = vld [vmem:[#allocation11 + $0x2e0] sm:$0xff]
    %v702 = vld [vmem:[#allocation11 + $0x2e8] sm:$0xff]
    %v703 = vld [vmem:[#allocation11 + $0x2f0] sm:$0xff]
    %v704 = vld [vmem:[#allocation11 + $0x2f8] sm:$0xff]
    %v705 = vld [vmem:[#allocation11 + $0x300] sm:$0xff]
    %v706 = vld [vmem:[#allocation11 + $0x308] sm:$0xff]
    %v707 = vld [vmem:[#allocation11 + $0x310] sm:$0xff]
    %v708 = vld [vmem:[#allocation11 + $0x318] sm:$0xff]
    %v709 = vld [vmem:[#allocation11 + $0x320] sm:$0xff]
    %v710 = vld [vmem:[#allocation11 + $0x328] sm:$0xff]
    %v711 = vld [vmem:[#allocation11 + $0x330] sm:$0xff]
    %v712 = vld [vmem:[#allocation11 + $0x338] sm:$0xff]
    %v713 = vld [vmem:[#allocation11 + $0x340] sm:$0xff]
    %v714 = vld [vmem:[#allocation11 + $0x348] sm:$0xff]
    %v715 = vld [vmem:[#allocation11 + $0x350] sm:$0xff]
    %v716 = vld [vmem:[#allocation11 + $0x358] sm:$0xff]
    %v717 = vld [vmem:[#allocation11 + $0x360] sm:$0xff]
    %v718 = vld [vmem:[#allocation11 + $0x368] sm:$0xff]
    %v719 = vld [vmem:[#allocation11 + $0x370] sm:$0xff]
    %v720 = vld [vmem:[#allocation11 + $0x378] sm:$0xff]
    %v721 = vld [vmem:[#allocation11 + $0x380] sm:$0xff]
    %v722 = vld [vmem:[#allocation11 + $0x388] sm:$0xff]
    %v723 = vld [vmem:[#allocation11 + $0x390] sm:$0xff]
    %v724 = vld [vmem:[#allocation11 + $0x398] sm:$0xff]
    %v725 = vld [vmem:[#allocation11 + $0x3a0] sm:$0xff]
    %v726 = vld [vmem:[#allocation11 + $0x3a8] sm:$0xff]
    %v727 = vld [vmem:[#allocation11 + $0x3b0] sm:$0xff]
    %v728 = vld [vmem:[#allocation11 + $0x3b8] sm:$0xff]
    %v729 = vld [vmem:[#allocation11 + $0x3c0] sm:$0xff]
    %v730 = vld [vmem:[#allocation11 + $0x3c8] sm:$0xff]
    %v731 = vld [vmem:[#allocation11 + $0x3d0] sm:$0xff]
    %v732 = vld [vmem:[#allocation11 + $0x3d8] sm:$0xff]
    %v733 = vld [vmem:[#allocation11 + $0x3e0] sm:$0xff]
    %v734 = vld [vmem:[#allocation11 + $0x3e8] sm:$0xff]
    %v735 = vld [vmem:[#allocation11 + $0x3f0] sm:$0xff]
    %v736 = vld [vmem:[#allocation11 + $0x3f8] sm:$0xff]
    %737 = vmatprep.subr.mxu0 %v610
    %738 = vmatpush1.msra.mxu0 %v609
    %739 = vmatprep.subr.mxu0 %v614
    %740 = vmatpush1.msra.mxu0 %v613
    %741 = vmatprep.subr.mxu0 %v618
    %742 = vmatpush1.msra.mxu0 %v617
    %743 = vmatprep.subr.mxu0 %v622
    %744 = vmatpush1.msra.mxu0 %v621
    %745 = vmatprep.subr.mxu0 %v626
    %746 = vmatpush1.msra.mxu0 %v625
    %747 = vmatprep.subr.mxu0 %v630
    %748 = vmatpush1.msra.mxu0 %v629
    %749 = vmatprep.subr.mxu0 %v634
    %750 = vmatpush1.msra.mxu0 %v633
    %751 = vmatprep.subr.mxu0 %v638
    %752 = vmatpush1.msra.mxu0 %v637
    %753 = vmatprep.subr.mxu0 %v642
    %754 = vmatpush1.msra.mxu0 %v641
    %755 = vmatprep.subr.mxu0 %v646
    %756 = vmatpush1.msra.mxu0 %v645
    %757 = vmatprep.subr.mxu0 %v650
    %758 = vmatpush1.msra.mxu0 %v649
    %759 = vmatprep.subr.mxu0 %v654
    %760 = vmatpush1.msra.mxu0 %v653
    %761 = vmatprep.subr.mxu0 %v658
    %762 = vmatpush1.msra.mxu0 %v657
    %763 = vmatprep.subr.mxu0 %v662
    %764 = vmatpush1.msra.mxu0 %v661
    %765 = vmatprep.subr.mxu0 %v666
    %766 = vmatpush1.msra.mxu0 %v665
    %767 = vmatprep.subr.mxu0 %v670
    %768 = vmatpush1.msra.mxu0 %v669
    %769 = vmatprep.subr.mxu0 %v674
    %770 = vmatpush1.msra.mxu0 %v673
    %771 = vmatprep.subr.mxu0 %v678
    %772 = vmatpush1.msra.mxu0 %v677
    %773 = vmatprep.subr.mxu0 %v682
    %774 = vmatpush1.msra.mxu0 %v681
    %775 = vmatprep.subr.mxu0 %v686
    %776 = vmatpush1.msra.mxu0 %v685
    %777 = vmatprep.subr.mxu0 %v690
    %778 = vmatpush1.msra.mxu0 %v689
    %779 = vmatprep.subr.mxu0 %v694
    %780 = vmatpush1.msra.mxu0 %v693
    %781 = vmatprep.subr.mxu0 %v698
    %782 = vmatpush1.msra.mxu0 %v697
    %783 = vmatprep.subr.mxu0 %v702
    %784 = vmatpush1.msra.mxu0 %v701
    %785 = vmatprep.subr.mxu0 %v706
    %786 = vmatpush1.msra.mxu0 %v705
    %787 = vmatprep.subr.mxu0 %v710
    %788 = vmatpush1.msra.mxu0 %v709
    %789 = vmatprep.subr.mxu0 %v714
    %790 = vmatpush1.msra.mxu0 %v713
    %791 = vmatprep.subr.mxu0 %v718
    %792 = vmatpush1.msra.mxu0 %v717
    %793 = vmatprep.subr.mxu0 %v722
    %794 = vmatpush1.msra.mxu0 %v721
    %795 = vmatprep.subr.mxu0 %v726
    %796 = vmatpush1.msra.mxu0 %v725
    %797 = vmatprep.subr.mxu0 %v730
    %798 = vmatpush1.msra.mxu0 %v729
    %799 = vmatprep.subr.mxu0 %v734
    %800 = vmatpush1.msra.mxu0 %v733
    %801 = vmatprep.mubr.f32.mxu0 %v594
    %802 = vmatmul.mubr.f32.gmra.mrb[0].mxu0 %v593
    %v803 = vpop.f32.mrb[0].mxu0
    %v804 = vadd.f32 0.0, %v803
    %v805 = vpop.f32.mrb[0].mxu0
    %v806 = vadd.f32 0.0, %v805
    %807 = vmatprep.mubr.f32.mxu0 %v596
    %808 = vmatmul.mubr.f32.gmra.mrb[0].mxu0 %v595
    %v809 = vpop.f32.mrb[0].mxu0
    %v810 = vadd.f32 0.0, %v809
    %v811 = vpop.f32.mrb[0].mxu0
    %v812 = vadd.f32 0.0, %v811
    %813 = vmatprep.mubr.f32.mxu0 %v598
    %814 = vmatmul.mubr.f32.gmra.mrb[0].mxu0 %v597
    %v815 = vpop.f32.mrb[0].mxu0
    %v816 = vadd.f32 0.0, %v815
    %v817 = vpop.f32.mrb[0].mxu0
    %v818 = vadd.f32 0.0, %v817
    %819 = vmatprep.mubr.f32.mxu0 %v600
    %820 = vmatmul.mubr.f32.gmra.mrb[0].mxu0 %v599
    %v821 = vpop.f32.mrb[0].mxu0
    %v822 = vadd.f32 0.0, %v821
    %v823 = vpop.f32.mrb[0].mxu0
    %v824 = vadd.f32 0.0, %v823
    %825 = vmatprep.mubr.f32.mxu0 %v602
    %826 = vmatmul.mubr.f32.gmra.mrb[0].mxu0 %v601
    %v827 = vpop.f32.mrb[0].mxu0
    %v828 = vadd.f32 0.0, %v827
    %v829 = vpop.f32.mrb[0].mxu0
    %v830 = vadd.f32 0.0, %v829
    %831 = vmatprep.mubr.f32.mxu0 %v604
    %832 = vmatmul.mubr.f32.gmra.mrb[0].mxu0 %v603
    %v833 = vpop.f32.mrb[0].mxu0
    %v834 = vadd.f32 0.0, %v833
    %v835 = vpop.f32.mrb[0].mxu0
    %v836 = vadd.f32 0.0, %v835
    %837 = vmatprep.mubr.f32.mxu0 %v606
    %838 = vmatmul.mubr.f32.gmra.mrb[0].mxu0 %v605
    %v839 = vpop.f32.mrb[0].mxu0
    %v840 = vadd.f32 0.0, %v839
    %v841 = vpop.f32.mrb[0].mxu0
    %v842 = vadd.f32 0.0, %v841
    %843 = vmatprep.mubr.f32.mxu0 %v608
    %844 = vmatmul.mubr.f32.gmra.mrb[0].mxu0 %v607
    %v845 = vpop.f32.mrb[0].mxu0
    %v846 = vadd.f32 0.0, %v845
    %v847 = vpop.f32.mrb[0].mxu0
    %v848 = vadd.f32 0.0, %v847
    %849 = vdwg.mxu0
    %850 = vmatprep.subr.mxu0 %v612
    %851 = vmatpush1.msra.mxu0 %v611
    %852 = vmatprep.subr.mxu0 %v616
    %853 = vmatpush1.msra.mxu0 %v615
    %854 = vmatprep.subr.mxu0 %v620
    %855 = vmatpush1.msra.mxu0 %v619
    %856 = vmatprep.subr.mxu0 %v624
    %857 = vmatpush1.msra.mxu0 %v623
    %858 = vmatprep.subr.mxu0 %v628
    %859 = vmatpush1.msra.mxu0 %v627
    %860 = vmatprep.subr.mxu0 %v632
    %861 = vmatpush1.msra.mxu0 %v631
    %862 = vmatprep.subr.mxu0 %v636
    %863 = vmatpush1.msra.mxu0 %v635
    %864 = vmatprep.subr.mxu0 %v640
    %865 = vmatpush1.msra.mxu0 %v639
    %866 = vmatprep.subr.mxu0 %v644
    %867 = vmatpush1.msra.mxu0 %v643
    %868 = vmatprep.subr.mxu0 %v648
    %869 = vmatpush1.msra.mxu0 %v647
    %870 = vmatprep.subr.mxu0 %v652
    %871 = vmatpush1.msra.mxu0 %v651
    %872 = vmatprep.subr.mxu0 %v656
    %873 = vmatpush1.msra.mxu0 %v655
    %874 = vmatprep.subr.mxu0 %v660
    %875 = vmatpush1.msra.mxu0 %v659
    %876 = vmatprep.subr.mxu0 %v664
    %877 = vmatpush1.msra.mxu0 %v663
    %878 = vmatprep.subr.mxu0 %v668
    %879 = vmatpush1.msra.mxu0 %v667
    %880 = vmatprep.subr.mxu0 %v672
    %881 = vmatpush1.msra.mxu0 %v671
    %882 = vmatprep.subr.mxu0 %v676
    %883 = vmatpush1.msra.mxu0 %v675
    %884 = vmatprep.subr.mxu0 %v680
    %885 = vmatpush1.msra.mxu0 %v679
    %886 = vmatprep.subr.mxu0 %v684
    %887 = vmatpush1.msra.mxu0 %v683
    %888 = vmatprep.subr.mxu0 %v688
    %889 = vmatpush1.msra.mxu0 %v687
    %890 = vmatprep.subr.mxu0 %v692
    %891 = vmatpush1.msra.mxu0 %v691
    %892 = vmatprep.subr.mxu0 %v696
    %893 = vmatpush1.msra.mxu0 %v695
    %894 = vmatprep.subr.mxu0 %v700
    %895 = vmatpush1.msra.mxu0 %v699
    %896 = vmatprep.subr.mxu0 %v704
    %897 = vmatpush1.msra.mxu0 %v703
    %898 = vmatprep.subr.mxu0 %v708
    %899 = vmatpush1.msra.mxu0 %v707
    %900 = vmatprep.subr.mxu0 %v712
    %901 = vmatpush1.msra.mxu0 %v711
    %902 = vmatprep.subr.mxu0 %v716
    %903 = vmatpush1.msra.mxu0 %v715
    %904 = vmatprep.subr.mxu0 %v720
    %905 = vmatpush1.msra.mxu0 %v719
    %906 = vmatprep.subr.mxu0 %v724
    %907 = vmatpush1.msra.mxu0 %v723
    %908 = vmatprep.subr.mxu0 %v728
    %909 = vmatpush1.msra.mxu0 %v727
    %910 = vmatprep.subr.mxu0 %v732
    %911 = vmatpush1.msra.mxu0 %v731
    %912 = vmatprep.subr.mxu0 %v736
    %913 = vmatpush1.msra.mxu0 %v735
    %914 = vmatprep.mubr.f32.mxu0 %v594
    %915 = vmatmul.mubr.f32.gmra.mrb[0].mxu0 %v593
    %v916 = vpop.f32.mrb[0].mxu0
    %v917 = vadd.f32 0.0, %v916
    %v918 = vpop.f32.mrb[0].mxu0
    %v919 = vadd.f32 0.0, %v918
    %920 = vmatprep.mubr.f32.mxu0 %v596
    %921 = vmatmul.mubr.f32.gmra.mrb[0].mxu0 %v595
    %v922 = vpop.f32.mrb[0].mxu0
    %v923 = vadd.f32 0.0, %v922
    %v924 = vpop.f32.mrb[0].mxu0
    %v925 = vadd.f32 0.0, %v924
    %926 = vmatprep.mubr.f32.mxu0 %v598
    %927 = vmatmul.mubr.f32.gmra.mrb[0].mxu0 %v597
    %v928 = vpop.f32.mrb[0].mxu0
    %v929 = vadd.f32 0.0, %v928
    %v930 = vpop.f32.mrb[0].mxu0
    %v931 = vadd.f32 0.0, %v930
    %932 = vmatprep.mubr.f32.mxu0 %v600
    %933 = vmatmul.mubr.f32.gmra.mrb[0].mxu0 %v599
    %v934 = vpop.f32.mrb[0].mxu0
    %v935 = vadd.f32 0.0, %v934
    %v936 = vpop.f32.mrb[0].mxu0
    %v937 = vadd.f32 0.0, %v936
    %938 = vmatprep.mubr.f32.mxu0 %v602
    %939 = vmatmul.mubr.f32.gmra.mrb[0].mxu0 %v601
    %v940 = vpop.f32.mrb[0].mxu0
    %v941 = vadd.f32 0.0, %v940
    %v942 = vpop.f32.mrb[0].mxu0
    %v943 = vadd.f32 0.0, %v942
    %944 = vmatprep.mubr.f32.mxu0 %v604
    %945 = vmatmul.mubr.f32.gmra.mrb[0].mxu0 %v603
    %v946 = vpop.f32.mrb[0].mxu0
    %v947 = vadd.f32 0.0, %v946
    %v948 = vpop.f32.mrb[0].mxu0
    %v949 = vadd.f32 0.0, %v948
    %950 = vmatprep.mubr.f32.mxu0 %v606
    %951 = vmatmul.mubr.f32.gmra.mrb[0].mxu0 %v605
    %v952 = vpop.f32.mrb[0].mxu0
    %v953 = vadd.f32 0.0, %v952
    %v954 = vpop.f32.mrb[0].mxu0
    %v955 = vadd.f32 0.0, %v954
    %956 = vmatprep.mubr.f32.mxu0 %v608
    %957 = vmatmul.mubr.f32.gmra.mrb[0].mxu0 %v607
    %v958 = vpop.f32.mrb[0].mxu0
    %v959 = vadd.f32 0.0, %v958
    %v960 = vpop.f32.mrb[0].mxu0
    %v961 = vadd.f32 0.0, %v960
    %962 = vdwg.mxu0
    %v963 = vld [vmem:[#allocation13] sm:$0xf]
    %v965 = vlaneseq
    %v966 = vshrl.u32 %v965, 7
    %v967 = vsub.s32 0, %v966
    %v968 = vrot.slane %v963, %v967
    %v969 = vlaneseq
    %v970 = vshrl.u32 %v969, 7
    %v971 = vsub.s32 1, %v970
    %v972 = vrot.slane %v963, %v971
    %v973 = vlaneseq
    %v974 = vshrl.u32 %v973, 7
    %v975 = vsub.s32 2, %v974
    %v976 = vrot.slane %v963, %v975
    %v977 = vlaneseq
    %v978 = vshrl.u32 %v977, 7
    %v979 = vsub.s32 3, %v978
    %v980 = vrot.slane %v963, %v979
    %v985 = vmul.f32 %v804, %v968
    %v986 = vmul.f32 %v806, %v972
    %v987 = vmul.f32 %v917, %v976
    %v988 = vmul.f32 %v919, %v980
    %v989 = vmul.f32 %v810, %v968
    %v990 = vmul.f32 %v812, %v972
    %v991 = vmul.f32 %v923, %v976
    %v992 = vmul.f32 %v925, %v980
    %v993 = vmul.f32 %v816, %v968
    %v994 = vmul.f32 %v818, %v972
    %v995 = vmul.f32 %v929, %v976
    %v996 = vmul.f32 %v931, %v980
    %v997 = vmul.f32 %v822, %v968
    %v998 = vmul.f32 %v824, %v972
    %v999 = vmul.f32 %v935, %v976
    %v1000 = vmul.f32 %v937, %v980
    %v1001 = vmul.f32 %v828, %v968
    %v1002 = vmul.f32 %v830, %v972
    %v1003 = vmul.f32 %v941, %v976
    %v1004 = vmul.f32 %v943, %v980
    %v1005 = vmul.f32 %v834, %v968
    %v1006 = vmul.f32 %v836, %v972
    %v1007 = vmul.f32 %v947, %v976
    %v1008 = vmul.f32 %v949, %v980
    %v1009 = vmul.f32 %v840, %v968
    %v1010 = vmul.f32 %v842, %v972
    %v1011 = vmul.f32 %v953, %v976
    %v1012 = vmul.f32 %v955, %v980
    %v1013 = vmul.f32 %v846, %v968
    %v1014 = vmul.f32 %v848, %v972
    %v1015 = vmul.f32 %v959, %v976
    %v1016 = vmul.f32 %v961, %v980
    %v1017 = vld [vmem:[#allocation14] sm:$0xf]
    %v1019 = vlaneseq
    %v1020 = vshrl.u32 %v1019, 7
    %v1021 = vsub.s32 0, %v1020
    %v1022 = vrot.slane %v1017, %v1021
    %v1023 = vlaneseq
    %v1024 = vshrl.u32 %v1023, 7
    %v1025 = vsub.s32 1, %v1024
    %v1026 = vrot.slane %v1017, %v1025
    %v1027 = vlaneseq
    %v1028 = vshrl.u32 %v1027, 7
    %v1029 = vsub.s32 2, %v1028
    %v1030 = vrot.slane %v1017, %v1029
    %v1031 = vlaneseq
    %v1032 = vshrl.u32 %v1031, 7
    %v1033 = vsub.s32 3, %v1032
    %v1034 = vrot.slane %v1017, %v1033
    %v1039 = vadd.f32 %v985, %v1022
    %v1040 = vadd.f32 %v986, %v1026
    %v1041 = vadd.f32 %v987, %v1030
    %v1042 = vadd.f32 %v988, %v1034
    %v1043 = vadd.f32 %v989, %v1022
    %v1044 = vadd.f32 %v990, %v1026
    %v1045 = vadd.f32 %v991, %v1030
    %v1046 = vadd.f32 %v992, %v1034
    %v1047 = vadd.f32 %v993, %v1022
    %v1048 = vadd.f32 %v994, %v1026
    %v1049 = vadd.f32 %v995, %v1030
    %v1050 = vadd.f32 %v996, %v1034
    %v1051 = vadd.f32 %v997, %v1022
    %v1052 = vadd.f32 %v998, %v1026
    %v1053 = vadd.f32 %v999, %v1030
    %v1054 = vadd.f32 %v1000, %v1034
    %v1055 = vadd.f32 %v1001, %v1022
    %v1056 = vadd.f32 %v1002, %v1026
    %v1057 = vadd.f32 %v1003, %v1030
    %v1058 = vadd.f32 %v1004, %v1034
    %v1059 = vadd.f32 %v1005, %v1022
    %v1060 = vadd.f32 %v1006, %v1026
    %v1061 = vadd.f32 %v1007, %v1030
    %v1062 = vadd.f32 %v1008, %v1034
    %v1063 = vadd.f32 %v1009, %v1022
    %v1064 = vadd.f32 %v1010, %v1026
    %v1065 = vadd.f32 %v1011, %v1030
    %v1066 = vadd.f32 %v1012, %v1034
    %v1067 = vadd.f32 %v1013, %v1022
    %v1068 = vadd.f32 %v1014, %v1026
    %v1069 = vadd.f32 %v1015, %v1030
    %v1070 = vadd.f32 %v1016, %v1034
    %v1071 = vmul.f32 %v1039, 0.2
    %v1072 = vmul.f32 %v1040, 0.2
    %v1073 = vmul.f32 %v1041, 0.2
    %v1074 = vmul.f32 %v1042, 0.2
    %v1075 = vmul.f32 %v1043, 0.2
    %v1076 = vmul.f32 %v1044, 0.2
    %v1077 = vmul.f32 %v1045, 0.2
    %v1078 = vmul.f32 %v1046, 0.2
    %v1079 = vmul.f32 %v1047, 0.2
    %v1080 = vmul.f32 %v1048, 0.2
    %v1081 = vmul.f32 %v1049, 0.2
    %v1082 = vmul.f32 %v1050, 0.2
    %v1083 = vmul.f32 %v1051, 0.2
    %v1084 = vmul.f32 %v1052, 0.2
    %v1085 = vmul.f32 %v1053, 0.2
    %v1086 = vmul.f32 %v1054, 0.2
    %v1087 = vmul.f32 %v1055, 0.2
    %v1088 = vmul.f32 %v1056, 0.2
    %v1089 = vmul.f32 %v1057, 0.2
    %v1090 = vmul.f32 %v1058, 0.2
    %v1091 = vmul.f32 %v1059, 0.2
    %v1092 = vmul.f32 %v1060, 0.2
    %v1093 = vmul.f32 %v1061, 0.2
    %v1094 = vmul.f32 %v1062, 0.2
    %v1095 = vmul.f32 %v1063, 0.2
    %v1096 = vmul.f32 %v1064, 0.2
    %v1097 = vmul.f32 %v1065, 0.2
    %v1098 = vmul.f32 %v1066, 0.2
    %v1099 = vmul.f32 %v1067, 0.2
    %v1100 = vmul.f32 %v1068, 0.2
    %v1101 = vmul.f32 %v1069, 0.2
    %v1102 = vmul.f32 %v1070, 0.2
    %v1103 = vmax.f32 %v1039, %v1071
    %v1104 = vmax.f32 %v1040, %v1072
    %v1105 = vmax.f32 %v1041, %v1073
    %v1106 = vmax.f32 %v1042, %v1074
    %v1107 = vmax.f32 %v1043, %v1075
    %v1108 = vmax.f32 %v1044, %v1076
    %v1109 = vmax.f32 %v1045, %v1077
    %v1110 = vmax.f32 %v1046, %v1078
    %v1111 = vmax.f32 %v1047, %v1079
    %v1112 = vmax.f32 %v1048, %v1080
    %v1113 = vmax.f32 %v1049, %v1081
    %v1114 = vmax.f32 %v1050, %v1082
    %v1115 = vmax.f32 %v1051, %v1083
    %v1116 = vmax.f32 %v1052, %v1084
    %v1117 = vmax.f32 %v1053, %v1085
    %v1118 = vmax.f32 %v1054, %v1086
    %v1119 = vmax.f32 %v1055, %v1087
    %v1120 = vmax.f32 %v1056, %v1088
    %v1121 = vmax.f32 %v1057, %v1089
    %v1122 = vmax.f32 %v1058, %v1090
    %v1123 = vmax.f32 %v1059, %v1091
    %v1124 = vmax.f32 %v1060, %v1092
    %v1125 = vmax.f32 %v1061, %v1093
    %v1126 = vmax.f32 %v1062, %v1094
    %v1127 = vmax.f32 %v1063, %v1095
    %v1128 = vmax.f32 %v1064, %v1096
    %v1129 = vmax.f32 %v1065, %v1097
    %v1130 = vmax.f32 %v1066, %v1098
    %v1131 = vmax.f32 %v1067, %v1099
    %v1132 = vmax.f32 %v1068, %v1100
    %v1133 = vmax.f32 %v1069, %v1101
    %v1134 = vmax.f32 %v1070, %v1102
    %v1135 = vld [vmem:[#allocation16] sm:$0xff]
    %v1136 = vld [vmem:[#allocation16 + $0x8] sm:$0xff]
    %v1137 = vld [vmem:[#allocation16 + $0x10] sm:$0xff]
    %v1138 = vld [vmem:[#allocation16 + $0x18] sm:$0xff]
    %v1139 = vld [vmem:[#allocation16 + $0x20] sm:$0xff]
    %v1140 = vld [vmem:[#allocation16 + $0x28] sm:$0xff]
    %v1141 = vld [vmem:[#allocation16 + $0x30] sm:$0xff]
    %v1142 = vld [vmem:[#allocation16 + $0x38] sm:$0xff]
    %v1143 = vld [vmem:[#allocation16 + $0x40] sm:$0xff]
    %v1144 = vld [vmem:[#allocation16 + $0x48] sm:$0xff]
    %v1145 = vld [vmem:[#allocation16 + $0x50] sm:$0xff]
    %v1146 = vld [vmem:[#allocation16 + $0x58] sm:$0xff]
    %v1147 = vld [vmem:[#allocation16 + $0x60] sm:$0xff]
    %v1148 = vld [vmem:[#allocation16 + $0x68] sm:$0xff]
    %v1149 = vld [vmem:[#allocation16 + $0x70] sm:$0xff]
    %v1150 = vld [vmem:[#allocation16 + $0x78] sm:$0xff]
    %v1151 = vld [vmem:[#allocation16 + $0x80] sm:$0xff]
    %v1152 = vld [vmem:[#allocation16 + $0x88] sm:$0xff]
    %v1153 = vld [vmem:[#allocation16 + $0x90] sm:$0xff]
    %v1154 = vld [vmem:[#allocation16 + $0x98] sm:$0xff]
    %v1155 = vld [vmem:[#allocation16 + $0xa0] sm:$0xff]
    %v1156 = vld [vmem:[#allocation16 + $0xa8] sm:$0xff]
    %v1157 = vld [vmem:[#allocation16 + $0xb0] sm:$0xff]
    %v1158 = vld [vmem:[#allocation16 + $0xb8] sm:$0xff]
    %v1159 = vld [vmem:[#allocation16 + $0xc0] sm:$0xff]
    %v1160 = vld [vmem:[#allocation16 + $0xc8] sm:$0xff]
    %v1161 = vld [vmem:[#allocation16 + $0xd0] sm:$0xff]
    %v1162 = vld [vmem:[#allocation16 + $0xd8] sm:$0xff]
    %v1163 = vld [vmem:[#allocation16 + $0xe0] sm:$0xff]
    %v1164 = vld [vmem:[#allocation16 + $0xe8] sm:$0xff]
    %v1165 = vld [vmem:[#allocation16 + $0xf0] sm:$0xff]
    %v1166 = vld [vmem:[#allocation16 + $0xf8] sm:$0xff]
    %v1167 = vld [vmem:[#allocation16 + $0x100] sm:$0xff]
    %v1168 = vld [vmem:[#allocation16 + $0x108] sm:$0xff]
    %v1169 = vld [vmem:[#allocation16 + $0x110] sm:$0xff]
    %v1170 = vld [vmem:[#allocation16 + $0x118] sm:$0xff]
    %v1171 = vld [vmem:[#allocation16 + $0x120] sm:$0xff]
    %v1172 = vld [vmem:[#allocation16 + $0x128] sm:$0xff]
    %v1173 = vld [vmem:[#allocation16 + $0x130] sm:$0xff]
    %v1174 = vld [vmem:[#allocation16 + $0x138] sm:$0xff]
    %v1175 = vld [vmem:[#allocation16 + $0x140] sm:$0xff]
    %v1176 = vld [vmem:[#allocation16 + $0x148] sm:$0xff]
    %v1177 = vld [vmem:[#allocation16 + $0x150] sm:$0xff]
    %v1178 = vld [vmem:[#allocation16 + $0x158] sm:$0xff]
    %v1179 = vld [vmem:[#allocation16 + $0x160] sm:$0xff]
    %v1180 = vld [vmem:[#allocation16 + $0x168] sm:$0xff]
    %v1181 = vld [vmem:[#allocation16 + $0x170] sm:$0xff]
    %v1182 = vld [vmem:[#allocation16 + $0x178] sm:$0xff]
    %v1183 = vld [vmem:[#allocation16 + $0x180] sm:$0xff]
    %v1184 = vld [vmem:[#allocation16 + $0x188] sm:$0xff]
    %v1185 = vld [vmem:[#allocation16 + $0x190] sm:$0xff]
    %v1186 = vld [vmem:[#allocation16 + $0x198] sm:$0xff]
    %v1187 = vld [vmem:[#allocation16 + $0x1a0] sm:$0xff]
    %v1188 = vld [vmem:[#allocation16 + $0x1a8] sm:$0xff]
    %v1189 = vld [vmem:[#allocation16 + $0x1b0] sm:$0xff]
    %v1190 = vld [vmem:[#allocation16 + $0x1b8] sm:$0xff]
    %v1191 = vld [vmem:[#allocation16 + $0x1c0] sm:$0xff]
    %v1192 = vld [vmem:[#allocation16 + $0x1c8] sm:$0xff]
    %v1193 = vld [vmem:[#allocation16 + $0x1d0] sm:$0xff]
    %v1194 = vld [vmem:[#allocation16 + $0x1d8] sm:$0xff]
    %v1195 = vld [vmem:[#allocation16 + $0x1e0] sm:$0xff]
    %v1196 = vld [vmem:[#allocation16 + $0x1e8] sm:$0xff]
    %v1197 = vld [vmem:[#allocation16 + $0x1f0] sm:$0xff]
    %v1198 = vld [vmem:[#allocation16 + $0x1f8] sm:$0xff]
    %v1199 = vld [vmem:[#allocation16 + $0x200] sm:$0xff]
    %v1200 = vld [vmem:[#allocation16 + $0x208] sm:$0xff]
    %v1201 = vld [vmem:[#allocation16 + $0x210] sm:$0xff]
    %v1202 = vld [vmem:[#allocation16 + $0x218] sm:$0xff]
    %v1203 = vld [vmem:[#allocation16 + $0x220] sm:$0xff]
    %v1204 = vld [vmem:[#allocation16 + $0x228] sm:$0xff]
    %v1205 = vld [vmem:[#allocation16 + $0x230] sm:$0xff]
    %v1206 = vld [vmem:[#allocation16 + $0x238] sm:$0xff]
    %v1207 = vld [vmem:[#allocation16 + $0x240] sm:$0xff]
    %v1208 = vld [vmem:[#allocation16 + $0x248] sm:$0xff]
    %v1209 = vld [vmem:[#allocation16 + $0x250] sm:$0xff]
    %v1210 = vld [vmem:[#allocation16 + $0x258] sm:$0xff]
    %v1211 = vld [vmem:[#allocation16 + $0x260] sm:$0xff]
    %v1212 = vld [vmem:[#allocation16 + $0x268] sm:$0xff]
    %v1213 = vld [vmem:[#allocation16 + $0x270] sm:$0xff]
    %v1214 = vld [vmem:[#allocation16 + $0x278] sm:$0xff]
    %v1215 = vld [vmem:[#allocation16 + $0x280] sm:$0xff]
    %v1216 = vld [vmem:[#allocation16 + $0x288] sm:$0xff]
    %v1217 = vld [vmem:[#allocation16 + $0x290] sm:$0xff]
    %v1218 = vld [vmem:[#allocation16 + $0x298] sm:$0xff]
    %v1219 = vld [vmem:[#allocation16 + $0x2a0] sm:$0xff]
    %v1220 = vld [vmem:[#allocation16 + $0x2a8] sm:$0xff]
    %v1221 = vld [vmem:[#allocation16 + $0x2b0] sm:$0xff]
    %v1222 = vld [vmem:[#allocation16 + $0x2b8] sm:$0xff]
    %v1223 = vld [vmem:[#allocation16 + $0x2c0] sm:$0xff]
    %v1224 = vld [vmem:[#allocation16 + $0x2c8] sm:$0xff]
    %v1225 = vld [vmem:[#allocation16 + $0x2d0] sm:$0xff]
    %v1226 = vld [vmem:[#allocation16 + $0x2d8] sm:$0xff]
    %v1227 = vld [vmem:[#allocation16 + $0x2e0] sm:$0xff]
    %v1228 = vld [vmem:[#allocation16 + $0x2e8] sm:$0xff]
    %v1229 = vld [vmem:[#allocation16 + $0x2f0] sm:$0xff]
    %v1230 = vld [vmem:[#allocation16 + $0x2f8] sm:$0xff]
    %v1231 = vld [vmem:[#allocation16 + $0x300] sm:$0xff]
    %v1232 = vld [vmem:[#allocation16 + $0x308] sm:$0xff]
    %v1233 = vld [vmem:[#allocation16 + $0x310] sm:$0xff]
    %v1234 = vld [vmem:[#allocation16 + $0x318] sm:$0xff]
    %v1235 = vld [vmem:[#allocation16 + $0x320] sm:$0xff]
    %v1236 = vld [vmem:[#allocation16 + $0x328] sm:$0xff]
    %v1237 = vld [vmem:[#allocation16 + $0x330] sm:$0xff]
    %v1238 = vld [vmem:[#allocation16 + $0x338] sm:$0xff]
    %v1239 = vld [vmem:[#allocation16 + $0x340] sm:$0xff]
    %v1240 = vld [vmem:[#allocation16 + $0x348] sm:$0xff]
    %v1241 = vld [vmem:[#allocation16 + $0x350] sm:$0xff]
    %v1242 = vld [vmem:[#allocation16 + $0x358] sm:$0xff]
    %v1243 = vld [vmem:[#allocation16 + $0x360] sm:$0xff]
    %v1244 = vld [vmem:[#allocation16 + $0x368] sm:$0xff]
    %v1245 = vld [vmem:[#allocation16 + $0x370] sm:$0xff]
    %v1246 = vld [vmem:[#allocation16 + $0x378] sm:$0xff]
    %v1247 = vld [vmem:[#allocation16 + $0x380] sm:$0xff]
    %v1248 = vld [vmem:[#allocation16 + $0x388] sm:$0xff]
    %v1249 = vld [vmem:[#allocation16 + $0x390] sm:$0xff]
    %v1250 = vld [vmem:[#allocation16 + $0x398] sm:$0xff]
    %v1251 = vld [vmem:[#allocation16 + $0x3a0] sm:$0xff]
    %v1252 = vld [vmem:[#allocation16 + $0x3a8] sm:$0xff]
    %v1253 = vld [vmem:[#allocation16 + $0x3b0] sm:$0xff]
    %v1254 = vld [vmem:[#allocation16 + $0x3b8] sm:$0xff]
    %v1255 = vld [vmem:[#allocation16 + $0x3c0] sm:$0xff]
    %v1256 = vld [vmem:[#allocation16 + $0x3c8] sm:$0xff]
    %v1257 = vld [vmem:[#allocation16 + $0x3d0] sm:$0xff]
    %v1258 = vld [vmem:[#allocation16 + $0x3d8] sm:$0xff]
    %v1259 = vld [vmem:[#allocation16 + $0x3e0] sm:$0xff]
    %v1260 = vld [vmem:[#allocation16 + $0x3e8] sm:$0xff]
    %v1261 = vld [vmem:[#allocation16 + $0x3f0] sm:$0xff]
    %v1262 = vld [vmem:[#allocation16 + $0x3f8] sm:$0xff]
    %v1263 = vld [vmem:[#allocation16 + $0x400] sm:$0xff]
    %v1264 = vld [vmem:[#allocation16 + $0x408] sm:$0xff]
    %v1265 = vld [vmem:[#allocation16 + $0x410] sm:$0xff]
    %v1266 = vld [vmem:[#allocation16 + $0x418] sm:$0xff]
    %v1267 = vld [vmem:[#allocation16 + $0x420] sm:$0xff]
    %v1268 = vld [vmem:[#allocation16 + $0x428] sm:$0xff]
    %v1269 = vld [vmem:[#allocation16 + $0x430] sm:$0xff]
    %v1270 = vld [vmem:[#allocation16 + $0x438] sm:$0xff]
    %v1271 = vld [vmem:[#allocation16 + $0x440] sm:$0xff]
    %v1272 = vld [vmem:[#allocation16 + $0x448] sm:$0xff]
    %v1273 = vld [vmem:[#allocation16 + $0x450] sm:$0xff]
    %v1274 = vld [vmem:[#allocation16 + $0x458] sm:$0xff]
    %v1275 = vld [vmem:[#allocation16 + $0x460] sm:$0xff]
    %v1276 = vld [vmem:[#allocation16 + $0x468] sm:$0xff]
    %v1277 = vld [vmem:[#allocation16 + $0x470] sm:$0xff]
    %v1278 = vld [vmem:[#allocation16 + $0x478] sm:$0xff]
    %v1279 = vld [vmem:[#allocation16 + $0x480] sm:$0xff]
    %v1280 = vld [vmem:[#allocation16 + $0x488] sm:$0xff]
    %v1281 = vld [vmem:[#allocation16 + $0x490] sm:$0xff]
    %v1282 = vld [vmem:[#allocation16 + $0x498] sm:$0xff]
    %v1283 = vld [vmem:[#allocation16 + $0x4a0] sm:$0xff]
    %v1284 = vld [vmem:[#allocation16 + $0x4a8] sm:$0xff]
    %v1285 = vld [vmem:[#allocation16 + $0x4b0] sm:$0xff]
    %v1286 = vld [vmem:[#allocation16 + $0x4b8] sm:$0xff]
    %v1287 = vld [vmem:[#allocation16 + $0x4c0] sm:$0xff]
    %v1288 = vld [vmem:[#allocation16 + $0x4c8] sm:$0xff]
    %v1289 = vld [vmem:[#allocation16 + $0x4d0] sm:$0xff]
    %v1290 = vld [vmem:[#allocation16 + $0x4d8] sm:$0xff]
    %v1291 = vld [vmem:[#allocation16 + $0x4e0] sm:$0xff]
    %v1292 = vld [vmem:[#allocation16 + $0x4e8] sm:$0xff]
    %v1293 = vld [vmem:[#allocation16 + $0x4f0] sm:$0xff]
    %v1294 = vld [vmem:[#allocation16 + $0x4f8] sm:$0xff]
    %v1295 = vld [vmem:[#allocation16 + $0x500] sm:$0xff]
    %v1296 = vld [vmem:[#allocation16 + $0x508] sm:$0xff]
    %v1297 = vld [vmem:[#allocation16 + $0x510] sm:$0xff]
    %v1298 = vld [vmem:[#allocation16 + $0x518] sm:$0xff]
    %v1299 = vld [vmem:[#allocation16 + $0x520] sm:$0xff]
    %v1300 = vld [vmem:[#allocation16 + $0x528] sm:$0xff]
    %v1301 = vld [vmem:[#allocation16 + $0x530] sm:$0xff]
    %v1302 = vld [vmem:[#allocation16 + $0x538] sm:$0xff]
    %v1303 = vld [vmem:[#allocation16 + $0x540] sm:$0xff]
    %v1304 = vld [vmem:[#allocation16 + $0x548] sm:$0xff]
    %v1305 = vld [vmem:[#allocation16 + $0x550] sm:$0xff]
    %v1306 = vld [vmem:[#allocation16 + $0x558] sm:$0xff]
    %v1307 = vld [vmem:[#allocation16 + $0x560] sm:$0xff]
    %v1308 = vld [vmem:[#allocation16 + $0x568] sm:$0xff]
    %v1309 = vld [vmem:[#allocation16 + $0x570] sm:$0xff]
    %v1310 = vld [vmem:[#allocation16 + $0x578] sm:$0xff]
    %v1311 = vld [vmem:[#allocation16 + $0x580] sm:$0xff]
    %v1312 = vld [vmem:[#allocation16 + $0x588] sm:$0xff]
    %v1313 = vld [vmem:[#allocation16 + $0x590] sm:$0xff]
    %v1314 = vld [vmem:[#allocation16 + $0x598] sm:$0xff]
    %v1315 = vld [vmem:[#allocation16 + $0x5a0] sm:$0xff]
    %v1316 = vld [vmem:[#allocation16 + $0x5a8] sm:$0xff]
    %v1317 = vld [vmem:[#allocation16 + $0x5b0] sm:$0xff]
    %v1318 = vld [vmem:[#allocation16 + $0x5b8] sm:$0xff]
    %v1319 = vld [vmem:[#allocation16 + $0x5c0] sm:$0xff]
    %v1320 = vld [vmem:[#allocation16 + $0x5c8] sm:$0xff]
    %v1321 = vld [vmem:[#allocation16 + $0x5d0] sm:$0xff]
    %v1322 = vld [vmem:[#allocation16 + $0x5d8] sm:$0xff]
    %v1323 = vld [vmem:[#allocation16 + $0x5e0] sm:$0xff]
    %v1324 = vld [vmem:[#allocation16 + $0x5e8] sm:$0xff]
    %v1325 = vld [vmem:[#allocation16 + $0x5f0] sm:$0xff]
    %v1326 = vld [vmem:[#allocation16 + $0x5f8] sm:$0xff]
    %v1327 = vld [vmem:[#allocation16 + $0x600] sm:$0xff]
    %v1328 = vld [vmem:[#allocation16 + $0x608] sm:$0xff]
    %v1329 = vld [vmem:[#allocation16 + $0x610] sm:$0xff]
    %v1330 = vld [vmem:[#allocation16 + $0x618] sm:$0xff]
    %v1331 = vld [vmem:[#allocation16 + $0x620] sm:$0xff]
    %v1332 = vld [vmem:[#allocation16 + $0x628] sm:$0xff]
    %v1333 = vld [vmem:[#allocation16 + $0x630] sm:$0xff]
    %v1334 = vld [vmem:[#allocation16 + $0x638] sm:$0xff]
    %v1335 = vld [vmem:[#allocation16 + $0x640] sm:$0xff]
    %v1336 = vld [vmem:[#allocation16 + $0x648] sm:$0xff]
    %v1337 = vld [vmem:[#allocation16 + $0x650] sm:$0xff]
    %v1338 = vld [vmem:[#allocation16 + $0x658] sm:$0xff]
    %v1339 = vld [vmem:[#allocation16 + $0x660] sm:$0xff]
    %v1340 = vld [vmem:[#allocation16 + $0x668] sm:$0xff]
    %v1341 = vld [vmem:[#allocation16 + $0x670] sm:$0xff]
    %v1342 = vld [vmem:[#allocation16 + $0x678] sm:$0xff]
    %v1343 = vld [vmem:[#allocation16 + $0x680] sm:$0xff]
    %v1344 = vld [vmem:[#allocation16 + $0x688] sm:$0xff]
    %v1345 = vld [vmem:[#allocation16 + $0x690] sm:$0xff]
    %v1346 = vld [vmem:[#allocation16 + $0x698] sm:$0xff]
    %v1347 = vld [vmem:[#allocation16 + $0x6a0] sm:$0xff]
    %v1348 = vld [vmem:[#allocation16 + $0x6a8] sm:$0xff]
    %v1349 = vld [vmem:[#allocation16 + $0x6b0] sm:$0xff]
    %v1350 = vld [vmem:[#allocation16 + $0x6b8] sm:$0xff]
    %v1351 = vld [vmem:[#allocation16 + $0x6c0] sm:$0xff]
    %v1352 = vld [vmem:[#allocation16 + $0x6c8] sm:$0xff]
    %v1353 = vld [vmem:[#allocation16 + $0x6d0] sm:$0xff]
    %v1354 = vld [vmem:[#allocation16 + $0x6d8] sm:$0xff]
    %v1355 = vld [vmem:[#allocation16 + $0x6e0] sm:$0xff]
    %v1356 = vld [vmem:[#allocation16 + $0x6e8] sm:$0xff]
    %v1357 = vld [vmem:[#allocation16 + $0x6f0] sm:$0xff]
    %v1358 = vld [vmem:[#allocation16 + $0x6f8] sm:$0xff]
    %v1359 = vld [vmem:[#allocation16 + $0x700] sm:$0xff]
    %v1360 = vld [vmem:[#allocation16 + $0x708] sm:$0xff]
    %v1361 = vld [vmem:[#allocation16 + $0x710] sm:$0xff]
    %v1362 = vld [vmem:[#allocation16 + $0x718] sm:$0xff]
    %v1363 = vld [vmem:[#allocation16 + $0x720] sm:$0xff]
    %v1364 = vld [vmem:[#allocation16 + $0x728] sm:$0xff]
    %v1365 = vld [vmem:[#allocation16 + $0x730] sm:$0xff]
    %v1366 = vld [vmem:[#allocation16 + $0x738] sm:$0xff]
    %v1367 = vld [vmem:[#allocation16 + $0x740] sm:$0xff]
    %v1368 = vld [vmem:[#allocation16 + $0x748] sm:$0xff]
    %v1369 = vld [vmem:[#allocation16 + $0x750] sm:$0xff]
    %v1370 = vld [vmem:[#allocation16 + $0x758] sm:$0xff]
    %v1371 = vld [vmem:[#allocation16 + $0x760] sm:$0xff]
    %v1372 = vld [vmem:[#allocation16 + $0x768] sm:$0xff]
    %v1373 = vld [vmem:[#allocation16 + $0x770] sm:$0xff]
    %v1374 = vld [vmem:[#allocation16 + $0x778] sm:$0xff]
    %v1375 = vld [vmem:[#allocation16 + $0x780] sm:$0xff]
    %v1376 = vld [vmem:[#allocation16 + $0x788] sm:$0xff]
    %v1377 = vld [vmem:[#allocation16 + $0x790] sm:$0xff]
    %v1378 = vld [vmem:[#allocation16 + $0x798] sm:$0xff]
    %v1379 = vld [vmem:[#allocation16 + $0x7a0] sm:$0xff]
    %v1380 = vld [vmem:[#allocation16 + $0x7a8] sm:$0xff]
    %v1381 = vld [vmem:[#allocation16 + $0x7b0] sm:$0xff]
    %v1382 = vld [vmem:[#allocation16 + $0x7b8] sm:$0xff]
    %v1383 = vld [vmem:[#allocation16 + $0x7c0] sm:$0xff]
    %v1384 = vld [vmem:[#allocation16 + $0x7c8] sm:$0xff]
    %v1385 = vld [vmem:[#allocation16 + $0x7d0] sm:$0xff]
    %v1386 = vld [vmem:[#allocation16 + $0x7d8] sm:$0xff]
    %v1387 = vld [vmem:[#allocation16 + $0x7e0] sm:$0xff]
    %v1388 = vld [vmem:[#allocation16 + $0x7e8] sm:$0xff]
    %v1389 = vld [vmem:[#allocation16 + $0x7f0] sm:$0xff]
    %v1390 = vld [vmem:[#allocation16 + $0x7f8] sm:$0xff]
    %v1391 = vld [vmem:[#allocation16 + $0x800] sm:$0xff]
    %v1392 = vld [vmem:[#allocation16 + $0x808] sm:$0xff]
    %v1393 = vld [vmem:[#allocation16 + $0x810] sm:$0xff]
    %v1394 = vld [vmem:[#allocation16 + $0x818] sm:$0xff]
    %v1395 = vld [vmem:[#allocation16 + $0x820] sm:$0xff]
    %v1396 = vld [vmem:[#allocation16 + $0x828] sm:$0xff]
    %v1397 = vld [vmem:[#allocation16 + $0x830] sm:$0xff]
    %v1398 = vld [vmem:[#allocation16 + $0x838] sm:$0xff]
    %v1399 = vld [vmem:[#allocation16 + $0x840] sm:$0xff]
    %v1400 = vld [vmem:[#allocation16 + $0x848] sm:$0xff]
    %v1401 = vld [vmem:[#allocation16 + $0x850] sm:$0xff]
    %v1402 = vld [vmem:[#allocation16 + $0x858] sm:$0xff]
    %v1403 = vld [vmem:[#allocation16 + $0x860] sm:$0xff]
    %v1404 = vld [vmem:[#allocation16 + $0x868] sm:$0xff]
    %v1405 = vld [vmem:[#allocation16 + $0x870] sm:$0xff]
    %v1406 = vld [vmem:[#allocation16 + $0x878] sm:$0xff]
    %v1407 = vld [vmem:[#allocation16 + $0x880] sm:$0xff]
    %v1408 = vld [vmem:[#allocation16 + $0x888] sm:$0xff]
    %v1409 = vld [vmem:[#allocation16 + $0x890] sm:$0xff]
    %v1410 = vld [vmem:[#allocation16 + $0x898] sm:$0xff]
    %v1411 = vld [vmem:[#allocation16 + $0x8a0] sm:$0xff]
    %v1412 = vld [vmem:[#allocation16 + $0x8a8] sm:$0xff]
    %v1413 = vld [vmem:[#allocation16 + $0x8b0] sm:$0xff]
    %v1414 = vld [vmem:[#allocation16 + $0x8b8] sm:$0xff]
    %v1415 = vld [vmem:[#allocation16 + $0x8c0] sm:$0xff]
    %v1416 = vld [vmem:[#allocation16 + $0x8c8] sm:$0xff]
    %v1417 = vld [vmem:[#allocation16 + $0x8d0] sm:$0xff]
    %v1418 = vld [vmem:[#allocation16 + $0x8d8] sm:$0xff]
    %v1419 = vld [vmem:[#allocation16 + $0x8e0] sm:$0xff]
    %v1420 = vld [vmem:[#allocation16 + $0x8e8] sm:$0xff]
    %v1421 = vld [vmem:[#allocation16 + $0x8f0] sm:$0xff]
    %v1422 = vld [vmem:[#allocation16 + $0x8f8] sm:$0xff]
    %v1423 = vld [vmem:[#allocation16 + $0x900] sm:$0xff]
    %v1424 = vld [vmem:[#allocation16 + $0x908] sm:$0xff]
    %v1425 = vld [vmem:[#allocation16 + $0x910] sm:$0xff]
    %v1426 = vld [vmem:[#allocation16 + $0x918] sm:$0xff]
    %v1427 = vld [vmem:[#allocation16 + $0x920] sm:$0xff]
    %v1428 = vld [vmem:[#allocation16 + $0x928] sm:$0xff]
    %v1429 = vld [vmem:[#allocation16 + $0x930] sm:$0xff]
    %v1430 = vld [vmem:[#allocation16 + $0x938] sm:$0xff]
    %v1431 = vld [vmem:[#allocation16 + $0x940] sm:$0xff]
    %v1432 = vld [vmem:[#allocation16 + $0x948] sm:$0xff]
    %v1433 = vld [vmem:[#allocation16 + $0x950] sm:$0xff]
    %v1434 = vld [vmem:[#allocation16 + $0x958] sm:$0xff]
    %v1435 = vld [vmem:[#allocation16 + $0x960] sm:$0xff]
    %v1436 = vld [vmem:[#allocation16 + $0x968] sm:$0xff]
    %v1437 = vld [vmem:[#allocation16 + $0x970] sm:$0xff]
    %v1438 = vld [vmem:[#allocation16 + $0x978] sm:$0xff]
    %v1439 = vld [vmem:[#allocation16 + $0x980] sm:$0xff]
    %v1440 = vld [vmem:[#allocation16 + $0x988] sm:$0xff]
    %v1441 = vld [vmem:[#allocation16 + $0x990] sm:$0xff]
    %v1442 = vld [vmem:[#allocation16 + $0x998] sm:$0xff]
    %v1443 = vld [vmem:[#allocation16 + $0x9a0] sm:$0xff]
    %v1444 = vld [vmem:[#allocation16 + $0x9a8] sm:$0xff]
    %v1445 = vld [vmem:[#allocation16 + $0x9b0] sm:$0xff]
    %v1446 = vld [vmem:[#allocation16 + $0x9b8] sm:$0xff]
    %v1447 = vld [vmem:[#allocation16 + $0x9c0] sm:$0xff]
    %v1448 = vld [vmem:[#allocation16 + $0x9c8] sm:$0xff]
    %v1449 = vld [vmem:[#allocation16 + $0x9d0] sm:$0xff]
    %v1450 = vld [vmem:[#allocation16 + $0x9d8] sm:$0xff]
    %v1451 = vld [vmem:[#allocation16 + $0x9e0] sm:$0xff]
    %v1452 = vld [vmem:[#allocation16 + $0x9e8] sm:$0xff]
    %v1453 = vld [vmem:[#allocation16 + $0x9f0] sm:$0xff]
    %v1454 = vld [vmem:[#allocation16 + $0x9f8] sm:$0xff]
    %v1455 = vld [vmem:[#allocation16 + $0xa00] sm:$0xff]
    %v1456 = vld [vmem:[#allocation16 + $0xa08] sm:$0xff]
    %v1457 = vld [vmem:[#allocation16 + $0xa10] sm:$0xff]
    %v1458 = vld [vmem:[#allocation16 + $0xa18] sm:$0xff]
    %v1459 = vld [vmem:[#allocation16 + $0xa20] sm:$0xff]
    %v1460 = vld [vmem:[#allocation16 + $0xa28] sm:$0xff]
    %v1461 = vld [vmem:[#allocation16 + $0xa30] sm:$0xff]
    %v1462 = vld [vmem:[#allocation16 + $0xa38] sm:$0xff]
    %v1463 = vld [vmem:[#allocation16 + $0xa40] sm:$0xff]
    %v1464 = vld [vmem:[#allocation16 + $0xa48] sm:$0xff]
    %v1465 = vld [vmem:[#allocation16 + $0xa50] sm:$0xff]
    %v1466 = vld [vmem:[#allocation16 + $0xa58] sm:$0xff]
    %v1467 = vld [vmem:[#allocation16 + $0xa60] sm:$0xff]
    %v1468 = vld [vmem:[#allocation16 + $0xa68] sm:$0xff]
    %v1469 = vld [vmem:[#allocation16 + $0xa70] sm:$0xff]
    %v1470 = vld [vmem:[#allocation16 + $0xa78] sm:$0xff]
    %v1471 = vld [vmem:[#allocation16 + $0xa80] sm:$0xff]
    %v1472 = vld [vmem:[#allocation16 + $0xa88] sm:$0xff]
    %v1473 = vld [vmem:[#allocation16 + $0xa90] sm:$0xff]
    %v1474 = vld [vmem:[#allocation16 + $0xa98] sm:$0xff]
    %v1475 = vld [vmem:[#allocation16 + $0xaa0] sm:$0xff]
    %v1476 = vld [vmem:[#allocation16 + $0xaa8] sm:$0xff]
    %v1477 = vld [vmem:[#allocation16 + $0xab0] sm:$0xff]
    %v1478 = vld [vmem:[#allocation16 + $0xab8] sm:$0xff]
    %v1479 = vld [vmem:[#allocation16 + $0xac0] sm:$0xff]
    %v1480 = vld [vmem:[#allocation16 + $0xac8] sm:$0xff]
    %v1481 = vld [vmem:[#allocation16 + $0xad0] sm:$0xff]
    %v1482 = vld [vmem:[#allocation16 + $0xad8] sm:$0xff]
    %v1483 = vld [vmem:[#allocation16 + $0xae0] sm:$0xff]
    %v1484 = vld [vmem:[#allocation16 + $0xae8] sm:$0xff]
    %v1485 = vld [vmem:[#allocation16 + $0xaf0] sm:$0xff]
    %v1486 = vld [vmem:[#allocation16 + $0xaf8] sm:$0xff]
    %v1487 = vld [vmem:[#allocation16 + $0xb00] sm:$0xff]
    %v1488 = vld [vmem:[#allocation16 + $0xb08] sm:$0xff]
    %v1489 = vld [vmem:[#allocation16 + $0xb10] sm:$0xff]
    %v1490 = vld [vmem:[#allocation16 + $0xb18] sm:$0xff]
    %v1491 = vld [vmem:[#allocation16 + $0xb20] sm:$0xff]
    %v1492 = vld [vmem:[#allocation16 + $0xb28] sm:$0xff]
    %v1493 = vld [vmem:[#allocation16 + $0xb30] sm:$0xff]
    %v1494 = vld [vmem:[#allocation16 + $0xb38] sm:$0xff]
    %v1495 = vld [vmem:[#allocation16 + $0xb40] sm:$0xff]
    %v1496 = vld [vmem:[#allocation16 + $0xb48] sm:$0xff]
    %v1497 = vld [vmem:[#allocation16 + $0xb50] sm:$0xff]
    %v1498 = vld [vmem:[#allocation16 + $0xb58] sm:$0xff]
    %v1499 = vld [vmem:[#allocation16 + $0xb60] sm:$0xff]
    %v1500 = vld [vmem:[#allocation16 + $0xb68] sm:$0xff]
    %v1501 = vld [vmem:[#allocation16 + $0xb70] sm:$0xff]
    %v1502 = vld [vmem:[#allocation16 + $0xb78] sm:$0xff]
    %v1503 = vld [vmem:[#allocation16 + $0xb80] sm:$0xff]
    %v1504 = vld [vmem:[#allocation16 + $0xb88] sm:$0xff]
    %v1505 = vld [vmem:[#allocation16 + $0xb90] sm:$0xff]
    %v1506 = vld [vmem:[#allocation16 + $0xb98] sm:$0xff]
    %v1507 = vld [vmem:[#allocation16 + $0xba0] sm:$0xff]
    %v1508 = vld [vmem:[#allocation16 + $0xba8] sm:$0xff]
    %v1509 = vld [vmem:[#allocation16 + $0xbb0] sm:$0xff]
    %v1510 = vld [vmem:[#allocation16 + $0xbb8] sm:$0xff]
    %v1511 = vld [vmem:[#allocation16 + $0xbc0] sm:$0xff]
    %v1512 = vld [vmem:[#allocation16 + $0xbc8] sm:$0xff]
    %v1513 = vld [vmem:[#allocation16 + $0xbd0] sm:$0xff]
    %v1514 = vld [vmem:[#allocation16 + $0xbd8] sm:$0xff]
    %v1515 = vld [vmem:[#allocation16 + $0xbe0] sm:$0xff]
    %v1516 = vld [vmem:[#allocation16 + $0xbe8] sm:$0xff]
    %v1517 = vld [vmem:[#allocation16 + $0xbf0] sm:$0xff]
    %v1518 = vld [vmem:[#allocation16 + $0xbf8] sm:$0xff]
    %v1519 = vld [vmem:[#allocation16 + $0xc00] sm:$0xff]
    %v1520 = vld [vmem:[#allocation16 + $0xc08] sm:$0xff]
    %v1521 = vld [vmem:[#allocation16 + $0xc10] sm:$0xff]
    %v1522 = vld [vmem:[#allocation16 + $0xc18] sm:$0xff]
    %v1523 = vld [vmem:[#allocation16 + $0xc20] sm:$0xff]
    %v1524 = vld [vmem:[#allocation16 + $0xc28] sm:$0xff]
    %v1525 = vld [vmem:[#allocation16 + $0xc30] sm:$0xff]
    %v1526 = vld [vmem:[#allocation16 + $0xc38] sm:$0xff]
    %v1527 = vld [vmem:[#allocation16 + $0xc40] sm:$0xff]
    %v1528 = vld [vmem:[#allocation16 + $0xc48] sm:$0xff]
    %v1529 = vld [vmem:[#allocation16 + $0xc50] sm:$0xff]
    %v1530 = vld [vmem:[#allocation16 + $0xc58] sm:$0xff]
    %v1531 = vld [vmem:[#allocation16 + $0xc60] sm:$0xff]
    %v1532 = vld [vmem:[#allocation16 + $0xc68] sm:$0xff]
    %v1533 = vld [vmem:[#allocation16 + $0xc70] sm:$0xff]
    %v1534 = vld [vmem:[#allocation16 + $0xc78] sm:$0xff]
    %v1535 = vld [vmem:[#allocation16 + $0xc80] sm:$0xff]
    %v1536 = vld [vmem:[#allocation16 + $0xc88] sm:$0xff]
    %v1537 = vld [vmem:[#allocation16 + $0xc90] sm:$0xff]
    %v1538 = vld [vmem:[#allocation16 + $0xc98] sm:$0xff]
    %v1539 = vld [vmem:[#allocation16 + $0xca0] sm:$0xff]
    %v1540 = vld [vmem:[#allocation16 + $0xca8] sm:$0xff]
    %v1541 = vld [vmem:[#allocation16 + $0xcb0] sm:$0xff]
    %v1542 = vld [vmem:[#allocation16 + $0xcb8] sm:$0xff]
    %v1543 = vld [vmem:[#allocation16 + $0xcc0] sm:$0xff]
    %v1544 = vld [vmem:[#allocation16 + $0xcc8] sm:$0xff]
    %v1545 = vld [vmem:[#allocation16 + $0xcd0] sm:$0xff]
    %v1546 = vld [vmem:[#allocation16 + $0xcd8] sm:$0xff]
    %v1547 = vld [vmem:[#allocation16 + $0xce0] sm:$0xff]
    %v1548 = vld [vmem:[#allocation16 + $0xce8] sm:$0xff]
    %v1549 = vld [vmem:[#allocation16 + $0xcf0] sm:$0xff]
    %v1550 = vld [vmem:[#allocation16 + $0xcf8] sm:$0xff]
    %v1551 = vld [vmem:[#allocation16 + $0xd00] sm:$0xff]
    %v1552 = vld [vmem:[#allocation16 + $0xd08] sm:$0xff]
    %v1553 = vld [vmem:[#allocation16 + $0xd10] sm:$0xff]
    %v1554 = vld [vmem:[#allocation16 + $0xd18] sm:$0xff]
    %v1555 = vld [vmem:[#allocation16 + $0xd20] sm:$0xff]
    %v1556 = vld [vmem:[#allocation16 + $0xd28] sm:$0xff]
    %v1557 = vld [vmem:[#allocation16 + $0xd30] sm:$0xff]
    %v1558 = vld [vmem:[#allocation16 + $0xd38] sm:$0xff]
    %v1559 = vld [vmem:[#allocation16 + $0xd40] sm:$0xff]
    %v1560 = vld [vmem:[#allocation16 + $0xd48] sm:$0xff]
    %v1561 = vld [vmem:[#allocation16 + $0xd50] sm:$0xff]
    %v1562 = vld [vmem:[#allocation16 + $0xd58] sm:$0xff]
    %v1563 = vld [vmem:[#allocation16 + $0xd60] sm:$0xff]
    %v1564 = vld [vmem:[#allocation16 + $0xd68] sm:$0xff]
    %v1565 = vld [vmem:[#allocation16 + $0xd70] sm:$0xff]
    %v1566 = vld [vmem:[#allocation16 + $0xd78] sm:$0xff]
    %v1567 = vld [vmem:[#allocation16 + $0xd80] sm:$0xff]
    %v1568 = vld [vmem:[#allocation16 + $0xd88] sm:$0xff]
    %v1569 = vld [vmem:[#allocation16 + $0xd90] sm:$0xff]
    %v1570 = vld [vmem:[#allocation16 + $0xd98] sm:$0xff]
    %v1571 = vld [vmem:[#allocation16 + $0xda0] sm:$0xff]
    %v1572 = vld [vmem:[#allocation16 + $0xda8] sm:$0xff]
    %v1573 = vld [vmem:[#allocation16 + $0xdb0] sm:$0xff]
    %v1574 = vld [vmem:[#allocation16 + $0xdb8] sm:$0xff]
    %v1575 = vld [vmem:[#allocation16 + $0xdc0] sm:$0xff]
    %v1576 = vld [vmem:[#allocation16 + $0xdc8] sm:$0xff]
    %v1577 = vld [vmem:[#allocation16 + $0xdd0] sm:$0xff]
    %v1578 = vld [vmem:[#allocation16 + $0xdd8] sm:$0xff]
    %v1579 = vld [vmem:[#allocation16 + $0xde0] sm:$0xff]
    %v1580 = vld [vmem:[#allocation16 + $0xde8] sm:$0xff]
    %v1581 = vld [vmem:[#allocation16 + $0xdf0] sm:$0xff]
    %v1582 = vld [vmem:[#allocation16 + $0xdf8] sm:$0xff]
    %v1583 = vld [vmem:[#allocation16 + $0xe00] sm:$0xff]
    %v1584 = vld [vmem:[#allocation16 + $0xe08] sm:$0xff]
    %v1585 = vld [vmem:[#allocation16 + $0xe10] sm:$0xff]
    %v1586 = vld [vmem:[#allocation16 + $0xe18] sm:$0xff]
    %v1587 = vld [vmem:[#allocation16 + $0xe20] sm:$0xff]
    %v1588 = vld [vmem:[#allocation16 + $0xe28] sm:$0xff]
    %v1589 = vld [vmem:[#allocation16 + $0xe30] sm:$0xff]
    %v1590 = vld [vmem:[#allocation16 + $0xe38] sm:$0xff]
    %v1591 = vld [vmem:[#allocation16 + $0xe40] sm:$0xff]
    %v1592 = vld [vmem:[#allocation16 + $0xe48] sm:$0xff]
    %v1593 = vld [vmem:[#allocation16 + $0xe50] sm:$0xff]
    %v1594 = vld [vmem:[#allocation16 + $0xe58] sm:$0xff]
    %v1595 = vld [vmem:[#allocation16 + $0xe60] sm:$0xff]
    %v1596 = vld [vmem:[#allocation16 + $0xe68] sm:$0xff]
    %v1597 = vld [vmem:[#allocation16 + $0xe70] sm:$0xff]
    %v1598 = vld [vmem:[#allocation16 + $0xe78] sm:$0xff]
    %v1599 = vld [vmem:[#allocation16 + $0xe80] sm:$0xff]
    %v1600 = vld [vmem:[#allocation16 + $0xe88] sm:$0xff]
    %v1601 = vld [vmem:[#allocation16 + $0xe90] sm:$0xff]
    %v1602 = vld [vmem:[#allocation16 + $0xe98] sm:$0xff]
    %v1603 = vld [vmem:[#allocation16 + $0xea0] sm:$0xff]
    %v1604 = vld [vmem:[#allocation16 + $0xea8] sm:$0xff]
    %v1605 = vld [vmem:[#allocation16 + $0xeb0] sm:$0xff]
    %v1606 = vld [vmem:[#allocation16 + $0xeb8] sm:$0xff]
    %v1607 = vld [vmem:[#allocation16 + $0xec0] sm:$0xff]
    %v1608 = vld [vmem:[#allocation16 + $0xec8] sm:$0xff]
    %v1609 = vld [vmem:[#allocation16 + $0xed0] sm:$0xff]
    %v1610 = vld [vmem:[#allocation16 + $0xed8] sm:$0xff]
    %v1611 = vld [vmem:[#allocation16 + $0xee0] sm:$0xff]
    %v1612 = vld [vmem:[#allocation16 + $0xee8] sm:$0xff]
    %v1613 = vld [vmem:[#allocation16 + $0xef0] sm:$0xff]
    %v1614 = vld [vmem:[#allocation16 + $0xef8] sm:$0xff]
    %v1615 = vld [vmem:[#allocation16 + $0xf00] sm:$0xff]
    %v1616 = vld [vmem:[#allocation16 + $0xf08] sm:$0xff]
    %v1617 = vld [vmem:[#allocation16 + $0xf10] sm:$0xff]
    %v1618 = vld [vmem:[#allocation16 + $0xf18] sm:$0xff]
    %v1619 = vld [vmem:[#allocation16 + $0xf20] sm:$0xff]
    %v1620 = vld [vmem:[#allocation16 + $0xf28] sm:$0xff]
    %v1621 = vld [vmem:[#allocation16 + $0xf30] sm:$0xff]
    %v1622 = vld [vmem:[#allocation16 + $0xf38] sm:$0xff]
    %v1623 = vld [vmem:[#allocation16 + $0xf40] sm:$0xff]
    %v1624 = vld [vmem:[#allocation16 + $0xf48] sm:$0xff]
    %v1625 = vld [vmem:[#allocation16 + $0xf50] sm:$0xff]
    %v1626 = vld [vmem:[#allocation16 + $0xf58] sm:$0xff]
    %v1627 = vld [vmem:[#allocation16 + $0xf60] sm:$0xff]
    %v1628 = vld [vmem:[#allocation16 + $0xf68] sm:$0xff]
    %v1629 = vld [vmem:[#allocation16 + $0xf70] sm:$0xff]
    %v1630 = vld [vmem:[#allocation16 + $0xf78] sm:$0xff]
    %v1631 = vld [vmem:[#allocation16 + $0xf80] sm:$0xff]
    %v1632 = vld [vmem:[#allocation16 + $0xf88] sm:$0xff]
    %v1633 = vld [vmem:[#allocation16 + $0xf90] sm:$0xff]
    %v1634 = vld [vmem:[#allocation16 + $0xf98] sm:$0xff]
    %v1635 = vld [vmem:[#allocation16 + $0xfa0] sm:$0xff]
    %v1636 = vld [vmem:[#allocation16 + $0xfa8] sm:$0xff]
    %v1637 = vld [vmem:[#allocation16 + $0xfb0] sm:$0xff]
    %v1638 = vld [vmem:[#allocation16 + $0xfb8] sm:$0xff]
    %v1639 = vld [vmem:[#allocation16 + $0xfc0] sm:$0xff]
    %v1640 = vld [vmem:[#allocation16 + $0xfc8] sm:$0xff]
    %v1641 = vld [vmem:[#allocation16 + $0xfd0] sm:$0xff]
    %v1642 = vld [vmem:[#allocation16 + $0xfd8] sm:$0xff]
    %v1643 = vld [vmem:[#allocation16 + $0xfe0] sm:$0xff]
    %v1644 = vld [vmem:[#allocation16 + $0xfe8] sm:$0xff]
    %v1645 = vld [vmem:[#allocation16 + $0xff0] sm:$0xff]
    %v1646 = vld [vmem:[#allocation16 + $0xff8] sm:$0xff]
    %1647 = vmatprep.subr.mxu0 %v1136
    %1648 = vmatpush1.msra.mxu0 %v1135
    %1649 = vmatprep.subr.mxu0 %v1144
    %1650 = vmatpush1.msra.mxu0 %v1143
    %1651 = vmatprep.subr.mxu0 %v1152
    %1652 = vmatpush1.msra.mxu0 %v1151
    %1653 = vmatprep.subr.mxu0 %v1160
    %1654 = vmatpush1.msra.mxu0 %v1159
    %1655 = vmatprep.subr.mxu0 %v1168
    %1656 = vmatpush1.msra.mxu0 %v1167
    %1657 = vmatprep.subr.mxu0 %v1176
    %1658 = vmatpush1.msra.mxu0 %v1175
    %1659 = vmatprep.subr.mxu0 %v1184
    %1660 = vmatpush1.msra.mxu0 %v1183
    %1661 = vmatprep.subr.mxu0 %v1192
    %1662 = vmatpush1.msra.mxu0 %v1191
    %1663 = vmatprep.subr.mxu0 %v1200
    %1664 = vmatpush1.msra.mxu0 %v1199
    %1665 = vmatprep.subr.mxu0 %v1208
    %1666 = vmatpush1.msra.mxu0 %v1207
    %1667 = vmatprep.subr.mxu0 %v1216
    %1668 = vmatpush1.msra.mxu0 %v1215
    %1669 = vmatprep.subr.mxu0 %v1224
    %1670 = vmatpush1.msra.mxu0 %v1223
    %1671 = vmatprep.subr.mxu0 %v1232
    %1672 = vmatpush1.msra.mxu0 %v1231
    %1673 = vmatprep.subr.mxu0 %v1240
    %1674 = vmatpush1.msra.mxu0 %v1239
    %1675 = vmatprep.subr.mxu0 %v1248
    %1676 = vmatpush1.msra.mxu0 %v1247
    %1677 = vmatprep.subr.mxu0 %v1256
    %1678 = vmatpush1.msra.mxu0 %v1255
    %1679 = vmatprep.subr.mxu0 %v1264
    %1680 = vmatpush1.msra.mxu0 %v1263
    %1681 = vmatprep.subr.mxu0 %v1272
    %1682 = vmatpush1.msra.mxu0 %v1271
    %1683 = vmatprep.subr.mxu0 %v1280
    %1684 = vmatpush1.msra.mxu0 %v1279
    %1685 = vmatprep.subr.mxu0 %v1288
    %1686 = vmatpush1.msra.mxu0 %v1287
    %1687 = vmatprep.subr.mxu0 %v1296
    %1688 = vmatpush1.msra.mxu0 %v1295
    %1689 = vmatprep.subr.mxu0 %v1304
    %1690 = vmatpush1.msra.mxu0 %v1303
    %1691 = vmatprep.subr.mxu0 %v1312
    %1692 = vmatpush1.msra.mxu0 %v1311
    %1693 = vmatprep.subr.mxu0 %v1320
    %1694 = vmatpush1.msra.mxu0 %v1319
    %1695 = vmatprep.subr.mxu0 %v1328
    %1696 = vmatpush1.msra.mxu0 %v1327
    %1697 = vmatprep.subr.mxu0 %v1336
    %1698 = vmatpush1.msra.mxu0 %v1335
    %1699 = vmatprep.subr.mxu0 %v1344
    %1700 = vmatpush1.msra.mxu0 %v1343
    %1701 = vmatprep.subr.mxu0 %v1352
    %1702 = vmatpush1.msra.mxu0 %v1351
    %1703 = vmatprep.subr.mxu0 %v1360
    %1704 = vmatpush1.msra.mxu0 %v1359
    %1705 = vmatprep.subr.mxu0 %v1368
    %1706 = vmatpush1.msra.mxu0 %v1367
    %1707 = vmatprep.subr.mxu0 %v1376
    %1708 = vmatpush1.msra.mxu0 %v1375
    %1709 = vmatprep.subr.mxu0 %v1384
    %1710 = vmatpush1.msra.mxu0 %v1383
    %1711 = vmatprep.mubr.f32.mxu0 %v1104
    %1712 = vmatmul.mubr.f32.gmra.mrb[0].mxu0 %v1103
    %v1713 = vpop.f32.mrb[0].mxu0
    %v1714 = vadd.f32 0.0, %v1713
    %v1715 = vpop.f32.mrb[0].mxu0
    %v1716 = vadd.f32 0.0, %v1715
    %1717 = vmatprep.mubr.f32.mxu0 %v1108
    %1718 = vmatmul.mubr.f32.gmra.mrb[0].mxu0 %v1107
    %v1719 = vpop.f32.mrb[0].mxu0
    %v1720 = vadd.f32 0.0, %v1719
    %v1721 = vpop.f32.mrb[0].mxu0
    %v1722 = vadd.f32 0.0, %v1721
    %1723 = vmatprep.mubr.f32.mxu0 %v1112
    %1724 = vmatmul.mubr.f32.gmra.mrb[0].mxu0 %v1111
    %v1725 = vpop.f32.mrb[0].mxu0
    %v1726 = vadd.f32 0.0, %v1725
    %v1727 = vpop.f32.mrb[0].mxu0
    %v1728 = vadd.f32 0.0, %v1727
    %1729 = vmatprep.mubr.f32.mxu0 %v1116
    %1730 = vmatmul.mubr.f32.gmra.mrb[0].mxu0 %v1115
    %v1731 = vpop.f32.mrb[0].mxu0
    %v1732 = vadd.f32 0.0, %v1731
    %v1733 = vpop.f32.mrb[0].mxu0
    %v1734 = vadd.f32 0.0, %v1733
    %1735 = vmatprep.mubr.f32.mxu0 %v1120
    %1736 = vmatmul.mubr.f32.gmra.mrb[0].mxu0 %v1119
    %v1737 = vpop.f32.mrb[0].mxu0
    %v1738 = vadd.f32 0.0, %v1737
    %v1739 = vpop.f32.mrb[0].mxu0
    %v1740 = vadd.f32 0.0, %v1739
    %1741 = vmatprep.mubr.f32.mxu0 %v1124
    %1742 = vmatmul.mubr.f32.gmra.mrb[0].mxu0 %v1123
    %v1743 = vpop.f32.mrb[0].mxu0
    %v1744 = vadd.f32 0.0, %v1743
    %v1745 = vpop.f32.mrb[0].mxu0
    %v1746 = vadd.f32 0.0, %v1745
    %1747 = vmatprep.mubr.f32.mxu0 %v1128
    %1748 = vmatmul.mubr.f32.gmra.mrb[0].mxu0 %v1127
    %v1749 = vpop.f32.mrb[0].mxu0
    %v1750 = vadd.f32 0.0, %v1749
    %v1751 = vpop.f32.mrb[0].mxu0
    %v1752 = vadd.f32 0.0, %v1751
    %1753 = vmatprep.mubr.f32.mxu0 %v1132
    %1754 = vmatmul.mubr.f32.gmra.mrb[0].mxu0 %v1131
    %v1755 = vpop.f32.mrb[0].mxu0
    %v1756 = vadd.f32 0.0, %v1755
    %v1757 = vpop.f32.mrb[0].mxu0
    %v1758 = vadd.f32 0.0, %v1757
    %1759 = vdwg.mxu0
    %1760 = vmatprep.subr.mxu0 %v1392
    %1761 = vmatpush1.msra.mxu0 %v1391
    %1762 = vmatprep.subr.mxu0 %v1400
    %1763 = vmatpush1.msra.mxu0 %v1399
    %1764 = vmatprep.subr.mxu0 %v1408
    %1765 = vmatpush1.msra.mxu0 %v1407
    %1766 = vmatprep.subr.mxu0 %v1416
    %1767 = vmatpush1.msra.mxu0 %v1415
    %1768 = vmatprep.subr.mxu0 %v1424
    %1769 = vmatpush1.msra.mxu0 %v1423
    %1770 = vmatprep.subr.mxu0 %v1432
    %1771 = vmatpush1.msra.mxu0 %v1431
    %1772 = vmatprep.subr.mxu0 %v1440
    %1773 = vmatpush1.msra.mxu0 %v1439
    %1774 = vmatprep.subr.mxu0 %v1448
    %1775 = vmatpush1.msra.mxu0 %v1447
    %1776 = vmatprep.subr.mxu0 %v1456
    %1777 = vmatpush1.msra.mxu0 %v1455
    %1778 = vmatprep.subr.mxu0 %v1464
    %1779 = vmatpush1.msra.mxu0 %v1463
    %1780 = vmatprep.subr.mxu0 %v1472
    %1781 = vmatpush1.msra.mxu0 %v1471
    %1782 = vmatprep.subr.mxu0 %v1480
    %1783 = vmatpush1.msra.mxu0 %v1479
    %1784 = vmatprep.subr.mxu0 %v1488
    %1785 = vmatpush1.msra.mxu0 %v1487
    %1786 = vmatprep.subr.mxu0 %v1496
    %1787 = vmatpush1.msra.mxu0 %v1495
    %1788 = vmatprep.subr.mxu0 %v1504
    %1789 = vmatpush1.msra.mxu0 %v1503
    %1790 = vmatprep.subr.mxu0 %v1512
    %1791 = vmatpush1.msra.mxu0 %v1511
    %1792 = vmatprep.subr.mxu0 %v1520
    %1793 = vmatpush1.msra.mxu0 %v1519
    %1794 = vmatprep.subr.mxu0 %v1528
    %1795 = vmatpush1.msra.mxu0 %v1527
    %1796 = vmatprep.subr.mxu0 %v1536
    %1797 = vmatpush1.msra.mxu0 %v1535
    %1798 = vmatprep.subr.mxu0 %v1544
    %1799 = vmatpush1.msra.mxu0 %v1543
    %1800 = vmatprep.subr.mxu0 %v1552
    %1801 = vmatpush1.msra.mxu0 %v1551
    %1802 = vmatprep.subr.mxu0 %v1560
    %1803 = vmatpush1.msra.mxu0 %v1559
    %1804 = vmatprep.subr.mxu0 %v1568
    %1805 = vmatpush1.msra.mxu0 %v1567
    %1806 = vmatprep.subr.mxu0 %v1576
    %1807 = vmatpush1.msra.mxu0 %v1575
    %1808 = vmatprep.subr.mxu0 %v1584
    %1809 = vmatpush1.msra.mxu0 %v1583
    %1810 = vmatprep.subr.mxu0 %v1592
    %1811 = vmatpush1.msra.mxu0 %v1591
    %1812 = vmatprep.subr.mxu0 %v1600
    %1813 = vmatpush1.msra.mxu0 %v1599
    %1814 = vmatprep.subr.mxu0 %v1608
    %1815 = vmatpush1.msra.mxu0 %v1607
    %1816 = vmatprep.subr.mxu0 %v1616
    %1817 = vmatpush1.msra.mxu0 %v1615
    %1818 = vmatprep.subr.mxu0 %v1624
    %1819 = vmatpush1.msra.mxu0 %v1623
    %1820 = vmatprep.subr.mxu0 %v1632
    %1821 = vmatpush1.msra.mxu0 %v1631
    %1822 = vmatprep.subr.mxu0 %v1640
    %1823 = vmatpush1.msra.mxu0 %v1639
    %1824 = vmatprep.mubr.f32.mxu0 %v1106
    %1825 = vmatmul.mubr.f32.gmra.mrb[0].mxu0 %v1105
    %v1826 = vpop.f32.mrb[0].mxu0
    %v1827 = vadd.f32 %v1714, %v1826
    %v1828 = vpop.f32.mrb[0].mxu0
    %v1829 = vadd.f32 %v1716, %v1828
    %1830 = vmatprep.mubr.f32.mxu0 %v1110
    %1831 = vmatmul.mubr.f32.gmra.mrb[0].mxu0 %v1109
    %v1832 = vpop.f32.mrb[0].mxu0
    %v1833 = vadd.f32 %v1720, %v1832
    %v1834 = vpop.f32.mrb[0].mxu0
    %v1835 = vadd.f32 %v1722, %v1834
    %1836 = vmatprep.mubr.f32.mxu0 %v1114
    %1837 = vmatmul.mubr.f32.gmra.mrb[0].mxu0 %v1113
    %v1838 = vpop.f32.mrb[0].mxu0
    %v1839 = vadd.f32 %v1726, %v1838
    %v1840 = vpop.f32.mrb[0].mxu0
    %v1841 = vadd.f32 %v1728, %v1840
    %1842 = vmatprep.mubr.f32.mxu0 %v1118
    %1843 = vmatmul.mubr.f32.gmra.mrb[0].mxu0 %v1117
    %v1844 = vpop.f32.mrb[0].mxu0
    %v1845 = vadd.f32 %v1732, %v1844
    %v1846 = vpop.f32.mrb[0].mxu0
    %v1847 = vadd.f32 %v1734, %v1846
    %1848 = vmatprep.mubr.f32.mxu0 %v1122
    %1849 = vmatmul.mubr.f32.gmra.mrb[0].mxu0 %v1121
    %v1850 = vpop.f32.mrb[0].mxu0
    %v1851 = vadd.f32 %v1738, %v1850
    %v1852 = vpop.f32.mrb[0].mxu0
    %v1853 = vadd.f32 %v1740, %v1852
    %1854 = vmatprep.mubr.f32.mxu0 %v1126
    %1855 = vmatmul.mubr.f32.gmra.mrb[0].mxu0 %v1125
    %v1856 = vpop.f32.mrb[0].mxu0
    %v1857 = vadd.f32 %v1744, %v1856
    %v1858 = vpop.f32.mrb[0].mxu0
    %v1859 = vadd.f32 %v1746, %v1858
    %1860 = vmatprep.mubr.f32.mxu0 %v1130
    %1861 = vmatmul.mubr.f32.gmra.mrb[0].mxu0 %v1129
    %v1862 = vpop.f32.mrb[0].mxu0
    %v1863 = vadd.f32 %v1750, %v1862
    %v1864 = vpop.f32.mrb[0].mxu0
    %v1865 = vadd.f32 %v1752, %v1864
    %1866 = vmatprep.mubr.f32.mxu0 %v1134
    %1867 = vmatmul.mubr.f32.gmra.mrb[0].mxu0 %v1133
    %v1868 = vpop.f32.mrb[0].mxu0
    %v1869 = vadd.f32 %v1756, %v1868
    %v1870 = vpop.f32.mrb[0].mxu0
    %v1871 = vadd.f32 %v1758, %v1870
    %1872 = vdwg.mxu0
    %1873 = vmatprep.subr.mxu0 %v1138
    %1874 = vmatpush1.msra.mxu0 %v1137
    %1875 = vmatprep.subr.mxu0 %v1146
    %1876 = vmatpush1.msra.mxu0 %v1145
    %1877 = vmatprep.subr.mxu0 %v1154
    %1878 = vmatpush1.msra.mxu0 %v1153
    %1879 = vmatprep.subr.mxu0 %v1162
    %1880 = vmatpush1.msra.mxu0 %v1161
    %1881 = vmatprep.subr.mxu0 %v1170
    %1882 = vmatpush1.msra.mxu0 %v1169
    %1883 = vmatprep.subr.mxu0 %v1178
    %1884 = vmatpush1.msra.mxu0 %v1177
    %1885 = vmatprep.subr.mxu0 %v1186
    %1886 = vmatpush1.msra.mxu0 %v1185
    %1887 = vmatprep.subr.mxu0 %v1194
    %1888 = vmatpush1.msra.mxu0 %v1193
    %1889 = vmatprep.subr.mxu0 %v1202
    %1890 = vmatpush1.msra.mxu0 %v1201
    %1891 = vmatprep.subr.mxu0 %v1210
    %1892 = vmatpush1.msra.mxu0 %v1209
    %1893 = vmatprep.subr.mxu0 %v1218
    %1894 = vmatpush1.msra.mxu0 %v1217
    %1895 = vmatprep.subr.mxu0 %v1226
    %1896 = vmatpush1.msra.mxu0 %v1225
    %1897 = vmatprep.subr.mxu0 %v1234
    %1898 = vmatpush1.msra.mxu0 %v1233
    %1899 = vmatprep.subr.mxu0 %v1242
    %1900 = vmatpush1.msra.mxu0 %v1241
    %1901 = vmatprep.subr.mxu0 %v1250
    %1902 = vmatpush1.msra.mxu0 %v1249
    %1903 = vmatprep.subr.mxu0 %v1258
    %1904 = vmatpush1.msra.mxu0 %v1257
    %1905 = vmatprep.subr.mxu0 %v1266
    %1906 = vmatpush1.msra.mxu0 %v1265
    %1907 = vmatprep.subr.mxu0 %v1274
    %1908 = vmatpush1.msra.mxu0 %v1273
    %1909 = vmatprep.subr.mxu0 %v1282
    %1910 = vmatpush1.msra.mxu0 %v1281
    %1911 = vmatprep.subr.mxu0 %v1290
    %1912 = vmatpush1.msra.mxu0 %v1289
    %1913 = vmatprep.subr.mxu0 %v1298
    %1914 = vmatpush1.msra.mxu0 %v1297
    %1915 = vmatprep.subr.mxu0 %v1306
    %1916 = vmatpush1.msra.mxu0 %v1305
    %1917 = vmatprep.subr.mxu0 %v1314
    %1918 = vmatpush1.msra.mxu0 %v1313
    %1919 = vmatprep.subr.mxu0 %v1322
    %1920 = vmatpush1.msra.mxu0 %v1321
    %1921 = vmatprep.subr.mxu0 %v1330
    %1922 = vmatpush1.msra.mxu0 %v1329
    %1923 = vmatprep.subr.mxu0 %v1338
    %1924 = vmatpush1.msra.mxu0 %v1337
    %1925 = vmatprep.subr.mxu0 %v1346
    %1926 = vmatpush1.msra.mxu0 %v1345
    %1927 = vmatprep.subr.mxu0 %v1354
    %1928 = vmatpush1.msra.mxu0 %v1353
    %1929 = vmatprep.subr.mxu0 %v1362
    %1930 = vmatpush1.msra.mxu0 %v1361
    %1931 = vmatprep.subr.mxu0 %v1370
    %1932 = vmatpush1.msra.mxu0 %v1369
    %1933 = vmatprep.subr.mxu0 %v1378
    %1934 = vmatpush1.msra.mxu0 %v1377
    %1935 = vmatprep.subr.mxu0 %v1386
    %1936 = vmatpush1.msra.mxu0 %v1385
    %1937 = vmatprep.mubr.f32.mxu0 %v1104
    %1938 = vmatmul.mubr.f32.gmra.mrb[0].mxu0 %v1103
    %v1939 = vpop.f32.mrb[0].mxu0
    %v1940 = vadd.f32 0.0, %v1939
    %v1941 = vpop.f32.mrb[0].mxu0
    %v1942 = vadd.f32 0.0, %v1941
    %1943 = vmatprep.mubr.f32.mxu0 %v1108
    %1944 = vmatmul.mubr.f32.gmra.mrb[0].mxu0 %v1107
    %v1945 = vpop.f32.mrb[0].mxu0
    %v1946 = vadd.f32 0.0, %v1945
    %v1947 = vpop.f32.mrb[0].mxu0
    %v1948 = vadd.f32 0.0, %v1947
    %1949 = vmatprep.mubr.f32.mxu0 %v1112
    %1950 = vmatmul.mubr.f32.gmra.mrb[0].mxu0 %v1111
    %v1951 = vpop.f32.mrb[0].mxu0
    %v1952 = vadd.f32 0.0, %v1951
    %v1953 = vpop.f32.mrb[0].mxu0
    %v1954 = vadd.f32 0.0, %v1953
    %1955 = vmatprep.mubr.f32.mxu0 %v1116
    %1956 = vmatmul.mubr.f32.gmra.mrb[0].mxu0 %v1115
    %v1957 = vpop.f32.mrb[0].mxu0
    %v1958 = vadd.f32 0.0, %v1957
    %v1959 = vpop.f32.mrb[0].mxu0
    %v1960 = vadd.f32 0.0, %v1959
    %1961 = vmatprep.mubr.f32.mxu0 %v1120
    %1962 = vmatmul.mubr.f32.gmra.mrb[0].mxu0 %v1119
    %v1963 = vpop.f32.mrb[0].mxu0
    %v1964 = vadd.f32 0.0, %v1963
    %v1965 = vpop.f32.mrb[0].mxu0
    %v1966 = vadd.f32 0.0, %v1965
    %1967 = vmatprep.mubr.f32.mxu0 %v1124
    %1968 = vmatmul.mubr.f32.gmra.mrb[0].mxu0 %v1123
    %v1969 = vpop.f32.mrb[0].mxu0
    %v1970 = vadd.f32 0.0, %v1969
    %v1971 = vpop.f32.mrb[0].mxu0
    %v1972 = vadd.f32 0.0, %v1971
    %1973 = vmatprep.mubr.f32.mxu0 %v1128
    %1974 = vmatmul.mubr.f32.gmra.mrb[0].mxu0 %v1127
    %v1975 = vpop.f32.mrb[0].mxu0
    %v1976 = vadd.f32 0.0, %v1975
    %v1977 = vpop.f32.mrb[0].mxu0
    %v1978 = vadd.f32 0.0, %v1977
    %1979 = vmatprep.mubr.f32.mxu0 %v1132
    %1980 = vmatmul.mubr.f32.gmra.mrb[0].mxu0 %v1131
    %v1981 = vpop.f32.mrb[0].mxu0
    %v1982 = vadd.f32 0.0, %v1981
    %v1983 = vpop.f32.mrb[0].mxu0
    %v1984 = vadd.f32 0.0, %v1983
    %1985 = vdwg.mxu0
    %1986 = vmatprep.subr.mxu0 %v1394
    %1987 = vmatpush1.msra.mxu0 %v1393
    %1988 = vmatprep.subr.mxu0 %v1402
    %1989 = vmatpush1.msra.mxu0 %v1401
    %1990 = vmatprep.subr.mxu0 %v1410
    %1991 = vmatpush1.msra.mxu0 %v1409
    %1992 = vmatprep.subr.mxu0 %v1418
    %1993 = vmatpush1.msra.mxu0 %v1417
    %1994 = vmatprep.subr.mxu0 %v1426
    %1995 = vmatpush1.msra.mxu0 %v1425
    %1996 = vmatprep.subr.mxu0 %v1434
    %1997 = vmatpush1.msra.mxu0 %v1433
    %1998 = vmatprep.subr.mxu0 %v1442
    %1999 = vmatpush1.msra.mxu0 %v1441
    %2000 = vmatprep.subr.mxu0 %v1450
    %2001 = vmatpush1.msra.mxu0 %v1449
    %2002 = vmatprep.subr.mxu0 %v1458
    %2003 = vmatpush1.msra.mxu0 %v1457
    %2004 = vmatprep.subr.mxu0 %v1466
    %2005 = vmatpush1.msra.mxu0 %v1465
    %2006 = vmatprep.subr.mxu0 %v1474
    %2007 = vmatpush1.msra.mxu0 %v1473
    %2008 = vmatprep.subr.mxu0 %v1482
    %2009 = vmatpush1.msra.mxu0 %v1481
    %2010 = vmatprep.subr.mxu0 %v1490
    %2011 = vmatpush1.msra.mxu0 %v1489
    %2012 = vmatprep.subr.mxu0 %v1498
    %2013 = vmatpush1.msra.mxu0 %v1497
    %2014 = vmatprep.subr.mxu0 %v1506
    %2015 = vmatpush1.msra.mxu0 %v1505
    %2016 = vmatprep.subr.mxu0 %v1514
    %2017 = vmatpush1.msra.mxu0 %v1513
    %2018 = vmatprep.subr.mxu0 %v1522
    %2019 = vmatpush1.msra.mxu0 %v1521
    %2020 = vmatprep.subr.mxu0 %v1530
    %2021 = vmatpush1.msra.mxu0 %v1529
    %2022 = vmatprep.subr.mxu0 %v1538
    %2023 = vmatpush1.msra.mxu0 %v1537
    %2024 = vmatprep.subr.mxu0 %v1546
    %2025 = vmatpush1.msra.mxu0 %v1545
    %2026 = vmatprep.subr.mxu0 %v1554
    %2027 = vmatpush1.msra.mxu0 %v1553
    %2028 = vmatprep.subr.mxu0 %v1562
    %2029 = vmatpush1.msra.mxu0 %v1561
    %2030 = vmatprep.subr.mxu0 %v1570
    %2031 = vmatpush1.msra.mxu0 %v1569
    %2032 = vmatprep.subr.mxu0 %v1578
    %2033 = vmatpush1.msra.mxu0 %v1577
    %2034 = vmatprep.subr.mxu0 %v1586
    %2035 = vmatpush1.msra.mxu0 %v1585
    %2036 = vmatprep.subr.mxu0 %v1594
    %2037 = vmatpush1.msra.mxu0 %v1593
    %2038 = vmatprep.subr.mxu0 %v1602
    %2039 = vmatpush1.msra.mxu0 %v1601
    %2040 = vmatprep.subr.mxu0 %v1610
    %2041 = vmatpush1.msra.mxu0 %v1609
    %2042 = vmatprep.subr.mxu0 %v1618
    %2043 = vmatpush1.msra.mxu0 %v1617
    %2044 = vmatprep.subr.mxu0 %v1626
    %2045 = vmatpush1.msra.mxu0 %v1625
    %2046 = vmatprep.subr.mxu0 %v1634
    %2047 = vmatpush1.msra.mxu0 %v1633
    %2048 = vmatprep.subr.mxu0 %v1642
    %2049 = vmatpush1.msra.mxu0 %v1641
    %2050 = vmatprep.mubr.f32.mxu0 %v1106
    %2051 = vmatmul.mubr.f32.gmra.mrb[0].mxu0 %v1105
    %v2052 = vpop.f32.mrb[0].mxu0
    %v2053 = vadd.f32 %v1940, %v2052
    %v2054 = vpop.f32.mrb[0].mxu0
    %v2055 = vadd.f32 %v1942, %v2054
    %2056 = vmatprep.mubr.f32.mxu0 %v1110
    %2057 = vmatmul.mubr.f32.gmra.mrb[0].mxu0 %v1109
    %v2058 = vpop.f32.mrb[0].mxu0
    %v2059 = vadd.f32 %v1946, %v2058
    %v2060 = vpop.f32.mrb[0].mxu0
    %v2061 = vadd.f32 %v1948, %v2060
    %2062 = vmatprep.mubr.f32.mxu0 %v1114
    %2063 = vmatmul.mubr.f32.gmra.mrb[0].mxu0 %v1113
    %v2064 = vpop.f32.mrb[0].mxu0
    %v2065 = vadd.f32 %v1952, %v2064
    %v2066 = vpop.f32.mrb[0].mxu0
    %v2067 = vadd.f32 %v1954, %v2066
    %2068 = vmatprep.mubr.f32.mxu0 %v1118
    %2069 = vmatmul.mubr.f32.gmra.mrb[0].mxu0 %v1117
    %v2070 = vpop.f32.mrb[0].mxu0
    %v2071 = vadd.f32 %v1958, %v2070
    %v2072 = vpop.f32.mrb[0].mxu0
    %v2073 = vadd.f32 %v1960, %v2072
    %2074 = vmatprep.mubr.f32.mxu0 %v1122
    %2075 = vmatmul.mubr.f32.gmra.mrb[0].mxu0 %v1121
    %v2076 = vpop.f32.mrb[0].mxu0
    %v2077 = vadd.f32 %v1964, %v2076
    %v2078 = vpop.f32.mrb[0].mxu0
    %v2079 = vadd.f32 %v1966, %v2078
    %2080 = vmatprep.mubr.f32.mxu0 %v1126
    %2081 = vmatmul.mubr.f32.gmra.mrb[0].mxu0 %v1125
    %v2082 = vpop.f32.mrb[0].mxu0
    %v2083 = vadd.f32 %v1970, %v2082
    %v2084 = vpop.f32.mrb[0].mxu0
    %v2085 = vadd.f32 %v1972, %v2084
    %2086 = vmatprep.mubr.f32.mxu0 %v1130
    %2087 = vmatmul.mubr.f32.gmra.mrb[0].mxu0 %v1129
    %v2088 = vpop.f32.mrb[0].mxu0
    %v2089 = vadd.f32 %v1976, %v2088
    %v2090 = vpop.f32.mrb[0].mxu0
    %v2091 = vadd.f32 %v1978, %v2090
    %2092 = vmatprep.mubr.f32.mxu0 %v1134
    %2093 = vmatmul.mubr.f32.gmra.mrb[0].mxu0 %v1133
    %v2094 = vpop.f32.mrb[0].mxu0
    %v2095 = vadd.f32 %v1982, %v2094
    %v2096 = vpop.f32.mrb[0].mxu0
    %v2097 = vadd.f32 %v1984, %v2096
    %2098 = vdwg.mxu0
    %2099 = vmatprep.subr.mxu0 %v1140
    %2100 = vmatpush1.msra.mxu0 %v1139
    %2101 = vmatprep.subr.mxu0 %v1148
    %2102 = vmatpush1.msra.mxu0 %v1147
    %2103 = vmatprep.subr.mxu0 %v1156
    %2104 = vmatpush1.msra.mxu0 %v1155
    %2105 = vmatprep.subr.mxu0 %v1164
    %2106 = vmatpush1.msra.mxu0 %v1163
    %2107 = vmatprep.subr.mxu0 %v1172
    %2108 = vmatpush1.msra.mxu0 %v1171
    %2109 = vmatprep.subr.mxu0 %v1180
    %2110 = vmatpush1.msra.mxu0 %v1179
    %2111 = vmatprep.subr.mxu0 %v1188
    %2112 = vmatpush1.msra.mxu0 %v1187
    %2113 = vmatprep.subr.mxu0 %v1196
    %2114 = vmatpush1.msra.mxu0 %v1195
    %2115 = vmatprep.subr.mxu0 %v1204
    %2116 = vmatpush1.msra.mxu0 %v1203
    %2117 = vmatprep.subr.mxu0 %v1212
    %2118 = vmatpush1.msra.mxu0 %v1211
    %2119 = vmatprep.subr.mxu0 %v1220
    %2120 = vmatpush1.msra.mxu0 %v1219
    %2121 = vmatprep.subr.mxu0 %v1228
    %2122 = vmatpush1.msra.mxu0 %v1227
    %2123 = vmatprep.subr.mxu0 %v1236
    %2124 = vmatpush1.msra.mxu0 %v1235
    %2125 = vmatprep.subr.mxu0 %v1244
    %2126 = vmatpush1.msra.mxu0 %v1243
    %2127 = vmatprep.subr.mxu0 %v1252
    %2128 = vmatpush1.msra.mxu0 %v1251
    %2129 = vmatprep.subr.mxu0 %v1260
    %2130 = vmatpush1.msra.mxu0 %v1259
    %2131 = vmatprep.subr.mxu0 %v1268
    %2132 = vmatpush1.msra.mxu0 %v1267
    %2133 = vmatprep.subr.mxu0 %v1276
    %2134 = vmatpush1.msra.mxu0 %v1275
    %2135 = vmatprep.subr.mxu0 %v1284
    %2136 = vmatpush1.msra.mxu0 %v1283
    %2137 = vmatprep.subr.mxu0 %v1292
    %2138 = vmatpush1.msra.mxu0 %v1291
    %2139 = vmatprep.subr.mxu0 %v1300
    %2140 = vmatpush1.msra.mxu0 %v1299
    %2141 = vmatprep.subr.mxu0 %v1308
    %2142 = vmatpush1.msra.mxu0 %v1307
    %2143 = vmatprep.subr.mxu0 %v1316
    %2144 = vmatpush1.msra.mxu0 %v1315
    %2145 = vmatprep.subr.mxu0 %v1324
    %2146 = vmatpush1.msra.mxu0 %v1323
    %2147 = vmatprep.subr.mxu0 %v1332
    %2148 = vmatpush1.msra.mxu0 %v1331
    %2149 = vmatprep.subr.mxu0 %v1340
    %2150 = vmatpush1.msra.mxu0 %v1339
    %2151 = vmatprep.subr.mxu0 %v1348
    %2152 = vmatpush1.msra.mxu0 %v1347
    %2153 = vmatprep.subr.mxu0 %v1356
    %2154 = vmatpush1.msra.mxu0 %v1355
    %2155 = vmatprep.subr.mxu0 %v1364
    %2156 = vmatpush1.msra.mxu0 %v1363
    %2157 = vmatprep.subr.mxu0 %v1372
    %2158 = vmatpush1.msra.mxu0 %v1371
    %2159 = vmatprep.subr.mxu0 %v1380
    %2160 = vmatpush1.msra.mxu0 %v1379
    %2161 = vmatprep.subr.mxu0 %v1388
    %2162 = vmatpush1.msra.mxu0 %v1387
    %2163 = vmatprep.mubr.f32.mxu0 %v1104
    %2164 = vmatmul.mubr.f32.gmra.mrb[0].mxu0 %v1103
    %v2165 = vpop.f32.mrb[0].mxu0
    %v2166 = vadd.f32 0.0, %v2165
    %v2167 = vpop.f32.mrb[0].mxu0
    %v2168 = vadd.f32 0.0, %v2167
    %2169 = vmatprep.mubr.f32.mxu0 %v1108
    %2170 = vmatmul.mubr.f32.gmra.mrb[0].mxu0 %v1107
    %v2171 = vpop.f32.mrb[0].mxu0
    %v2172 = vadd.f32 0.0, %v2171
    %v2173 = vpop.f32.mrb[0].mxu0
    %v2174 = vadd.f32 0.0, %v2173
    %2175 = vmatprep.mubr.f32.mxu0 %v1112
    %2176 = vmatmul.mubr.f32.gmra.mrb[0].mxu0 %v1111
    %v2177 = vpop.f32.mrb[0].mxu0
    %v2178 = vadd.f32 0.0, %v2177
    %v2179 = vpop.f32.mrb[0].mxu0
    %v2180 = vadd.f32 0.0, %v2179
    %2181 = vmatprep.mubr.f32.mxu0 %v1116
    %2182 = vmatmul.mubr.f32.gmra.mrb[0].mxu0 %v1115
    %v2183 = vpop.f32.mrb[0].mxu0
    %v2184 = vadd.f32 0.0, %v2183
    %v2185 = vpop.f32.mrb[0].mxu0
    %v2186 = vadd.f32 0.0, %v2185
    %2187 = vmatprep.mubr.f32.mxu0 %v1120
    %2188 = vmatmul.mubr.f32.gmra.mrb[0].mxu0 %v1119
    %v2189 = vpop.f32.mrb[0].mxu0
    %v2190 = vadd.f32 0.0, %v2189
    %v2191 = vpop.f32.mrb[0].mxu0
    %v2192 = vadd.f32 0.0, %v2191
    %2193 = vmatprep.mubr.f32.mxu0 %v1124
    %2194 = vmatmul.mubr.f32.gmra.mrb[0].mxu0 %v1123
    %v2195 = vpop.f32.mrb[0].mxu0
    %v2196 = vadd.f32 0.0, %v2195
    %v2197 = vpop.f32.mrb[0].mxu0
    %v2198 = vadd.f32 0.0, %v2197
    %2199 = vmatprep.mubr.f32.mxu0 %v1128
    %2200 = vmatmul.mubr.f32.gmra.mrb[0].mxu0 %v1127
    %v2201 = vpop.f32.mrb[0].mxu0
    %v2202 = vadd.f32 0.0, %v2201
    %v2203 = vpop.f32.mrb[0].mxu0
    %v2204 = vadd.f32 0.0, %v2203
    %2205 = vmatprep.mubr.f32.mxu0 %v1132
    %2206 = vmatmul.mubr.f32.gmra.mrb[0].mxu0 %v1131
    %v2207 = vpop.f32.mrb[0].mxu0
    %v2208 = vadd.f32 0.0, %v2207
    %v2209 = vpop.f32.mrb[0].mxu0
    %v2210 = vadd.f32 0.0, %v2209
    %2211 = vdwg.mxu0
    %2212 = vmatprep.subr.mxu0 %v1396
    %2213 = vmatpush1.msra.mxu0 %v1395
    %2214 = vmatprep.subr.mxu0 %v1404
    %2215 = vmatpush1.msra.mxu0 %v1403
    %2216 = vmatprep.subr.mxu0 %v1412
    %2217 = vmatpush1.msra.mxu0 %v1411
    %2218 = vmatprep.subr.mxu0 %v1420
    %2219 = vmatpush1.msra.mxu0 %v1419
    %2220 = vmatprep.subr.mxu0 %v1428
    %2221 = vmatpush1.msra.mxu0 %v1427
    %2222 = vmatprep.subr.mxu0 %v1436
    %2223 = vmatpush1.msra.mxu0 %v1435
    %2224 = vmatprep.subr.mxu0 %v1444
    %2225 = vmatpush1.msra.mxu0 %v1443
    %2226 = vmatprep.subr.mxu0 %v1452
    %2227 = vmatpush1.msra.mxu0 %v1451
    %2228 = vmatprep.subr.mxu0 %v1460
    %2229 = vmatpush1.msra.mxu0 %v1459
    %2230 = vmatprep.subr.mxu0 %v1468
    %2231 = vmatpush1.msra.mxu0 %v1467
    %2232 = vmatprep.subr.mxu0 %v1476
    %2233 = vmatpush1.msra.mxu0 %v1475
    %2234 = vmatprep.subr.mxu0 %v1484
    %2235 = vmatpush1.msra.mxu0 %v1483
    %2236 = vmatprep.subr.mxu0 %v1492
    %2237 = vmatpush1.msra.mxu0 %v1491
    %2238 = vmatprep.subr.mxu0 %v1500
    %2239 = vmatpush1.msra.mxu0 %v1499
    %2240 = vmatprep.subr.mxu0 %v1508
    %2241 = vmatpush1.msra.mxu0 %v1507
    %2242 = vmatprep.subr.mxu0 %v1516
    %2243 = vmatpush1.msra.mxu0 %v1515
    %2244 = vmatprep.subr.mxu0 %v1524
    %2245 = vmatpush1.msra.mxu0 %v1523
    %2246 = vmatprep.subr.mxu0 %v1532
    %2247 = vmatpush1.msra.mxu0 %v1531
    %2248 = vmatprep.subr.mxu0 %v1540
    %2249 = vmatpush1.msra.mxu0 %v1539
    %2250 = vmatprep.subr.mxu0 %v1548
    %2251 = vmatpush1.msra.mxu0 %v1547
    %2252 = vmatprep.subr.mxu0 %v1556
    %2253 = vmatpush1.msra.mxu0 %v1555
    %2254 = vmatprep.subr.mxu0 %v1564
    %2255 = vmatpush1.msra.mxu0 %v1563
    %2256 = vmatprep.subr.mxu0 %v1572
    %2257 = vmatpush1.msra.mxu0 %v1571
    %2258 = vmatprep.subr.mxu0 %v1580
    %2259 = vmatpush1.msra.mxu0 %v1579
    %2260 = vmatprep.subr.mxu0 %v1588
    %2261 = vmatpush1.msra.mxu0 %v1587
    %2262 = vmatprep.subr.mxu0 %v1596
    %2263 = vmatpush1.msra.mxu0 %v1595
    %2264 = vmatprep.subr.mxu0 %v1604
    %2265 = vmatpush1.msra.mxu0 %v1603
    %2266 = vmatprep.subr.mxu0 %v1612
    %2267 = vmatpush1.msra.mxu0 %v1611
    %2268 = vmatprep.subr.mxu0 %v1620
    %2269 = vmatpush1.msra.mxu0 %v1619
    %2270 = vmatprep.subr.mxu0 %v1628
    %2271 = vmatpush1.msra.mxu0 %v1627
    %2272 = vmatprep.subr.mxu0 %v1636
    %2273 = vmatpush1.msra.mxu0 %v1635
    %2274 = vmatprep.subr.mxu0 %v1644
    %2275 = vmatpush1.msra.mxu0 %v1643
    %2276 = vmatprep.mubr.f32.mxu0 %v1106
    %2277 = vmatmul.mubr.f32.gmra.mrb[0].mxu0 %v1105
    %v2278 = vpop.f32.mrb[0].mxu0
    %v2279 = vadd.f32 %v2166, %v2278
    %v2280 = vpop.f32.mrb[0].mxu0
    %v2281 = vadd.f32 %v2168, %v2280
    %2282 = vmatprep.mubr.f32.mxu0 %v1110
    %2283 = vmatmul.mubr.f32.gmra.mrb[0].mxu0 %v1109
    %v2284 = vpop.f32.mrb[0].mxu0
    %v2285 = vadd.f32 %v2172, %v2284
    %v2286 = vpop.f32.mrb[0].mxu0
    %v2287 = vadd.f32 %v2174, %v2286
    %2288 = vmatprep.mubr.f32.mxu0 %v1114
    %2289 = vmatmul.mubr.f32.gmra.mrb[0].mxu0 %v1113
    %v2290 = vpop.f32.mrb[0].mxu0
    %v2291 = vadd.f32 %v2178, %v2290
    %v2292 = vpop.f32.mrb[0].mxu0
    %v2293 = vadd.f32 %v2180, %v2292
    %2294 = vmatprep.mubr.f32.mxu0 %v1118
    %2295 = vmatmul.mubr.f32.gmra.mrb[0].mxu0 %v1117
    %v2296 = vpop.f32.mrb[0].mxu0
    %v2297 = vadd.f32 %v2184, %v2296
    %v2298 = vpop.f32.mrb[0].mxu0
    %v2299 = vadd.f32 %v2186, %v2298
    %2300 = vmatprep.mubr.f32.mxu0 %v1122
    %2301 = vmatmul.mubr.f32.gmra.mrb[0].mxu0 %v1121
    %v2302 = vpop.f32.mrb[0].mxu0
    %v2303 = vadd.f32 %v2190, %v2302
    %v2304 = vpop.f32.mrb[0].mxu0
    %v2305 = vadd.f32 %v2192, %v2304
    %2306 = vmatprep.mubr.f32.mxu0 %v1126
    %2307 = vmatmul.mubr.f32.gmra.mrb[0].mxu0 %v1125
    %v2308 = vpop.f32.mrb[0].mxu0
    %v2309 = vadd.f32 %v2196, %v2308
    %v2310 = vpop.f32.mrb[0].mxu0
    %v2311 = vadd.f32 %v2198, %v2310
    %2312 = vmatprep.mubr.f32.mxu0 %v1130
    %2313 = vmatmul.mubr.f32.gmra.mrb[0].mxu0 %v1129
    %v2314 = vpop.f32.mrb[0].mxu0
    %v2315 = vadd.f32 %v2202, %v2314
    %v2316 = vpop.f32.mrb[0].mxu0
    %v2317 = vadd.f32 %v2204, %v2316
    %2318 = vmatprep.mubr.f32.mxu0 %v1134
    %2319 = vmatmul.mubr.f32.gmra.mrb[0].mxu0 %v1133
    %v2320 = vpop.f32.mrb[0].mxu0
    %v2321 = vadd.f32 %v2208, %v2320
    %v2322 = vpop.f32.mrb[0].mxu0
    %v2323 = vadd.f32 %v2210, %v2322
    %2324 = vdwg.mxu0
    %2325 = vmatprep.subr.mxu0 %v1142
    %2326 = vmatpush1.msra.mxu0 %v1141
    %2327 = vmatprep.subr.mxu0 %v1150
    %2328 = vmatpush1.msra.mxu0 %v1149
    %2329 = vmatprep.subr.mxu0 %v1158
    %2330 = vmatpush1.msra.mxu0 %v1157
    %2331 = vmatprep.subr.mxu0 %v1166
    %2332 = vmatpush1.msra.mxu0 %v1165
    %2333 = vmatprep.subr.mxu0 %v1174
    %2334 = vmatpush1.msra.mxu0 %v1173
    %2335 = vmatprep.subr.mxu0 %v1182
    %2336 = vmatpush1.msra.mxu0 %v1181
    %2337 = vmatprep.subr.mxu0 %v1190
    %2338 = vmatpush1.msra.mxu0 %v1189
    %2339 = vmatprep.subr.mxu0 %v1198
    %2340 = vmatpush1.msra.mxu0 %v1197
    %2341 = vmatprep.subr.mxu0 %v1206
    %2342 = vmatpush1.msra.mxu0 %v1205
    %2343 = vmatprep.subr.mxu0 %v1214
    %2344 = vmatpush1.msra.mxu0 %v1213
    %2345 = vmatprep.subr.mxu0 %v1222
    %2346 = vmatpush1.msra.mxu0 %v1221
    %2347 = vmatprep.subr.mxu0 %v1230
    %2348 = vmatpush1.msra.mxu0 %v1229
    %2349 = vmatprep.subr.mxu0 %v1238
    %2350 = vmatpush1.msra.mxu0 %v1237
    %2351 = vmatprep.subr.mxu0 %v1246
    %2352 = vmatpush1.msra.mxu0 %v1245
    %2353 = vmatprep.subr.mxu0 %v1254
    %2354 = vmatpush1.msra.mxu0 %v1253
    %2355 = vmatprep.subr.mxu0 %v1262
    %2356 = vmatpush1.msra.mxu0 %v1261
    %2357 = vmatprep.subr.mxu0 %v1270
    %2358 = vmatpush1.msra.mxu0 %v1269
    %2359 = vmatprep.subr.mxu0 %v1278
    %2360 = vmatpush1.msra.mxu0 %v1277
    %2361 = vmatprep.subr.mxu0 %v1286
    %2362 = vmatpush1.msra.mxu0 %v1285
    %2363 = vmatprep.subr.mxu0 %v1294
    %2364 = vmatpush1.msra.mxu0 %v1293
    %2365 = vmatprep.subr.mxu0 %v1302
    %2366 = vmatpush1.msra.mxu0 %v1301
    %2367 = vmatprep.subr.mxu0 %v1310
    %2368 = vmatpush1.msra.mxu0 %v1309
    %2369 = vmatprep.subr.mxu0 %v1318
    %2370 = vmatpush1.msra.mxu0 %v1317
    %2371 = vmatprep.subr.mxu0 %v1326
    %2372 = vmatpush1.msra.mxu0 %v1325
    %2373 = vmatprep.subr.mxu0 %v1334
    %2374 = vmatpush1.msra.mxu0 %v1333
    %2375 = vmatprep.subr.mxu0 %v1342
    %2376 = vmatpush1.msra.mxu0 %v1341
    %2377 = vmatprep.subr.mxu0 %v1350
    %2378 = vmatpush1.msra.mxu0 %v1349
    %2379 = vmatprep.subr.mxu0 %v1358
    %2380 = vmatpush1.msra.mxu0 %v1357
    %2381 = vmatprep.subr.mxu0 %v1366
    %2382 = vmatpush1.msra.mxu0 %v1365
    %2383 = vmatprep.subr.mxu0 %v1374
    %2384 = vmatpush1.msra.mxu0 %v1373
    %2385 = vmatprep.subr.mxu0 %v1382
    %2386 = vmatpush1.msra.mxu0 %v1381
    %2387 = vmatprep.subr.mxu0 %v1390
    %2388 = vmatpush1.msra.mxu0 %v1389
    %2389 = vmatprep.mubr.f32.mxu0 %v1104
    %2390 = vmatmul.mubr.f32.gmra.mrb[0].mxu0 %v1103
    %v2391 = vpop.f32.mrb[0].mxu0
    %v2392 = vadd.f32 0.0, %v2391
    %v2393 = vpop.f32.mrb[0].mxu0
    %v2394 = vadd.f32 0.0, %v2393
    %2395 = vmatprep.mubr.f32.mxu0 %v1108
    %2396 = vmatmul.mubr.f32.gmra.mrb[0].mxu0 %v1107
    %v2397 = vpop.f32.mrb[0].mxu0
    %v2398 = vadd.f32 0.0, %v2397
    %v2399 = vpop.f32.mrb[0].mxu0
    %v2400 = vadd.f32 0.0, %v2399
    %2401 = vmatprep.mubr.f32.mxu0 %v1112
    %2402 = vmatmul.mubr.f32.gmra.mrb[0].mxu0 %v1111
    %v2403 = vpop.f32.mrb[0].mxu0
    %v2404 = vadd.f32 0.0, %v2403
    %v2405 = vpop.f32.mrb[0].mxu0
    %v2406 = vadd.f32 0.0, %v2405
    %2407 = vmatprep.mubr.f32.mxu0 %v1116
    %2408 = vmatmul.mubr.f32.gmra.mrb[0].mxu0 %v1115
    %v2409 = vpop.f32.mrb[0].mxu0
    %v2410 = vadd.f32 0.0, %v2409
    %v2411 = vpop.f32.mrb[0].mxu0
    %v2412 = vadd.f32 0.0, %v2411
    %2413 = vmatprep.mubr.f32.mxu0 %v1120
    %2414 = vmatmul.mubr.f32.gmra.mrb[0].mxu0 %v1119
    %v2415 = vpop.f32.mrb[0].mxu0
    %v2416 = vadd.f32 0.0, %v2415
    %v2417 = vpop.f32.mrb[0].mxu0
    %v2418 = vadd.f32 0.0, %v2417
    %2419 = vmatprep.mubr.f32.mxu0 %v1124
    %2420 = vmatmul.mubr.f32.gmra.mrb[0].mxu0 %v1123
    %v2421 = vpop.f32.mrb[0].mxu0
    %v2422 = vadd.f32 0.0, %v2421
    %v2423 = vpop.f32.mrb[0].mxu0
    %v2424 = vadd.f32 0.0, %v2423
    %2425 = vmatprep.mubr.f32.mxu0 %v1128
    %2426 = vmatmul.mubr.f32.gmra.mrb[0].mxu0 %v1127
    %v2427 = vpop.f32.mrb[0].mxu0
    %v2428 = vadd.f32 0.0, %v2427
    %v2429 = vpop.f32.mrb[0].mxu0
    %v2430 = vadd.f32 0.0, %v2429
    %2431 = vmatprep.mubr.f32.mxu0 %v1132
    %2432 = vmatmul.mubr.f32.gmra.mrb[0].mxu0 %v1131
    %v2433 = vpop.f32.mrb[0].mxu0
    %v2434 = vadd.f32 0.0, %v2433
    %v2435 = vpop.f32.mrb[0].mxu0
    %v2436 = vadd.f32 0.0, %v2435
    %2437 = vdwg.mxu0
    %2438 = vmatprep.subr.mxu0 %v1398
    %2439 = vmatpush1.msra.mxu0 %v1397
    %2440 = vmatprep.subr.mxu0 %v1406
    %2441 = vmatpush1.msra.mxu0 %v1405
    %2442 = vmatprep.subr.mxu0 %v1414
    %2443 = vmatpush1.msra.mxu0 %v1413
    %2444 = vmatprep.subr.mxu0 %v1422
    %2445 = vmatpush1.msra.mxu0 %v1421
    %2446 = vmatprep.subr.mxu0 %v1430
    %2447 = vmatpush1.msra.mxu0 %v1429
    %2448 = vmatprep.subr.mxu0 %v1438
    %2449 = vmatpush1.msra.mxu0 %v1437
    %2450 = vmatprep.subr.mxu0 %v1446
    %2451 = vmatpush1.msra.mxu0 %v1445
    %2452 = vmatprep.subr.mxu0 %v1454
    %2453 = vmatpush1.msra.mxu0 %v1453
    %2454 = vmatprep.subr.mxu0 %v1462
    %2455 = vmatpush1.msra.mxu0 %v1461
    %2456 = vmatprep.subr.mxu0 %v1470
    %2457 = vmatpush1.msra.mxu0 %v1469
    %2458 = vmatprep.subr.mxu0 %v1478
    %2459 = vmatpush1.msra.mxu0 %v1477
    %2460 = vmatprep.subr.mxu0 %v1486
    %2461 = vmatpush1.msra.mxu0 %v1485
    %2462 = vmatprep.subr.mxu0 %v1494
    %2463 = vmatpush1.msra.mxu0 %v1493
    %2464 = vmatprep.subr.mxu0 %v1502
    %2465 = vmatpush1.msra.mxu0 %v1501
    %2466 = vmatprep.subr.mxu0 %v1510
    %2467 = vmatpush1.msra.mxu0 %v1509
    %2468 = vmatprep.subr.mxu0 %v1518
    %2469 = vmatpush1.msra.mxu0 %v1517
    %2470 = vmatprep.subr.mxu0 %v1526
    %2471 = vmatpush1.msra.mxu0 %v1525
    %2472 = vmatprep.subr.mxu0 %v1534
    %2473 = vmatpush1.msra.mxu0 %v1533
    %2474 = vmatprep.subr.mxu0 %v1542
    %2475 = vmatpush1.msra.mxu0 %v1541
    %2476 = vmatprep.subr.mxu0 %v1550
    %2477 = vmatpush1.msra.mxu0 %v1549
    %2478 = vmatprep.subr.mxu0 %v1558
    %2479 = vmatpush1.msra.mxu0 %v1557
    %2480 = vmatprep.subr.mxu0 %v1566
    %2481 = vmatpush1.msra.mxu0 %v1565
    %2482 = vmatprep.subr.mxu0 %v1574
    %2483 = vmatpush1.msra.mxu0 %v1573
    %2484 = vmatprep.subr.mxu0 %v1582
    %2485 = vmatpush1.msra.mxu0 %v1581
    %2486 = vmatprep.subr.mxu0 %v1590
    %2487 = vmatpush1.msra.mxu0 %v1589
    %2488 = vmatprep.subr.mxu0 %v1598
    %2489 = vmatpush1.msra.mxu0 %v1597
    %2490 = vmatprep.subr.mxu0 %v1606
    %2491 = vmatpush1.msra.mxu0 %v1605
    %2492 = vmatprep.subr.mxu0 %v1614
    %2493 = vmatpush1.msra.mxu0 %v1613
    %2494 = vmatprep.subr.mxu0 %v1622
    %2495 = vmatpush1.msra.mxu0 %v1621
    %2496 = vmatprep.subr.mxu0 %v1630
    %2497 = vmatpush1.msra.mxu0 %v1629
    %2498 = vmatprep.subr.mxu0 %v1638
    %2499 = vmatpush1.msra.mxu0 %v1637
    %2500 = vmatprep.subr.mxu0 %v1646
    %2501 = vmatpush1.msra.mxu0 %v1645
    %2502 = vmatprep.mubr.f32.mxu0 %v1106
    %2503 = vmatmul.mubr.f32.gmra.mrb[0].mxu0 %v1105
    %v2504 = vpop.f32.mrb[0].mxu0
    %v2505 = vadd.f32 %v2392, %v2504
    %v2506 = vpop.f32.mrb[0].mxu0
    %v2507 = vadd.f32 %v2394, %v2506
    %2508 = vmatprep.mubr.f32.mxu0 %v1110
    %2509 = vmatmul.mubr.f32.gmra.mrb[0].mxu0 %v1109
    %v2510 = vpop.f32.mrb[0].mxu0
    %v2511 = vadd.f32 %v2398, %v2510
    %v2512 = vpop.f32.mrb[0].mxu0
    %v2513 = vadd.f32 %v2400, %v2512
    %2514 = vmatprep.mubr.f32.mxu0 %v1114
    %2515 = vmatmul.mubr.f32.gmra.mrb[0].mxu0 %v1113
    %v2516 = vpop.f32.mrb[0].mxu0
    %v2517 = vadd.f32 %v2404, %v2516
    %v2518 = vpop.f32.mrb[0].mxu0
    %v2519 = vadd.f32 %v2406, %v2518
    %2520 = vmatprep.mubr.f32.mxu0 %v1118
    %2521 = vmatmul.mubr.f32.gmra.mrb[0].mxu0 %v1117
    %v2522 = vpop.f32.mrb[0].mxu0
    %v2523 = vadd.f32 %v2410, %v2522
    %v2524 = vpop.f32.mrb[0].mxu0
    %v2525 = vadd.f32 %v2412, %v2524
    %2526 = vmatprep.mubr.f32.mxu0 %v1122
    %2527 = vmatmul.mubr.f32.gmra.mrb[0].mxu0 %v1121
    %v2528 = vpop.f32.mrb[0].mxu0
    %v2529 = vadd.f32 %v2416, %v2528
    %v2530 = vpop.f32.mrb[0].mxu0
    %v2531 = vadd.f32 %v2418, %v2530
    %2532 = vmatprep.mubr.f32.mxu0 %v1126
    %2533 = vmatmul.mubr.f32.gmra.mrb[0].mxu0 %v1125
    %v2534 = vpop.f32.mrb[0].mxu0
    %v2535 = vadd.f32 %v2422, %v2534
    %v2536 = vpop.f32.mrb[0].mxu0
    %v2537 = vadd.f32 %v2424, %v2536
    %2538 = vmatprep.mubr.f32.mxu0 %v1130
    %2539 = vmatmul.mubr.f32.gmra.mrb[0].mxu0 %v1129
    %v2540 = vpop.f32.mrb[0].mxu0
    %v2541 = vadd.f32 %v2428, %v2540
    %v2542 = vpop.f32.mrb[0].mxu0
    %v2543 = vadd.f32 %v2430, %v2542
    %2544 = vmatprep.mubr.f32.mxu0 %v1134
    %2545 = vmatmul.mubr.f32.gmra.mrb[0].mxu0 %v1133
    %v2546 = vpop.f32.mrb[0].mxu0
    %v2547 = vadd.f32 %v2434, %v2546
    %v2548 = vpop.f32.mrb[0].mxu0
    %v2549 = vadd.f32 %v2436, %v2548
    %2550 = vdwg.mxu0
    %v2551 = vld [vmem:[#allocation17] sm:$0xff]
    %v2553 = vlaneseq
    %v2554 = vshrl.u32 %v2553, 7
    %v2555 = vsub.s32 0, %v2554
    %v2556 = vrot.slane %v2551, %v2555
    %v2557 = vlaneseq
    %v2558 = vshrl.u32 %v2557, 7
    %v2559 = vsub.s32 1, %v2558
    %v2560 = vrot.slane %v2551, %v2559
    %v2561 = vlaneseq
    %v2562 = vshrl.u32 %v2561, 7
    %v2563 = vsub.s32 2, %v2562
    %v2564 = vrot.slane %v2551, %v2563
    %v2565 = vlaneseq
    %v2566 = vshrl.u32 %v2565, 7
    %v2567 = vsub.s32 3, %v2566
    %v2568 = vrot.slane %v2551, %v2567
    %v2569 = vlaneseq
    %v2570 = vshrl.u32 %v2569, 7
    %v2571 = vsub.s32 4, %v2570
    %v2572 = vrot.slane %v2551, %v2571
    %v2573 = vlaneseq
    %v2574 = vshrl.u32 %v2573, 7
    %v2575 = vsub.s32 5, %v2574
    %v2576 = vrot.slane %v2551, %v2575
    %v2577 = vlaneseq
    %v2578 = vshrl.u32 %v2577, 7
    %v2579 = vsub.s32 6, %v2578
    %v2580 = vrot.slane %v2551, %v2579
    %v2581 = vlaneseq
    %v2582 = vshrl.u32 %v2581, 7
    %v2583 = vsub.s32 7, %v2582
    %v2584 = vrot.slane %v2551, %v2583
    %v2593 = vmul.f32 %v1827, %v2556
    %v2594 = vmul.f32 %v1829, %v2560
    %v2595 = vmul.f32 %v2053, %v2564
    %v2596 = vmul.f32 %v2055, %v2568
    %v2597 = vmul.f32 %v2279, %v2572
    %v2598 = vmul.f32 %v2281, %v2576
    %v2599 = vmul.f32 %v2505, %v2580
    %v2600 = vmul.f32 %v2507, %v2584
    %v2601 = vmul.f32 %v1833, %v2556
    %v2602 = vmul.f32 %v1835, %v2560
    %v2603 = vmul.f32 %v2059, %v2564
    %v2604 = vmul.f32 %v2061, %v2568
    %v2605 = vmul.f32 %v2285, %v2572
    %v2606 = vmul.f32 %v2287, %v2576
    %v2607 = vmul.f32 %v2511, %v2580
    %v2608 = vmul.f32 %v2513, %v2584
    %v2609 = vmul.f32 %v1839, %v2556
    %v2610 = vmul.f32 %v1841, %v2560
    %v2611 = vmul.f32 %v2065, %v2564
    %v2612 = vmul.f32 %v2067, %v2568
    %v2613 = vmul.f32 %v2291, %v2572
    %v2614 = vmul.f32 %v2293, %v2576
    %v2615 = vmul.f32 %v2517, %v2580
    %v2616 = vmul.f32 %v2519, %v2584
    %v2617 = vmul.f32 %v1845, %v2556
    %v2618 = vmul.f32 %v1847, %v2560
    %v2619 = vmul.f32 %v2071, %v2564
    %v2620 = vmul.f32 %v2073, %v2568
    %v2621 = vmul.f32 %v2297, %v2572
    %v2622 = vmul.f32 %v2299, %v2576
    %v2623 = vmul.f32 %v2523, %v2580
    %v2624 = vmul.f32 %v2525, %v2584
    %v2625 = vmul.f32 %v1851, %v2556
    %v2626 = vmul.f32 %v1853, %v2560
    %v2627 = vmul.f32 %v2077, %v2564
    %v2628 = vmul.f32 %v2079, %v2568
    %v2629 = vmul.f32 %v2303, %v2572
    %v2630 = vmul.f32 %v2305, %v2576
    %v2631 = vmul.f32 %v2529, %v2580
    %v2632 = vmul.f32 %v2531, %v2584
    %v2633 = vmul.f32 %v1857, %v2556
    %v2634 = vmul.f32 %v1859, %v2560
    %v2635 = vmul.f32 %v2083, %v2564
    %v2636 = vmul.f32 %v2085, %v2568
    %v2637 = vmul.f32 %v2309, %v2572
    %v2638 = vmul.f32 %v2311, %v2576
    %v2639 = vmul.f32 %v2535, %v2580
    %v2640 = vmul.f32 %v2537, %v2584
    %v2641 = vmul.f32 %v1863, %v2556
    %v2642 = vmul.f32 %v1865, %v2560
    %v2643 = vmul.f32 %v2089, %v2564
    %v2644 = vmul.f32 %v2091, %v2568
    %v2645 = vmul.f32 %v2315, %v2572
    %v2646 = vmul.f32 %v2317, %v2576
    %v2647 = vmul.f32 %v2541, %v2580
    %v2648 = vmul.f32 %v2543, %v2584
    %v2649 = vmul.f32 %v1869, %v2556
    %v2650 = vmul.f32 %v1871, %v2560
    %v2651 = vmul.f32 %v2095, %v2564
    %v2652 = vmul.f32 %v2097, %v2568
    %v2653 = vmul.f32 %v2321, %v2572
    %v2654 = vmul.f32 %v2323, %v2576
    %v2655 = vmul.f32 %v2547, %v2580
    %v2656 = vmul.f32 %v2549, %v2584
    %v2657 = vld [vmem:[#allocation19] sm:$0xff]
    %v2659 = vlaneseq
    %v2660 = vshrl.u32 %v2659, 7
    %v2661 = vsub.s32 0, %v2660
    %v2662 = vrot.slane %v2657, %v2661
    %v2663 = vlaneseq
    %v2664 = vshrl.u32 %v2663, 7
    %v2665 = vsub.s32 1, %v2664
    %v2666 = vrot.slane %v2657, %v2665
    %v2667 = vlaneseq
    %v2668 = vshrl.u32 %v2667, 7
    %v2669 = vsub.s32 2, %v2668
    %v2670 = vrot.slane %v2657, %v2669
    %v2671 = vlaneseq
    %v2672 = vshrl.u32 %v2671, 7
    %v2673 = vsub.s32 3, %v2672
    %v2674 = vrot.slane %v2657, %v2673
    %v2675 = vlaneseq
    %v2676 = vshrl.u32 %v2675, 7
    %v2677 = vsub.s32 4, %v2676
    %v2678 = vrot.slane %v2657, %v2677
    %v2679 = vlaneseq
    %v2680 = vshrl.u32 %v2679, 7
    %v2681 = vsub.s32 5, %v2680
    %v2682 = vrot.slane %v2657, %v2681
    %v2683 = vlaneseq
    %v2684 = vshrl.u32 %v2683, 7
    %v2685 = vsub.s32 6, %v2684
    %v2686 = vrot.slane %v2657, %v2685
    %v2687 = vlaneseq
    %v2688 = vshrl.u32 %v2687, 7
    %v2689 = vsub.s32 7, %v2688
    %v2690 = vrot.slane %v2657, %v2689
    %v2699 = vadd.f32 %v2593, %v2662
    %v2700 = vadd.f32 %v2594, %v2666
    %v2701 = vadd.f32 %v2595, %v2670
    %v2702 = vadd.f32 %v2596, %v2674
    %v2703 = vadd.f32 %v2597, %v2678
    %v2704 = vadd.f32 %v2598, %v2682
    %v2705 = vadd.f32 %v2599, %v2686
    %v2706 = vadd.f32 %v2600, %v2690
    %v2707 = vadd.f32 %v2601, %v2662
    %v2708 = vadd.f32 %v2602, %v2666
    %v2709 = vadd.f32 %v2603, %v2670
    %v2710 = vadd.f32 %v2604, %v2674
    %v2711 = vadd.f32 %v2605, %v2678
    %v2712 = vadd.f32 %v2606, %v2682
    %v2713 = vadd.f32 %v2607, %v2686
    %v2714 = vadd.f32 %v2608, %v2690
    %v2715 = vadd.f32 %v2609, %v2662
    %v2716 = vadd.f32 %v2610, %v2666
    %v2717 = vadd.f32 %v2611, %v2670
    %v2718 = vadd.f32 %v2612, %v2674
    %v2719 = vadd.f32 %v2613, %v2678
    %v2720 = vadd.f32 %v2614, %v2682
    %v2721 = vadd.f32 %v2615, %v2686
    %v2722 = vadd.f32 %v2616, %v2690
    %v2723 = vadd.f32 %v2617, %v2662
    %v2724 = vadd.f32 %v2618, %v2666
    %v2725 = vadd.f32 %v2619, %v2670
    %v2726 = vadd.f32 %v2620, %v2674
    %v2727 = vadd.f32 %v2621, %v2678
    %v2728 = vadd.f32 %v2622, %v2682
    %v2729 = vadd.f32 %v2623, %v2686
    %v2730 = vadd.f32 %v2624, %v2690
    %v2731 = vadd.f32 %v2625, %v2662
    %v2732 = vadd.f32 %v2626, %v2666
    %v2733 = vadd.f32 %v2627, %v2670
    %v2734 = vadd.f32 %v2628, %v2674
    %v2735 = vadd.f32 %v2629, %v2678
    %v2736 = vadd.f32 %v2630, %v2682
    %v2737 = vadd.f32 %v2631, %v2686
    %v2738 = vadd.f32 %v2632, %v2690
    %v2739 = vadd.f32 %v2633, %v2662
    %v2740 = vadd.f32 %v2634, %v2666
    %v2741 = vadd.f32 %v2635, %v2670
    %v2742 = vadd.f32 %v2636, %v2674
    %v2743 = vadd.f32 %v2637, %v2678
    %v2744 = vadd.f32 %v2638, %v2682
    %v2745 = vadd.f32 %v2639, %v2686
    %v2746 = vadd.f32 %v2640, %v2690
    %v2747 = vadd.f32 %v2641, %v2662
    %v2748 = vadd.f32 %v2642, %v2666
    %v2749 = vadd.f32 %v2643, %v2670
    %v2750 = vadd.f32 %v2644, %v2674
    %v2751 = vadd.f32 %v2645, %v2678
    %v2752 = vadd.f32 %v2646, %v2682
    %v2753 = vadd.f32 %v2647, %v2686
    %v2754 = vadd.f32 %v2648, %v2690
    %v2755 = vadd.f32 %v2649, %v2662
    %v2756 = vadd.f32 %v2650, %v2666
    %v2757 = vadd.f32 %v2651, %v2670
    %v2758 = vadd.f32 %v2652, %v2674
    %v2759 = vadd.f32 %v2653, %v2678
    %v2760 = vadd.f32 %v2654, %v2682
    %v2761 = vadd.f32 %v2655, %v2686
    %v2762 = vadd.f32 %v2656, %v2690
    %v2763 = vmul.f32 %v2699, 0.2
    %v2764 = vmul.f32 %v2700, 0.2
    %v2765 = vmul.f32 %v2701, 0.2
    %v2766 = vmul.f32 %v2702, 0.2
    %v2767 = vmul.f32 %v2703, 0.2
    %v2768 = vmul.f32 %v2704, 0.2
    %v2769 = vmul.f32 %v2705, 0.2
    %v2770 = vmul.f32 %v2706, 0.2
    %v2771 = vmul.f32 %v2707, 0.2
    %v2772 = vmul.f32 %v2708, 0.2
    %v2773 = vmul.f32 %v2709, 0.2
    %v2774 = vmul.f32 %v2710, 0.2
    %v2775 = vmul.f32 %v2711, 0.2
    %v2776 = vmul.f32 %v2712, 0.2
    %v2777 = vmul.f32 %v2713, 0.2
    %v2778 = vmul.f32 %v2714, 0.2
    %v2779 = vmul.f32 %v2715, 0.2
    %v2780 = vmul.f32 %v2716, 0.2
    %v2781 = vmul.f32 %v2717, 0.2
    %v2782 = vmul.f32 %v2718, 0.2
    %v2783 = vmul.f32 %v2719, 0.2
    %v2784 = vmul.f32 %v2720, 0.2
    %v2785 = vmul.f32 %v2721, 0.2
    %v2786 = vmul.f32 %v2722, 0.2
    %v2787 = vmul.f32 %v2723, 0.2
    %v2788 = vmul.f32 %v2724, 0.2
    %v2789 = vmul.f32 %v2725, 0.2
    %v2790 = vmul.f32 %v2726, 0.2
    %v2791 = vmul.f32 %v2727, 0.2
    %v2792 = vmul.f32 %v2728, 0.2
    %v2793 = vmul.f32 %v2729, 0.2
    %v2794 = vmul.f32 %v2730, 0.2
    %v2795 = vmul.f32 %v2731, 0.2
    %v2796 = vmul.f32 %v2732, 0.2
    %v2797 = vmul.f32 %v2733, 0.2
    %v2798 = vmul.f32 %v2734, 0.2
    %v2799 = vmul.f32 %v2735, 0.2
    %v2800 = vmul.f32 %v2736, 0.2
    %v2801 = vmul.f32 %v2737, 0.2
    %v2802 = vmul.f32 %v2738, 0.2
    %v2803 = vmul.f32 %v2739, 0.2
    %v2804 = vmul.f32 %v2740, 0.2
    %v2805 = vmul.f32 %v2741, 0.2
    %v2806 = vmul.f32 %v2742, 0.2
    %v2807 = vmul.f32 %v2743, 0.2
    %v2808 = vmul.f32 %v2744, 0.2
    %v2809 = vmul.f32 %v2745, 0.2
    %v2810 = vmul.f32 %v2746, 0.2
    %v2811 = vmul.f32 %v2747, 0.2
    %v2812 = vmul.f32 %v2748, 0.2
    %v2813 = vmul.f32 %v2749, 0.2
    %v2814 = vmul.f32 %v2750, 0.2
    %v2815 = vmul.f32 %v2751, 0.2
    %v2816 = vmul.f32 %v2752, 0.2
    %v2817 = vmul.f32 %v2753, 0.2
    %v2818 = vmul.f32 %v2754, 0.2
    %v2819 = vmul.f32 %v2755, 0.2
    %v2820 = vmul.f32 %v2756, 0.2
    %v2821 = vmul.f32 %v2757, 0.2
    %v2822 = vmul.f32 %v2758, 0.2
    %v2823 = vmul.f32 %v2759, 0.2
    %v2824 = vmul.f32 %v2760, 0.2
    %v2825 = vmul.f32 %v2761, 0.2
    %v2826 = vmul.f32 %v2762, 0.2
    %v2827 = vmax.f32 %v2699, %v2763
    %v2828 = vmax.f32 %v2700, %v2764
    %v2829 = vmax.f32 %v2701, %v2765
    %v2830 = vmax.f32 %v2702, %v2766
    %v2831 = vmax.f32 %v2703, %v2767
    %v2832 = vmax.f32 %v2704, %v2768
    %v2833 = vmax.f32 %v2705, %v2769
    %v2834 = vmax.f32 %v2706, %v2770
    %v2835 = vmax.f32 %v2707, %v2771
    %v2836 = vmax.f32 %v2708, %v2772
    %v2837 = vmax.f32 %v2709, %v2773
    %v2838 = vmax.f32 %v2710, %v2774
    %v2839 = vmax.f32 %v2711, %v2775
    %v2840 = vmax.f32 %v2712, %v2776
    %v2841 = vmax.f32 %v2713, %v2777
    %v2842 = vmax.f32 %v2714, %v2778
    %v2843 = vmax.f32 %v2715, %v2779
    %v2844 = vmax.f32 %v2716, %v2780
    %v2845 = vmax.f32 %v2717, %v2781
    %v2846 = vmax.f32 %v2718, %v2782
    %v2847 = vmax.f32 %v2719, %v2783
    %v2848 = vmax.f32 %v2720, %v2784
    %v2849 = vmax.f32 %v2721, %v2785
    %v2850 = vmax.f32 %v2722, %v2786
    %v2851 = vmax.f32 %v2723, %v2787
    %v2852 = vmax.f32 %v2724, %v2788
    %v2853 = vmax.f32 %v2725, %v2789
    %v2854 = vmax.f32 %v2726, %v2790
    %v2855 = vmax.f32 %v2727, %v2791
    %v2856 = vmax.f32 %v2728, %v2792
    %v2857 = vmax.f32 %v2729, %v2793
    %v2858 = vmax.f32 %v2730, %v2794
    %v2859 = vmax.f32 %v2731, %v2795
    %v2860 = vmax.f32 %v2732, %v2796
    %v2861 = vmax.f32 %v2733, %v2797
    %v2862 = vmax.f32 %v2734, %v2798
    %v2863 = vmax.f32 %v2735, %v2799
    %v2864 = vmax.f32 %v2736, %v2800
    %v2865 = vmax.f32 %v2737, %v2801
    %v2866 = vmax.f32 %v2738, %v2802
    %v2867 = vmax.f32 %v2739, %v2803
    %v2868 = vmax.f32 %v2740, %v2804
    %v2869 = vmax.f32 %v2741, %v2805
    %v2870 = vmax.f32 %v2742, %v2806
    %v2871 = vmax.f32 %v2743, %v2807
    %v2872 = vmax.f32 %v2744, %v2808
    %v2873 = vmax.f32 %v2745, %v2809
    %v2874 = vmax.f32 %v2746, %v2810
    %v2875 = vmax.f32 %v2747, %v2811
    %v2876 = vmax.f32 %v2748, %v2812
    %v2877 = vmax.f32 %v2749, %v2813
    %v2878 = vmax.f32 %v2750, %v2814
    %v2879 = vmax.f32 %v2751, %v2815
    %v2880 = vmax.f32 %v2752, %v2816
    %v2881 = vmax.f32 %v2753, %v2817
    %v2882 = vmax.f32 %v2754, %v2818
    %v2883 = vmax.f32 %v2755, %v2819
    %v2884 = vmax.f32 %v2756, %v2820
    %v2885 = vmax.f32 %v2757, %v2821
    %v2886 = vmax.f32 %v2758, %v2822
    %v2887 = vmax.f32 %v2759, %v2823
    %v2888 = vmax.f32 %v2760, %v2824
    %v2889 = vmax.f32 %v2761, %v2825
    %v2890 = vmax.f32 %v2762, %v2826
    %v2891 = vld [vmem:[#allocation20] sm:$0xff]
    %v2892 = vld [vmem:[#allocation20 + $0x8] sm:$0xff]
    %v2893 = vld [vmem:[#allocation20 + $0x10] sm:$0xff]
    %v2894 = vld [vmem:[#allocation20 + $0x18] sm:$0xff]
    %v2895 = vld [vmem:[#allocation20 + $0x20] sm:$0xff]
    %v2896 = vld [vmem:[#allocation20 + $0x28] sm:$0xff]
    %v2897 = vld [vmem:[#allocation20 + $0x30] sm:$0xff]
    %v2898 = vld [vmem:[#allocation20 + $0x38] sm:$0xff]
    %v2899 = vld [vmem:[#allocation20 + $0x40] sm:$0xff]
    %v2900 = vld [vmem:[#allocation20 + $0x48] sm:$0xff]
    %v2901 = vld [vmem:[#allocation20 + $0x50] sm:$0xff]
    %v2902 = vld [vmem:[#allocation20 + $0x58] sm:$0xff]
    %v2903 = vld [vmem:[#allocation20 + $0x60] sm:$0xff]
    %v2904 = vld [vmem:[#allocation20 + $0x68] sm:$0xff]
    %v2905 = vld [vmem:[#allocation20 + $0x70] sm:$0xff]
    %v2906 = vld [vmem:[#allocation20 + $0x78] sm:$0xff]
    %v2907 = vld [vmem:[#allocation20 + $0x80] sm:$0xff]
    %v2908 = vld [vmem:[#allocation20 + $0x88] sm:$0xff]
    %v2909 = vld [vmem:[#allocation20 + $0x90] sm:$0xff]
    %v2910 = vld [vmem:[#allocation20 + $0x98] sm:$0xff]
    %v2911 = vld [vmem:[#allocation20 + $0xa0] sm:$0xff]
    %v2912 = vld [vmem:[#allocation20 + $0xa8] sm:$0xff]
    %v2913 = vld [vmem:[#allocation20 + $0xb0] sm:$0xff]
    %v2914 = vld [vmem:[#allocation20 + $0xb8] sm:$0xff]
    %v2915 = vld [vmem:[#allocation20 + $0xc0] sm:$0xff]
    %v2916 = vld [vmem:[#allocation20 + $0xc8] sm:$0xff]
    %v2917 = vld [vmem:[#allocation20 + $0xd0] sm:$0xff]
    %v2918 = vld [vmem:[#allocation20 + $0xd8] sm:$0xff]
    %v2919 = vld [vmem:[#allocation20 + $0xe0] sm:$0xff]
    %v2920 = vld [vmem:[#allocation20 + $0xe8] sm:$0xff]
    %v2921 = vld [vmem:[#allocation20 + $0xf0] sm:$0xff]
    %v2922 = vld [vmem:[#allocation20 + $0xf8] sm:$0xff]
    %v2923 = vld [vmem:[#allocation20 + $0x100] sm:$0xff]
    %v2924 = vld [vmem:[#allocation20 + $0x108] sm:$0xff]
    %v2925 = vld [vmem:[#allocation20 + $0x110] sm:$0xff]
    %v2926 = vld [vmem:[#allocation20 + $0x118] sm:$0xff]
    %v2927 = vld [vmem:[#allocation20 + $0x120] sm:$0xff]
    %v2928 = vld [vmem:[#allocation20 + $0x128] sm:$0xff]
    %v2929 = vld [vmem:[#allocation20 + $0x130] sm:$0xff]
    %v2930 = vld [vmem:[#allocation20 + $0x138] sm:$0xff]
    %v2931 = vld [vmem:[#allocation20 + $0x140] sm:$0xff]
    %v2932 = vld [vmem:[#allocation20 + $0x148] sm:$0xff]
    %v2933 = vld [vmem:[#allocation20 + $0x150] sm:$0xff]
    %v2934 = vld [vmem:[#allocation20 + $0x158] sm:$0xff]
    %v2935 = vld [vmem:[#allocation20 + $0x160] sm:$0xff]
    %v2936 = vld [vmem:[#allocation20 + $0x168] sm:$0xff]
    %v2937 = vld [vmem:[#allocation20 + $0x170] sm:$0xff]
    %v2938 = vld [vmem:[#allocation20 + $0x178] sm:$0xff]
    %v2939 = vld [vmem:[#allocation20 + $0x180] sm:$0xff]
    %v2940 = vld [vmem:[#allocation20 + $0x188] sm:$0xff]
    %v2941 = vld [vmem:[#allocation20 + $0x190] sm:$0xff]
    %v2942 = vld [vmem:[#allocation20 + $0x198] sm:$0xff]
    %v2943 = vld [vmem:[#allocation20 + $0x1a0] sm:$0xff]
    %v2944 = vld [vmem:[#allocation20 + $0x1a8] sm:$0xff]
    %v2945 = vld [vmem:[#allocation20 + $0x1b0] sm:$0xff]
    %v2946 = vld [vmem:[#allocation20 + $0x1b8] sm:$0xff]
    %v2947 = vld [vmem:[#allocation20 + $0x1c0] sm:$0xff]
    %v2948 = vld [vmem:[#allocation20 + $0x1c8] sm:$0xff]
    %v2949 = vld [vmem:[#allocation20 + $0x1d0] sm:$0xff]
    %v2950 = vld [vmem:[#allocation20 + $0x1d8] sm:$0xff]
    %v2951 = vld [vmem:[#allocation20 + $0x1e0] sm:$0xff]
    %v2952 = vld [vmem:[#allocation20 + $0x1e8] sm:$0xff]
    %v2953 = vld [vmem:[#allocation20 + $0x1f0] sm:$0xff]
    %v2954 = vld [vmem:[#allocation20 + $0x1f8] sm:$0xff]
    %v2955 = vld [vmem:[#allocation20 + $0x200] sm:$0xff]
    %v2956 = vld [vmem:[#allocation20 + $0x208] sm:$0xff]
    %v2957 = vld [vmem:[#allocation20 + $0x210] sm:$0xff]
    %v2958 = vld [vmem:[#allocation20 + $0x218] sm:$0xff]
    %v2959 = vld [vmem:[#allocation20 + $0x220] sm:$0xff]
    %v2960 = vld [vmem:[#allocation20 + $0x228] sm:$0xff]
    %v2961 = vld [vmem:[#allocation20 + $0x230] sm:$0xff]
    %v2962 = vld [vmem:[#allocation20 + $0x238] sm:$0xff]
    %v2963 = vld [vmem:[#allocation20 + $0x240] sm:$0xff]
    %v2964 = vld [vmem:[#allocation20 + $0x248] sm:$0xff]
    %v2965 = vld [vmem:[#allocation20 + $0x250] sm:$0xff]
    %v2966 = vld [vmem:[#allocation20 + $0x258] sm:$0xff]
    %v2967 = vld [vmem:[#allocation20 + $0x260] sm:$0xff]
    %v2968 = vld [vmem:[#allocation20 + $0x268] sm:$0xff]
    %v2969 = vld [vmem:[#allocation20 + $0x270] sm:$0xff]
    %v2970 = vld [vmem:[#allocation20 + $0x278] sm:$0xff]
    %v2971 = vld [vmem:[#allocation20 + $0x280] sm:$0xff]
    %v2972 = vld [vmem:[#allocation20 + $0x288] sm:$0xff]
    %v2973 = vld [vmem:[#allocation20 + $0x290] sm:$0xff]
    %v2974 = vld [vmem:[#allocation20 + $0x298] sm:$0xff]
    %v2975 = vld [vmem:[#allocation20 + $0x2a0] sm:$0xff]
    %v2976 = vld [vmem:[#allocation20 + $0x2a8] sm:$0xff]
    %v2977 = vld [vmem:[#allocation20 + $0x2b0] sm:$0xff]
    %v2978 = vld [vmem:[#allocation20 + $0x2b8] sm:$0xff]
    %v2979 = vld [vmem:[#allocation20 + $0x2c0] sm:$0xff]
    %v2980 = vld [vmem:[#allocation20 + $0x2c8] sm:$0xff]
    %v2981 = vld [vmem:[#allocation20 + $0x2d0] sm:$0xff]
    %v2982 = vld [vmem:[#allocation20 + $0x2d8] sm:$0xff]
    %v2983 = vld [vmem:[#allocation20 + $0x2e0] sm:$0xff]
    %v2984 = vld [vmem:[#allocation20 + $0x2e8] sm:$0xff]
    %v2985 = vld [vmem:[#allocation20 + $0x2f0] sm:$0xff]
    %v2986 = vld [vmem:[#allocation20 + $0x2f8] sm:$0xff]
    %v2987 = vld [vmem:[#allocation20 + $0x300] sm:$0xff]
    %v2988 = vld [vmem:[#allocation20 + $0x308] sm:$0xff]
    %v2989 = vld [vmem:[#allocation20 + $0x310] sm:$0xff]
    %v2990 = vld [vmem:[#allocation20 + $0x318] sm:$0xff]
    %v2991 = vld [vmem:[#allocation20 + $0x320] sm:$0xff]
    %v2992 = vld [vmem:[#allocation20 + $0x328] sm:$0xff]
    %v2993 = vld [vmem:[#allocation20 + $0x330] sm:$0xff]
    %v2994 = vld [vmem:[#allocation20 + $0x338] sm:$0xff]
    %v2995 = vld [vmem:[#allocation20 + $0x340] sm:$0xff]
    %v2996 = vld [vmem:[#allocation20 + $0x348] sm:$0xff]
    %v2997 = vld [vmem:[#allocation20 + $0x350] sm:$0xff]
    %v2998 = vld [vmem:[#allocation20 + $0x358] sm:$0xff]
    %v2999 = vld [vmem:[#allocation20 + $0x360] sm:$0xff]
    %v3000 = vld [vmem:[#allocation20 + $0x368] sm:$0xff]
    %v3001 = vld [vmem:[#allocation20 + $0x370] sm:$0xff]
    %v3002 = vld [vmem:[#allocation20 + $0x378] sm:$0xff]
    %v3003 = vld [vmem:[#allocation20 + $0x380] sm:$0xff]
    %v3004 = vld [vmem:[#allocation20 + $0x388] sm:$0xff]
    %v3005 = vld [vmem:[#allocation20 + $0x390] sm:$0xff]
    %v3006 = vld [vmem:[#allocation20 + $0x398] sm:$0xff]
    %v3007 = vld [vmem:[#allocation20 + $0x3a0] sm:$0xff]
    %v3008 = vld [vmem:[#allocation20 + $0x3a8] sm:$0xff]
    %v3009 = vld [vmem:[#allocation20 + $0x3b0] sm:$0xff]
    %v3010 = vld [vmem:[#allocation20 + $0x3b8] sm:$0xff]
    %v3011 = vld [vmem:[#allocation20 + $0x3c0] sm:$0xff]
    %v3012 = vld [vmem:[#allocation20 + $0x3c8] sm:$0xff]
    %v3013 = vld [vmem:[#allocation20 + $0x3d0] sm:$0xff]
    %v3014 = vld [vmem:[#allocation20 + $0x3d8] sm:$0xff]
    %v3015 = vld [vmem:[#allocation20 + $0x3e0] sm:$0xff]
    %v3016 = vld [vmem:[#allocation20 + $0x3e8] sm:$0xff]
    %v3017 = vld [vmem:[#allocation20 + $0x3f0] sm:$0xff]
    %v3018 = vld [vmem:[#allocation20 + $0x3f8] sm:$0xff]
    %v3019 = vld [vmem:[#allocation20 + $0x400] sm:$0xff]
    %v3020 = vld [vmem:[#allocation20 + $0x408] sm:$0xff]
    %v3021 = vld [vmem:[#allocation20 + $0x410] sm:$0xff]
    %v3022 = vld [vmem:[#allocation20 + $0x418] sm:$0xff]
    %v3023 = vld [vmem:[#allocation20 + $0x420] sm:$0xff]
    %v3024 = vld [vmem:[#allocation20 + $0x428] sm:$0xff]
    %v3025 = vld [vmem:[#allocation20 + $0x430] sm:$0xff]
    %v3026 = vld [vmem:[#allocation20 + $0x438] sm:$0xff]
    %v3027 = vld [vmem:[#allocation20 + $0x440] sm:$0xff]
    %v3028 = vld [vmem:[#allocation20 + $0x448] sm:$0xff]
    %v3029 = vld [vmem:[#allocation20 + $0x450] sm:$0xff]
    %v3030 = vld [vmem:[#allocation20 + $0x458] sm:$0xff]
    %v3031 = vld [vmem:[#allocation20 + $0x460] sm:$0xff]
    %v3032 = vld [vmem:[#allocation20 + $0x468] sm:$0xff]
    %v3033 = vld [vmem:[#allocation20 + $0x470] sm:$0xff]
    %v3034 = vld [vmem:[#allocation20 + $0x478] sm:$0xff]
    %v3035 = vld [vmem:[#allocation20 + $0x480] sm:$0xff]
    %v3036 = vld [vmem:[#allocation20 + $0x488] sm:$0xff]
    %v3037 = vld [vmem:[#allocation20 + $0x490] sm:$0xff]
    %v3038 = vld [vmem:[#allocation20 + $0x498] sm:$0xff]
    %v3039 = vld [vmem:[#allocation20 + $0x4a0] sm:$0xff]
    %v3040 = vld [vmem:[#allocation20 + $0x4a8] sm:$0xff]
    %v3041 = vld [vmem:[#allocation20 + $0x4b0] sm:$0xff]
    %v3042 = vld [vmem:[#allocation20 + $0x4b8] sm:$0xff]
    %v3043 = vld [vmem:[#allocation20 + $0x4c0] sm:$0xff]
    %v3044 = vld [vmem:[#allocation20 + $0x4c8] sm:$0xff]
    %v3045 = vld [vmem:[#allocation20 + $0x4d0] sm:$0xff]
    %v3046 = vld [vmem:[#allocation20 + $0x4d8] sm:$0xff]
    %v3047 = vld [vmem:[#allocation20 + $0x4e0] sm:$0xff]
    %v3048 = vld [vmem:[#allocation20 + $0x4e8] sm:$0xff]
    %v3049 = vld [vmem:[#allocation20 + $0x4f0] sm:$0xff]
    %v3050 = vld [vmem:[#allocation20 + $0x4f8] sm:$0xff]
    %v3051 = vld [vmem:[#allocation20 + $0x500] sm:$0xff]
    %v3052 = vld [vmem:[#allocation20 + $0x508] sm:$0xff]
    %v3053 = vld [vmem:[#allocation20 + $0x510] sm:$0xff]
    %v3054 = vld [vmem:[#allocation20 + $0x518] sm:$0xff]
    %v3055 = vld [vmem:[#allocation20 + $0x520] sm:$0xff]
    %v3056 = vld [vmem:[#allocation20 + $0x528] sm:$0xff]
    %v3057 = vld [vmem:[#allocation20 + $0x530] sm:$0xff]
    %v3058 = vld [vmem:[#allocation20 + $0x538] sm:$0xff]
    %v3059 = vld [vmem:[#allocation20 + $0x540] sm:$0xff]
    %v3060 = vld [vmem:[#allocation20 + $0x548] sm:$0xff]
    %v3061 = vld [vmem:[#allocation20 + $0x550] sm:$0xff]
    %v3062 = vld [vmem:[#allocation20 + $0x558] sm:$0xff]
    %v3063 = vld [vmem:[#allocation20 + $0x560] sm:$0xff]
    %v3064 = vld [vmem:[#allocation20 + $0x568] sm:$0xff]
    %v3065 = vld [vmem:[#allocation20 + $0x570] sm:$0xff]
    %v3066 = vld [vmem:[#allocation20 + $0x578] sm:$0xff]
    %v3067 = vld [vmem:[#allocation20 + $0x580] sm:$0xff]
    %v3068 = vld [vmem:[#allocation20 + $0x588] sm:$0xff]
    %v3069 = vld [vmem:[#allocation20 + $0x590] sm:$0xff]
    %v3070 = vld [vmem:[#allocation20 + $0x598] sm:$0xff]
    %v3071 = vld [vmem:[#allocation20 + $0x5a0] sm:$0xff]
    %v3072 = vld [vmem:[#allocation20 + $0x5a8] sm:$0xff]
    %v3073 = vld [vmem:[#allocation20 + $0x5b0] sm:$0xff]
    %v3074 = vld [vmem:[#allocation20 + $0x5b8] sm:$0xff]
    %v3075 = vld [vmem:[#allocation20 + $0x5c0] sm:$0xff]
    %v3076 = vld [vmem:[#allocation20 + $0x5c8] sm:$0xff]
    %v3077 = vld [vmem:[#allocation20 + $0x5d0] sm:$0xff]
    %v3078 = vld [vmem:[#allocation20 + $0x5d8] sm:$0xff]
    %v3079 = vld [vmem:[#allocation20 + $0x5e0] sm:$0xff]
    %v3080 = vld [vmem:[#allocation20 + $0x5e8] sm:$0xff]
    %v3081 = vld [vmem:[#allocation20 + $0x5f0] sm:$0xff]
    %v3082 = vld [vmem:[#allocation20 + $0x5f8] sm:$0xff]
    %v3083 = vld [vmem:[#allocation20 + $0x600] sm:$0xff]
    %v3084 = vld [vmem:[#allocation20 + $0x608] sm:$0xff]
    %v3085 = vld [vmem:[#allocation20 + $0x610] sm:$0xff]
    %v3086 = vld [vmem:[#allocation20 + $0x618] sm:$0xff]
    %v3087 = vld [vmem:[#allocation20 + $0x620] sm:$0xff]
    %v3088 = vld [vmem:[#allocation20 + $0x628] sm:$0xff]
    %v3089 = vld [vmem:[#allocation20 + $0x630] sm:$0xff]
    %v3090 = vld [vmem:[#allocation20 + $0x638] sm:$0xff]
    %v3091 = vld [vmem:[#allocation20 + $0x640] sm:$0xff]
    %v3092 = vld [vmem:[#allocation20 + $0x648] sm:$0xff]
    %v3093 = vld [vmem:[#allocation20 + $0x650] sm:$0xff]
    %v3094 = vld [vmem:[#allocation20 + $0x658] sm:$0xff]
    %v3095 = vld [vmem:[#allocation20 + $0x660] sm:$0xff]
    %v3096 = vld [vmem:[#allocation20 + $0x668] sm:$0xff]
    %v3097 = vld [vmem:[#allocation20 + $0x670] sm:$0xff]
    %v3098 = vld [vmem:[#allocation20 + $0x678] sm:$0xff]
    %v3099 = vld [vmem:[#allocation20 + $0x680] sm:$0xff]
    %v3100 = vld [vmem:[#allocation20 + $0x688] sm:$0xff]
    %v3101 = vld [vmem:[#allocation20 + $0x690] sm:$0xff]
    %v3102 = vld [vmem:[#allocation20 + $0x698] sm:$0xff]
    %v3103 = vld [vmem:[#allocation20 + $0x6a0] sm:$0xff]
    %v3104 = vld [vmem:[#allocation20 + $0x6a8] sm:$0xff]
    %v3105 = vld [vmem:[#allocation20 + $0x6b0] sm:$0xff]
    %v3106 = vld [vmem:[#allocation20 + $0x6b8] sm:$0xff]
    %v3107 = vld [vmem:[#allocation20 + $0x6c0] sm:$0xff]
    %v3108 = vld [vmem:[#allocation20 + $0x6c8] sm:$0xff]
    %v3109 = vld [vmem:[#allocation20 + $0x6d0] sm:$0xff]
    %v3110 = vld [vmem:[#allocation20 + $0x6d8] sm:$0xff]
    %v3111 = vld [vmem:[#allocation20 + $0x6e0] sm:$0xff]
    %v3112 = vld [vmem:[#allocation20 + $0x6e8] sm:$0xff]
    %v3113 = vld [vmem:[#allocation20 + $0x6f0] sm:$0xff]
    %v3114 = vld [vmem:[#allocation20 + $0x6f8] sm:$0xff]
    %v3115 = vld [vmem:[#allocation20 + $0x700] sm:$0xff]
    %v3116 = vld [vmem:[#allocation20 + $0x708] sm:$0xff]
    %v3117 = vld [vmem:[#allocation20 + $0x710] sm:$0xff]
    %v3118 = vld [vmem:[#allocation20 + $0x718] sm:$0xff]
    %v3119 = vld [vmem:[#allocation20 + $0x720] sm:$0xff]
    %v3120 = vld [vmem:[#allocation20 + $0x728] sm:$0xff]
    %v3121 = vld [vmem:[#allocation20 + $0x730] sm:$0xff]
    %v3122 = vld [vmem:[#allocation20 + $0x738] sm:$0xff]
    %v3123 = vld [vmem:[#allocation20 + $0x740] sm:$0xff]
    %v3124 = vld [vmem:[#allocation20 + $0x748] sm:$0xff]
    %v3125 = vld [vmem:[#allocation20 + $0x750] sm:$0xff]
    %v3126 = vld [vmem:[#allocation20 + $0x758] sm:$0xff]
    %v3127 = vld [vmem:[#allocation20 + $0x760] sm:$0xff]
    %v3128 = vld [vmem:[#allocation20 + $0x768] sm:$0xff]
    %v3129 = vld [vmem:[#allocation20 + $0x770] sm:$0xff]
    %v3130 = vld [vmem:[#allocation20 + $0x778] sm:$0xff]
    %v3131 = vld [vmem:[#allocation20 + $0x780] sm:$0xff]
    %v3132 = vld [vmem:[#allocation20 + $0x788] sm:$0xff]
    %v3133 = vld [vmem:[#allocation20 + $0x790] sm:$0xff]
    %v3134 = vld [vmem:[#allocation20 + $0x798] sm:$0xff]
    %v3135 = vld [vmem:[#allocation20 + $0x7a0] sm:$0xff]
    %v3136 = vld [vmem:[#allocation20 + $0x7a8] sm:$0xff]
    %v3137 = vld [vmem:[#allocation20 + $0x7b0] sm:$0xff]
    %v3138 = vld [vmem:[#allocation20 + $0x7b8] sm:$0xff]
    %v3139 = vld [vmem:[#allocation20 + $0x7c0] sm:$0xff]
    %v3140 = vld [vmem:[#allocation20 + $0x7c8] sm:$0xff]
    %v3141 = vld [vmem:[#allocation20 + $0x7d0] sm:$0xff]
    %v3142 = vld [vmem:[#allocation20 + $0x7d8] sm:$0xff]
    %v3143 = vld [vmem:[#allocation20 + $0x7e0] sm:$0xff]
    %v3144 = vld [vmem:[#allocation20 + $0x7e8] sm:$0xff]
    %v3145 = vld [vmem:[#allocation20 + $0x7f0] sm:$0xff]
    %v3146 = vld [vmem:[#allocation20 + $0x7f8] sm:$0xff]
    %v3147 = vld [vmem:[#allocation22] sm:$0x3]
    %v3149 = vlaneseq
    %v3150 = vshrl.u32 %v3149, 7
    %v3151 = vsub.s32 0, %v3150
    %v3152 = vrot.slane %v3147, %v3151
    %v3153 = vlaneseq
    %v3154 = vshrl.u32 %v3153, 7
    %v3155 = vsub.s32 1, %v3154
    %v3156 = vrot.slane %v3147, %v3155
    %3159 = vmatprep.subr.mxu0 %v2892
    %3160 = vmatpush1.msra.mxu0 %v2891
    %3161 = vmatprep.subr.mxu0 %v2894
    %3162 = vmatpush1.msra.mxu0 %v2893
    %3163 = vmatprep.subr.mxu0 %v2896
    %3164 = vmatpush1.msra.mxu0 %v2895
    %3165 = vmatprep.subr.mxu0 %v2898
    %3166 = vmatpush1.msra.mxu0 %v2897
    %3167 = vmatprep.subr.mxu0 %v2900
    %3168 = vmatpush1.msra.mxu0 %v2899
    %3169 = vmatprep.subr.mxu0 %v2902
    %3170 = vmatpush1.msra.mxu0 %v2901
    %3171 = vmatprep.subr.mxu0 %v2904
    %3172 = vmatpush1.msra.mxu0 %v2903
    %3173 = vmatprep.subr.mxu0 %v2906
    %3174 = vmatpush1.msra.mxu0 %v2905
    %3175 = vmatprep.subr.mxu0 %v2908
    %3176 = vmatpush1.msra.mxu0 %v2907
    %3177 = vmatprep.subr.mxu0 %v2910
    %3178 = vmatpush1.msra.mxu0 %v2909
    %3179 = vmatprep.subr.mxu0 %v2912
    %3180 = vmatpush1.msra.mxu0 %v2911
    %3181 = vmatprep.subr.mxu0 %v2914
    %3182 = vmatpush1.msra.mxu0 %v2913
    %3183 = vmatprep.subr.mxu0 %v2916
    %3184 = vmatpush1.msra.mxu0 %v2915
    %3185 = vmatprep.subr.mxu0 %v2918
    %3186 = vmatpush1.msra.mxu0 %v2917
    %3187 = vmatprep.subr.mxu0 %v2920
    %3188 = vmatpush1.msra.mxu0 %v2919
    %3189 = vmatprep.subr.mxu0 %v2922
    %3190 = vmatpush1.msra.mxu0 %v2921
    %3191 = vmatprep.subr.mxu0 %v2924
    %3192 = vmatpush1.msra.mxu0 %v2923
    %3193 = vmatprep.subr.mxu0 %v2926
    %3194 = vmatpush1.msra.mxu0 %v2925
    %3195 = vmatprep.subr.mxu0 %v2928
    %3196 = vmatpush1.msra.mxu0 %v2927
    %3197 = vmatprep.subr.mxu0 %v2930
    %3198 = vmatpush1.msra.mxu0 %v2929
    %3199 = vmatprep.subr.mxu0 %v2932
    %3200 = vmatpush1.msra.mxu0 %v2931
    %3201 = vmatprep.subr.mxu0 %v2934
    %3202 = vmatpush1.msra.mxu0 %v2933
    %3203 = vmatprep.subr.mxu0 %v2936
    %3204 = vmatpush1.msra.mxu0 %v2935
    %3205 = vmatprep.subr.mxu0 %v2938
    %3206 = vmatpush1.msra.mxu0 %v2937
    %3207 = vmatprep.subr.mxu0 %v2940
    %3208 = vmatpush1.msra.mxu0 %v2939
    %3209 = vmatprep.subr.mxu0 %v2942
    %3210 = vmatpush1.msra.mxu0 %v2941
    %3211 = vmatprep.subr.mxu0 %v2944
    %3212 = vmatpush1.msra.mxu0 %v2943
    %3213 = vmatprep.subr.mxu0 %v2946
    %3214 = vmatpush1.msra.mxu0 %v2945
    %3215 = vmatprep.subr.mxu0 %v2948
    %3216 = vmatpush1.msra.mxu0 %v2947
    %3217 = vmatprep.subr.mxu0 %v2950
    %3218 = vmatpush1.msra.mxu0 %v2949
    %3219 = vmatprep.subr.mxu0 %v2952
    %3220 = vmatpush1.msra.mxu0 %v2951
    %3221 = vmatprep.subr.mxu0 %v2954
    %3222 = vmatpush1.msra.mxu0 %v2953
    %3223 = vmatprep.mubr.f32.mxu0 %v2828
    %3224 = vmatmul.mubr.f32.gmra.mrb[0].mxu0 %v2827
    %v3225 = vpop.f32.mrb[0].mxu0
    %v3226 = vadd.f32 %v3152, %v3225
    %v3227 = vpop.f32.mrb[0].mxu0
    %v3228 = vadd.f32 %v3156, %v3227
    %3229 = vmatprep.mubr.f32.mxu0 %v2836
    %3230 = vmatmul.mubr.f32.gmra.mrb[0].mxu0 %v2835
    %v3231 = vpop.f32.mrb[0].mxu0
    %v3232 = vadd.f32 %v3152, %v3231
    %v3233 = vpop.f32.mrb[0].mxu0
    %v3234 = vadd.f32 %v3156, %v3233
    %3235 = vmatprep.mubr.f32.mxu0 %v2844
    %3236 = vmatmul.mubr.f32.gmra.mrb[0].mxu0 %v2843
    %v3237 = vpop.f32.mrb[0].mxu0
    %v3238 = vadd.f32 %v3152, %v3237
    %v3239 = vpop.f32.mrb[0].mxu0
    %v3240 = vadd.f32 %v3156, %v3239
    %3241 = vmatprep.mubr.f32.mxu0 %v2852
    %3242 = vmatmul.mubr.f32.gmra.mrb[0].mxu0 %v2851
    %v3243 = vpop.f32.mrb[0].mxu0
    %v3244 = vadd.f32 %v3152, %v3243
    %v3245 = vpop.f32.mrb[0].mxu0
    %v3246 = vadd.f32 %v3156, %v3245
    %3247 = vmatprep.mubr.f32.mxu0 %v2860
    %3248 = vmatmul.mubr.f32.gmra.mrb[0].mxu0 %v2859
    %v3249 = vpop.f32.mrb[0].mxu0
    %v3250 = vadd.f32 %v3152, %v3249
    %v3251 = vpop.f32.mrb[0].mxu0
    %v3252 = vadd.f32 %v3156, %v3251
    %3253 = vmatprep.mubr.f32.mxu0 %v2868
    %3254 = vmatmul.mubr.f32.gmra.mrb[0].mxu0 %v2867
    %v3255 = vpop.f32.mrb[0].mxu0
    %v3256 = vadd.f32 %v3152, %v3255
    %v3257 = vpop.f32.mrb[0].mxu0
    %v3258 = vadd.f32 %v3156, %v3257
    %3259 = vmatprep.mubr.f32.mxu0 %v2876
    %3260 = vmatmul.mubr.f32.gmra.mrb[0].mxu0 %v2875
    %v3261 = vpop.f32.mrb[0].mxu0
    %v3262 = vadd.f32 %v3152, %v3261
    %v3263 = vpop.f32.mrb[0].mxu0
    %v3264 = vadd.f32 %v3156, %v3263
    %3265 = vmatprep.mubr.f32.mxu0 %v2884
    %3266 = vmatmul.mubr.f32.gmra.mrb[0].mxu0 %v2883
    %v3267 = vpop.f32.mrb[0].mxu0
    %v3268 = vadd.f32 %v3152, %v3267
    %v3269 = vpop.f32.mrb[0].mxu0
    %v3270 = vadd.f32 %v3156, %v3269
    %3271 = vdwg.mxu0
    %3272 = vmatprep.subr.mxu0 %v2956
    %3273 = vmatpush1.msra.mxu0 %v2955
    %3274 = vmatprep.subr.mxu0 %v2958
    %3275 = vmatpush1.msra.mxu0 %v2957
    %3276 = vmatprep.subr.mxu0 %v2960
    %3277 = vmatpush1.msra.mxu0 %v2959
    %3278 = vmatprep.subr.mxu0 %v2962
    %3279 = vmatpush1.msra.mxu0 %v2961
    %3280 = vmatprep.subr.mxu0 %v2964
    %3281 = vmatpush1.msra.mxu0 %v2963
    %3282 = vmatprep.subr.mxu0 %v2966
    %3283 = vmatpush1.msra.mxu0 %v2965
    %3284 = vmatprep.subr.mxu0 %v2968
    %3285 = vmatpush1.msra.mxu0 %v2967
    %3286 = vmatprep.subr.mxu0 %v2970
    %3287 = vmatpush1.msra.mxu0 %v2969
    %3288 = vmatprep.subr.mxu0 %v2972
    %3289 = vmatpush1.msra.mxu0 %v2971
    %3290 = vmatprep.subr.mxu0 %v2974
    %3291 = vmatpush1.msra.mxu0 %v2973
    %3292 = vmatprep.subr.mxu0 %v2976
    %3293 = vmatpush1.msra.mxu0 %v2975
    %3294 = vmatprep.subr.mxu0 %v2978
    %3295 = vmatpush1.msra.mxu0 %v2977
    %3296 = vmatprep.subr.mxu0 %v2980
    %3297 = vmatpush1.msra.mxu0 %v2979
    %3298 = vmatprep.subr.mxu0 %v2982
    %3299 = vmatpush1.msra.mxu0 %v2981
    %3300 = vmatprep.subr.mxu0 %v2984
    %3301 = vmatpush1.msra.mxu0 %v2983
    %3302 = vmatprep.subr.mxu0 %v2986
    %3303 = vmatpush1.msra.mxu0 %v2985
    %3304 = vmatprep.subr.mxu0 %v2988
    %3305 = vmatpush1.msra.mxu0 %v2987
    %3306 = vmatprep.subr.mxu0 %v2990
    %3307 = vmatpush1.msra.mxu0 %v2989
    %3308 = vmatprep.subr.mxu0 %v2992
    %3309 = vmatpush1.msra.mxu0 %v2991
    %3310 = vmatprep.subr.mxu0 %v2994
    %3311 = vmatpush1.msra.mxu0 %v2993
    %3312 = vmatprep.subr.mxu0 %v2996
    %3313 = vmatpush1.msra.mxu0 %v2995
    %3314 = vmatprep.subr.mxu0 %v2998
    %3315 = vmatpush1.msra.mxu0 %v2997
    %3316 = vmatprep.subr.mxu0 %v3000
    %3317 = vmatpush1.msra.mxu0 %v2999
    %3318 = vmatprep.subr.mxu0 %v3002
    %3319 = vmatpush1.msra.mxu0 %v3001
    %3320 = vmatprep.subr.mxu0 %v3004
    %3321 = vmatpush1.msra.mxu0 %v3003
    %3322 = vmatprep.subr.mxu0 %v3006
    %3323 = vmatpush1.msra.mxu0 %v3005
    %3324 = vmatprep.subr.mxu0 %v3008
    %3325 = vmatpush1.msra.mxu0 %v3007
    %3326 = vmatprep.subr.mxu0 %v3010
    %3327 = vmatpush1.msra.mxu0 %v3009
    %3328 = vmatprep.subr.mxu0 %v3012
    %3329 = vmatpush1.msra.mxu0 %v3011
    %3330 = vmatprep.subr.mxu0 %v3014
    %3331 = vmatpush1.msra.mxu0 %v3013
    %3332 = vmatprep.subr.mxu0 %v3016
    %3333 = vmatpush1.msra.mxu0 %v3015
    %3334 = vmatprep.subr.mxu0 %v3018
    %3335 = vmatpush1.msra.mxu0 %v3017
    %3336 = vmatprep.mubr.f32.mxu0 %v2830
    %3337 = vmatmul.mubr.f32.gmra.mrb[0].mxu0 %v2829
    %v3338 = vpop.f32.mrb[0].mxu0
    %v3339 = vadd.f32 %v3226, %v3338
    %v3340 = vpop.f32.mrb[0].mxu0
    %v3341 = vadd.f32 %v3228, %v3340
    %3342 = vmatprep.mubr.f32.mxu0 %v2838
    %3343 = vmatmul.mubr.f32.gmra.mrb[0].mxu0 %v2837
    %v3344 = vpop.f32.mrb[0].mxu0
    %v3345 = vadd.f32 %v3232, %v3344
    %v3346 = vpop.f32.mrb[0].mxu0
    %v3347 = vadd.f32 %v3234, %v3346
    %3348 = vmatprep.mubr.f32.mxu0 %v2846
    %3349 = vmatmul.mubr.f32.gmra.mrb[0].mxu0 %v2845
    %v3350 = vpop.f32.mrb[0].mxu0
    %v3351 = vadd.f32 %v3238, %v3350
    %v3352 = vpop.f32.mrb[0].mxu0
    %v3353 = vadd.f32 %v3240, %v3352
    %3354 = vmatprep.mubr.f32.mxu0 %v2854
    %3355 = vmatmul.mubr.f32.gmra.mrb[0].mxu0 %v2853
    %v3356 = vpop.f32.mrb[0].mxu0
    %v3357 = vadd.f32 %v3244, %v3356
    %v3358 = vpop.f32.mrb[0].mxu0
    %v3359 = vadd.f32 %v3246, %v3358
    %3360 = vmatprep.mubr.f32.mxu0 %v2862
    %3361 = vmatmul.mubr.f32.gmra.mrb[0].mxu0 %v2861
    %v3362 = vpop.f32.mrb[0].mxu0
    %v3363 = vadd.f32 %v3250, %v3362
    %v3364 = vpop.f32.mrb[0].mxu0
    %v3365 = vadd.f32 %v3252, %v3364
    %3366 = vmatprep.mubr.f32.mxu0 %v2870
    %3367 = vmatmul.mubr.f32.gmra.mrb[0].mxu0 %v2869
    %v3368 = vpop.f32.mrb[0].mxu0
    %v3369 = vadd.f32 %v3256, %v3368
    %v3370 = vpop.f32.mrb[0].mxu0
    %v3371 = vadd.f32 %v3258, %v3370
    %3372 = vmatprep.mubr.f32.mxu0 %v2878
    %3373 = vmatmul.mubr.f32.gmra.mrb[0].mxu0 %v2877
    %v3374 = vpop.f32.mrb[0].mxu0
    %v3375 = vadd.f32 %v3262, %v3374
    %v3376 = vpop.f32.mrb[0].mxu0
    %v3377 = vadd.f32 %v3264, %v3376
    %3378 = vmatprep.mubr.f32.mxu0 %v2886
    %3379 = vmatmul.mubr.f32.gmra.mrb[0].mxu0 %v2885
    %v3380 = vpop.f32.mrb[0].mxu0
    %v3381 = vadd.f32 %v3268, %v3380
    %v3382 = vpop.f32.mrb[0].mxu0
    %v3383 = vadd.f32 %v3270, %v3382
    %3384 = vdwg.mxu0
    %3385 = vmatprep.subr.mxu0 %v3020
    %3386 = vmatpush1.msra.mxu0 %v3019
    %3387 = vmatprep.subr.mxu0 %v3022
    %3388 = vmatpush1.msra.mxu0 %v3021
    %3389 = vmatprep.subr.mxu0 %v3024
    %3390 = vmatpush1.msra.mxu0 %v3023
    %3391 = vmatprep.subr.mxu0 %v3026
    %3392 = vmatpush1.msra.mxu0 %v3025
    %3393 = vmatprep.subr.mxu0 %v3028
    %3394 = vmatpush1.msra.mxu0 %v3027
    %3395 = vmatprep.subr.mxu0 %v3030
    %3396 = vmatpush1.msra.mxu0 %v3029
    %3397 = vmatprep.subr.mxu0 %v3032
    %3398 = vmatpush1.msra.mxu0 %v3031
    %3399 = vmatprep.subr.mxu0 %v3034
    %3400 = vmatpush1.msra.mxu0 %v3033
    %3401 = vmatprep.subr.mxu0 %v3036
    %3402 = vmatpush1.msra.mxu0 %v3035
    %3403 = vmatprep.subr.mxu0 %v3038
    %3404 = vmatpush1.msra.mxu0 %v3037
    %3405 = vmatprep.subr.mxu0 %v3040
    %3406 = vmatpush1.msra.mxu0 %v3039
    %3407 = vmatprep.subr.mxu0 %v3042
    %3408 = vmatpush1.msra.mxu0 %v3041
    %3409 = vmatprep.subr.mxu0 %v3044
    %3410 = vmatpush1.msra.mxu0 %v3043
    %3411 = vmatprep.subr.mxu0 %v3046
    %3412 = vmatpush1.msra.mxu0 %v3045
    %3413 = vmatprep.subr.mxu0 %v3048
    %3414 = vmatpush1.msra.mxu0 %v3047
    %3415 = vmatprep.subr.mxu0 %v3050
    %3416 = vmatpush1.msra.mxu0 %v3049
    %3417 = vmatprep.subr.mxu0 %v3052
    %3418 = vmatpush1.msra.mxu0 %v3051
    %3419 = vmatprep.subr.mxu0 %v3054
    %3420 = vmatpush1.msra.mxu0 %v3053
    %3421 = vmatprep.subr.mxu0 %v3056
    %3422 = vmatpush1.msra.mxu0 %v3055
    %3423 = vmatprep.subr.mxu0 %v3058
    %3424 = vmatpush1.msra.mxu0 %v3057
    %3425 = vmatprep.subr.mxu0 %v3060
    %3426 = vmatpush1.msra.mxu0 %v3059
    %3427 = vmatprep.subr.mxu0 %v3062
    %3428 = vmatpush1.msra.mxu0 %v3061
    %3429 = vmatprep.subr.mxu0 %v3064
    %3430 = vmatpush1.msra.mxu0 %v3063
    %3431 = vmatprep.subr.mxu0 %v3066
    %3432 = vmatpush1.msra.mxu0 %v3065
    %3433 = vmatprep.subr.mxu0 %v3068
    %3434 = vmatpush1.msra.mxu0 %v3067
    %3435 = vmatprep.subr.mxu0 %v3070
    %3436 = vmatpush1.msra.mxu0 %v3069
    %3437 = vmatprep.subr.mxu0 %v3072
    %3438 = vmatpush1.msra.mxu0 %v3071
    %3439 = vmatprep.subr.mxu0 %v3074
    %3440 = vmatpush1.msra.mxu0 %v3073
    %3441 = vmatprep.subr.mxu0 %v3076
    %3442 = vmatpush1.msra.mxu0 %v3075
    %3443 = vmatprep.subr.mxu0 %v3078
    %3444 = vmatpush1.msra.mxu0 %v3077
    %3445 = vmatprep.subr.mxu0 %v3080
    %3446 = vmatpush1.msra.mxu0 %v3079
    %3447 = vmatprep.subr.mxu0 %v3082
    %3448 = vmatpush1.msra.mxu0 %v3081
    %3449 = vmatprep.mubr.f32.mxu0 %v2832
    %3450 = vmatmul.mubr.f32.gmra.mrb[0].mxu0 %v2831
    %v3451 = vpop.f32.mrb[0].mxu0
    %v3452 = vadd.f32 %v3339, %v3451
    %v3453 = vpop.f32.mrb[0].mxu0
    %v3454 = vadd.f32 %v3341, %v3453
    %3455 = vmatprep.mubr.f32.mxu0 %v2840
    %3456 = vmatmul.mubr.f32.gmra.mrb[0].mxu0 %v2839
    %v3457 = vpop.f32.mrb[0].mxu0
    %v3458 = vadd.f32 %v3345, %v3457
    %v3459 = vpop.f32.mrb[0].mxu0
    %v3460 = vadd.f32 %v3347, %v3459
    %3461 = vmatprep.mubr.f32.mxu0 %v2848
    %3462 = vmatmul.mubr.f32.gmra.mrb[0].mxu0 %v2847
    %v3463 = vpop.f32.mrb[0].mxu0
    %v3464 = vadd.f32 %v3351, %v3463
    %v3465 = vpop.f32.mrb[0].mxu0
    %v3466 = vadd.f32 %v3353, %v3465
    %3467 = vmatprep.mubr.f32.mxu0 %v2856
    %3468 = vmatmul.mubr.f32.gmra.mrb[0].mxu0 %v2855
    %v3469 = vpop.f32.mrb[0].mxu0
    %v3470 = vadd.f32 %v3357, %v3469
    %v3471 = vpop.f32.mrb[0].mxu0
    %v3472 = vadd.f32 %v3359, %v3471
    %3473 = vmatprep.mubr.f32.mxu0 %v2864
    %3474 = vmatmul.mubr.f32.gmra.mrb[0].mxu0 %v2863
    %v3475 = vpop.f32.mrb[0].mxu0
    %v3476 = vadd.f32 %v3363, %v3475
    %v3477 = vpop.f32.mrb[0].mxu0
    %v3478 = vadd.f32 %v3365, %v3477
    %3479 = vmatprep.mubr.f32.mxu0 %v2872
    %3480 = vmatmul.mubr.f32.gmra.mrb[0].mxu0 %v2871
    %v3481 = vpop.f32.mrb[0].mxu0
    %v3482 = vadd.f32 %v3369, %v3481
    %v3483 = vpop.f32.mrb[0].mxu0
    %v3484 = vadd.f32 %v3371, %v3483
    %3485 = vmatprep.mubr.f32.mxu0 %v2880
    %3486 = vmatmul.mubr.f32.gmra.mrb[0].mxu0 %v2879
    %v3487 = vpop.f32.mrb[0].mxu0
    %v3488 = vadd.f32 %v3375, %v3487
    %v3489 = vpop.f32.mrb[0].mxu0
    %v3490 = vadd.f32 %v3377, %v3489
    %3491 = vmatprep.mubr.f32.mxu0 %v2888
    %3492 = vmatmul.mubr.f32.gmra.mrb[0].mxu0 %v2887
    %v3493 = vpop.f32.mrb[0].mxu0
    %v3494 = vadd.f32 %v3381, %v3493
    %v3495 = vpop.f32.mrb[0].mxu0
    %v3496 = vadd.f32 %v3383, %v3495
    %3497 = vdwg.mxu0
    %3498 = vmatprep.subr.mxu0 %v3084
    %3499 = vmatpush1.msra.mxu0 %v3083
    %3500 = vmatprep.subr.mxu0 %v3086
    %3501 = vmatpush1.msra.mxu0 %v3085
    %3502 = vmatprep.subr.mxu0 %v3088
    %3503 = vmatpush1.msra.mxu0 %v3087
    %3504 = vmatprep.subr.mxu0 %v3090
    %3505 = vmatpush1.msra.mxu0 %v3089
    %3506 = vmatprep.subr.mxu0 %v3092
    %3507 = vmatpush1.msra.mxu0 %v3091
    %3508 = vmatprep.subr.mxu0 %v3094
    %3509 = vmatpush1.msra.mxu0 %v3093
    %3510 = vmatprep.subr.mxu0 %v3096
    %3511 = vmatpush1.msra.mxu0 %v3095
    %3512 = vmatprep.subr.mxu0 %v3098
    %3513 = vmatpush1.msra.mxu0 %v3097
    %3514 = vmatprep.subr.mxu0 %v3100
    %3515 = vmatpush1.msra.mxu0 %v3099
    %3516 = vmatprep.subr.mxu0 %v3102
    %3517 = vmatpush1.msra.mxu0 %v3101
    %3518 = vmatprep.subr.mxu0 %v3104
    %3519 = vmatpush1.msra.mxu0 %v3103
    %3520 = vmatprep.subr.mxu0 %v3106
    %3521 = vmatpush1.msra.mxu0 %v3105
    %3522 = vmatprep.subr.mxu0 %v3108
    %3523 = vmatpush1.msra.mxu0 %v3107
    %3524 = vmatprep.subr.mxu0 %v3110
    %3525 = vmatpush1.msra.mxu0 %v3109
    %3526 = vmatprep.subr.mxu0 %v3112
    %3527 = vmatpush1.msra.mxu0 %v3111
    %3528 = vmatprep.subr.mxu0 %v3114
    %3529 = vmatpush1.msra.mxu0 %v3113
    %3530 = vmatprep.subr.mxu0 %v3116
    %3531 = vmatpush1.msra.mxu0 %v3115
    %3532 = vmatprep.subr.mxu0 %v3118
    %3533 = vmatpush1.msra.mxu0 %v3117
    %3534 = vmatprep.subr.mxu0 %v3120
    %3535 = vmatpush1.msra.mxu0 %v3119
    %3536 = vmatprep.subr.mxu0 %v3122
    %3537 = vmatpush1.msra.mxu0 %v3121
    %3538 = vmatprep.subr.mxu0 %v3124
    %3539 = vmatpush1.msra.mxu0 %v3123
    %3540 = vmatprep.subr.mxu0 %v3126
    %3541 = vmatpush1.msra.mxu0 %v3125
    %3542 = vmatprep.subr.mxu0 %v3128
    %3543 = vmatpush1.msra.mxu0 %v3127
    %3544 = vmatprep.subr.mxu0 %v3130
    %3545 = vmatpush1.msra.mxu0 %v3129
    %3546 = vmatprep.subr.mxu0 %v3132
    %3547 = vmatpush1.msra.mxu0 %v3131
    %3548 = vmatprep.subr.mxu0 %v3134
    %3549 = vmatpush1.msra.mxu0 %v3133
    %3550 = vmatprep.subr.mxu0 %v3136
    %3551 = vmatpush1.msra.mxu0 %v3135
    %3552 = vmatprep.subr.mxu0 %v3138
    %3553 = vmatpush1.msra.mxu0 %v3137
    %3554 = vmatprep.subr.mxu0 %v3140
    %3555 = vmatpush1.msra.mxu0 %v3139
    %3556 = vmatprep.subr.mxu0 %v3142
    %3557 = vmatpush1.msra.mxu0 %v3141
    %3558 = vmatprep.subr.mxu0 %v3144
    %3559 = vmatpush1.msra.mxu0 %v3143
    %3560 = vmatprep.subr.mxu0 %v3146
    %3561 = vmatpush1.msra.mxu0 %v3145
    %3562 = vmatprep.mubr.f32.mxu0 %v2834
    %3563 = vmatmul.mubr.f32.gmra.mrb[0].mxu0 %v2833
    %v3564 = vpop.f32.mrb[0].mxu0
    %v3565 = vadd.f32 %v3452, %v3564
    %v3566 = vpop.f32.mrb[0].mxu0
    %v3567 = vadd.f32 %v3454, %v3566
    %3568 = vmatprep.mubr.f32.mxu0 %v2842
    %3569 = vmatmul.mubr.f32.gmra.mrb[0].mxu0 %v2841
    %v3570 = vpop.f32.mrb[0].mxu0
    %v3571 = vadd.f32 %v3458, %v3570
    %v3572 = vpop.f32.mrb[0].mxu0
    %v3573 = vadd.f32 %v3460, %v3572
    %3574 = vmatprep.mubr.f32.mxu0 %v2850
    %3575 = vmatmul.mubr.f32.gmra.mrb[0].mxu0 %v2849
    %v3576 = vpop.f32.mrb[0].mxu0
    %v3577 = vadd.f32 %v3464, %v3576
    %v3578 = vpop.f32.mrb[0].mxu0
    %v3579 = vadd.f32 %v3466, %v3578
    %3580 = vmatprep.mubr.f32.mxu0 %v2858
    %3581 = vmatmul.mubr.f32.gmra.mrb[0].mxu0 %v2857
    %v3582 = vpop.f32.mrb[0].mxu0
    %v3583 = vadd.f32 %v3470, %v3582
    %v3584 = vpop.f32.mrb[0].mxu0
    %v3585 = vadd.f32 %v3472, %v3584
    %3586 = vmatprep.mubr.f32.mxu0 %v2866
    %3587 = vmatmul.mubr.f32.gmra.mrb[0].mxu0 %v2865
    %v3588 = vpop.f32.mrb[0].mxu0
    %v3589 = vadd.f32 %v3476, %v3588
    %v3590 = vpop.f32.mrb[0].mxu0
    %v3591 = vadd.f32 %v3478, %v3590
    %3592 = vmatprep.mubr.f32.mxu0 %v2874
    %3593 = vmatmul.mubr.f32.gmra.mrb[0].mxu0 %v2873
    %v3594 = vpop.f32.mrb[0].mxu0
    %v3595 = vadd.f32 %v3482, %v3594
    %v3596 = vpop.f32.mrb[0].mxu0
    %v3597 = vadd.f32 %v3484, %v3596
    %3598 = vmatprep.mubr.f32.mxu0 %v2882
    %3599 = vmatmul.mubr.f32.gmra.mrb[0].mxu0 %v2881
    %v3600 = vpop.f32.mrb[0].mxu0
    %v3601 = vadd.f32 %v3488, %v3600
    %v3602 = vpop.f32.mrb[0].mxu0
    %v3603 = vadd.f32 %v3490, %v3602
    %3604 = vmatprep.mubr.f32.mxu0 %v2890
    %3605 = vmatmul.mubr.f32.gmra.mrb[0].mxu0 %v2889
    %v3606 = vpop.f32.mrb[0].mxu0
    %v3607 = vadd.f32 %v3494, %v3606
    %v3608 = vpop.f32.mrb[0].mxu0
    %v3609 = vadd.f32 %v3496, %v3608
    %3610 = vdwg.mxu0
    %v3611 = vtanh.pop %v3565
    %v3612 = vtanh.pop %v3567
    %v3613 = vtanh.pop %v3571
    %v3614 = vtanh.pop %v3573
    %v3615 = vtanh.pop %v3577
    %v3616 = vtanh.pop %v3579
    %v3617 = vtanh.pop %v3583
    %v3618 = vtanh.pop %v3585
    %v3619 = vtanh.pop %v3589
    %v3620 = vtanh.pop %v3591
    %v3621 = vtanh.pop %v3595
    %v3622 = vtanh.pop %v3597
    %v3623 = vtanh.pop %v3601
    %v3624 = vtanh.pop %v3603
    %v3625 = vtanh.pop %v3607
    %v3626 = vtanh.pop %v3609
    %3627 = vst [vmem:[#allocation23] sm:$0xff] %v3611
    %3628 = vst [vmem:[#allocation23 + $0x8] sm:$0xff] %v3612
    %3629 = vst [vmem:[#allocation23 + $0x10] sm:$0xff] %v3613
    %3630 = vst [vmem:[#allocation23 + $0x18] sm:$0xff] %v3614
    %3631 = vst [vmem:[#allocation23 + $0x20] sm:$0xff] %v3615
    %3632 = vst [vmem:[#allocation23 + $0x28] sm:$0xff] %v3616
    %3633 = vst [vmem:[#allocation23 + $0x30] sm:$0xff] %v3617
    %3634 = vst [vmem:[#allocation23 + $0x38] sm:$0xff] %v3618
    %3635 = vst [vmem:[#allocation23 + $0x40] sm:$0xff] %v3619
    %3636 = vst [vmem:[#allocation23 + $0x48] sm:$0xff] %v3620
    %3637 = vst [vmem:[#allocation23 + $0x50] sm:$0xff] %v3621
    %3638 = vst [vmem:[#allocation23 + $0x58] sm:$0xff] %v3622
    %3639 = vst [vmem:[#allocation23 + $0x60] sm:$0xff] %v3623
    %3640 = vst [vmem:[#allocation23 + $0x68] sm:$0xff] %v3624
    %3641 = vst [vmem:[#allocation23 + $0x70] sm:$0xff] %v3625
    %3642 = vst [vmem:[#allocation23 + $0x78] sm:$0xff] %v3626
    // Predicated region
    $region110: #{_generator_pallas.1} parent=1 // pred_check
      _
    $region111: #{_generator_pallas.1} parent=1 // pred_check_branch
      %3644 = sbr.rel (0) target = $region113
    $region112: #{_generator_pallas.1} parent=1 // pred_region
      %s3646 = ssub.s32 2048, 2048
      %3647 = vsyncadd [#allocation4], %s3646
      %s3648 = sshll.u32 [#allocation23], 4
      %s3649 = int_to_ptr.vmem [resolvable:$true] %s3648
      %3654 = dma.vmem_to_hbm [thread:$0]  %s3649, 2048, %s14, [#allocation4], 256, 256, 16
    $region113: #{_generator_pallas.1} parent=1 // pred_fallthru
      _
    // Predicated region
    $region114: #{_generator_pallas.1} parent=1 // pred_check
      _
    $region115: #{_generator_pallas.1} parent=1 // pred_check_branch
      %3656 = sbr.rel (0) target = $region117
    $region116: #{_generator_pallas.1} parent=1 // pred_region
      %3657 = dma.done [#allocation4], 2048
    $region117: #{_generator_pallas.1} parent=1 // pred_fallthru
      _
    %3658 = vsyncpa [#allocation3], 1
    %3659 = vsyncpa [#allocation6], 1
    %3660 = vsyncpa [#allocation9], 1
    %3661 = vsyncpa [#allocation12], 1
    %3662 = vsyncpa [#allocation15], 1
    %3663 = vsyncpa [#allocation18], 1
    %3664 = vsyncpa [#allocation21], 1
    %3665 = vsyncpa [#allocation4], 1

</llo_original>
